<compile_context>
chip_gen: v7x
topology: tpu7x:2x2x1
jax: 0.10.0
libtpu: 0.0.40
codegen_flags: <defaults>
</compile_context>

<pallas_src>
import functools

import jax
import jax.numpy as jnp
import numpy as np
from jax.experimental import pallas as pl
from jax.experimental.pallas import tpu as pltpu

LANE = 128
_VMEM_LIMIT = 48 * 1024 * 1024     # <= v7x physical (64 MiB), headroom on v5e/v6e


def _round_up(x, m):
    return (x + m - 1) // m * m


def _pick_tile(length, c_p, target=512):
    """Row tile: ~`target` rows (multiple of 8), shrunk for wide channels."""
    budget_rows = max(64, (4 * 1024 * 1024) // (c_p * 8))
    t = max(8, min(target, budget_rows))
    n_tiles = max(1, -(-length // t))
    tt = -(-length // n_tiles)
    return max(8, _round_up(tt, 8))


# -----------------------------------------------------------------------------
# Fused kernel: per (batch, L-tile) grid point compute
#   z  = relu(bn([l1|l2a] @ x_window))            (one pointwise matmul)
#   h1 = relu(h0 + bn(conv3(relu(bn(conv3(h0))))))    (res block 1, halo 2)
#   h2 = relu(h1 + bn(conv3(relu(bn(conv3(h1))))))    (res block 2, halo 2)
#   y2 = relu(bn(h2 @ w2b))                       (pointwise)
#   out = relu(bn(sum_t y1[t:] @ w3a[t] + y2[t:] @ w3b[t]))   (l3, stride-1)
# x window (T + K - 1 + 8 rows) arrives via manual, double-buffered DMA.
# -----------------------------------------------------------------------------
def _cspnet_fused_kernel(x_hbm,
                         w12_ref, sb12_ref,
                         wa1_ref, sba1_ref, wb1_ref, sbb1_ref,
                         wa2_ref, sba2_ref, wb2_ref, sbb2_ref,
                         w2b_ref, sb2b_ref,
                         w3a_ref, w3b_ref, sb3_ref,
                         o_ref,
                         xbuf, sem,
                         *, T, K, p3, W_x, W_fetch, Cn_p, L_true):
    n = pl.program_id(0)
    lo = pl.program_id(1)
    nLt = pl.num_programs(1)

    # --- scalar / index work first (before any DMA wait) ---------------------
    slot = jax.lax.rem(lo, 2)
    base = lo * T - (p3 + 4)               # absolute input pos of window row 0
    W3 = W_x - 8                           # rows of y1/y2 consumed by l3
    n1, n2, n3 = W_x - 2, W_x - 4, W_x - 6

    def dma(tile_idx, slot_idx):
        start = pl.multiple_of(tile_idx * T, 8)
        return pltpu.make_async_copy(
            x_hbm.at[n, pl.ds(start, W_fetch), :],
            xbuf.at[slot_idx], sem.at[slot_idx])

    @pl.when(lo == 0)
    def _():                               # prime first window of this batch
        dma(0, 0).start()

    @pl.when(lo + 1 < nLt)
    def _():                               # prefetch next tile BEFORE the wait
        dma(lo + 1, 1 - slot).start()

    # valid-position mask (reproduces every conv's 'same' zero padding);
    # computed while the DMA is in flight.
    pos = base + jax.lax.broadcasted_iota(jnp.int32, (W_fetch, 1), 0)
    mask = jnp.logical_and(pos >= 0, pos < L_true).astype(jnp.float32)

    dma(lo, slot).wait()
    xw = xbuf[slot]                                       # (W_fetch, Ci_p) bf16

    def bn(acc, sb_ref, relu=True):
        sb = sb_ref[...]
        y = acc * sb[0:1, :] + sb[1:2, :]
        return jnp.maximum(y, 0.0) if relu else y

    def conv3(a, w_ref, m):
        # 3-tap 'same' conv as per-tap accumulating MXU matmuls (no im2col buf)
        acc = jnp.dot(a[0:m], w_ref[0], preferred_element_type=jnp.float32)
        acc = acc + jnp.dot(a[1:1 + m], w_ref[1],
                            preferred_element_type=jnp.float32)
        acc = acc + jnp.dot(a[2:2 + m], w_ref[2],
                            preferred_element_type=jnp.float32)
        return acc

    # ---- l1 + l2a: one pointwise matmul, two channel groups -----------------
    z = jnp.dot(xw, w12_ref[...], preferred_element_type=jnp.float32)
    z = bn(z, sb12_ref) * mask
    y1 = jax.lax.slice(z, (4, 0), (4 + W3, Cn_p)).astype(jnp.bfloat16)
    h0 = jax.lax.slice(z, (0, Cn_p), (W_fetch, 2 * Cn_p)).astype(jnp.bfloat16)

    # ---- res block 1 (intermediate never leaves VMEM) ------------------------
    h1m = (bn(conv3(h0, wa1_ref, n1), sba1_ref)
           * mask[1:1 + n1]).astype(jnp.bfloat16)
    u1 = bn(conv3(h1m, wb1_ref, n2), sbb1_ref, relu=False)
    h1 = (jnp.maximum(u1 + h0[2:2 + n2].astype(jnp.float32), 0.0)
          * mask[2:2 + n2]).astype(jnp.bfloat16)

    # ---- res block 2 ---------------------------------------------------------
    h2m = (bn(conv3(h1, wa2_ref, n3), sba2_ref)
           * mask[3:3 + n3]).astype(jnp.bfloat16)
    u2 = bn(conv3(h2m, wb2_ref, W3), sbb2_ref, relu=False)
    h2 = jnp.maximum(u2 + h1[2:2 + W3].astype(jnp.float32), 0.0
                     ).astype(jnp.bfloat16)

    # ---- l2b (pointwise); masked so l3 sees zeros outside [0, L) ------------
    y2 = (bn(jnp.dot(h2, w2b_ref[...], preferred_element_type=jnp.float32),
             sb2b_ref) * mask[4:4 + W3]).astype(jnp.bfloat16)

    # ---- l3: K-tap conv over concat(y1, y2) as split per-tap matmuls --------
    # (the channel concat never exists anywhere)
    acc = jnp.dot(jax.lax.slice(y1, (0, 0), (T, Cn_p)), w3a_ref[0],
                  preferred_element_type=jnp.float32)
    acc = acc + jnp.dot(jax.lax.slice(y2, (0, 0), (T, Cn_p)), w3b_ref[0],
                        preferred_element_type=jnp.float32)
    for t in range(1, K):
        acc = acc + jnp.dot(jax.lax.slice(y1, (t, 0), (t + T, Cn_p)),
                            w3a_ref[t], preferred_element_type=jnp.float32)
        acc = acc + jnp.dot(jax.lax.slice(y2, (t, 0), (t + T, Cn_p)),
                            w3b_ref[t], preferred_element_type=jnp.float32)

    o_ref[0] = bn(acc, sb3_ref).astype(o_ref.dtype)


# -----------------------------------------------------------------------------
# Parameter construction (deterministic, synthetic).  BN folded to scale/bias.
# -----------------------------------------------------------------------------
def make_conv_bn(key, Ci, Co, K):
    kw, kg, kb, km, kv = jax.random.split(key, 5)
    w = jax.random.normal(kw, (K, Ci, Co), jnp.float32) / np.sqrt(Ci * K)
    gamma = 1.0 + 0.1 * jax.random.normal(kg, (Co,), jnp.float32)
    beta = 0.1 * jax.random.normal(kb, (Co,), jnp.float32)
    mean = 0.1 * jax.random.normal(km, (Co,), jnp.float32)
    var = jnp.abs(jax.random.normal(kv, (Co,), jnp.float32)) + 1.0
    eps = 1e-5
    scale = gamma / jnp.sqrt(var + eps)
    bias = beta - mean * scale
    return {"w": w, "scale": scale, "bias": bias}


def make_cspnet_params(key, Ci, Co, kernel_size):
    Cn = Ci // 2
    ks = jax.random.split(key, 8)
    return {
        "l1": make_conv_bn(ks[0], Ci, Cn, 1),
        "l2a": make_conv_bn(ks[1], Ci, Cn, 1),
        "res1": {"c1": make_conv_bn(ks[2], Cn, Cn, 3),
                 "c2": make_conv_bn(ks[3], Cn, Cn, 3)},
        "res2": {"c1": make_conv_bn(ks[4], Cn, Cn, 3),
                 "c2": make_conv_bn(ks[5], Cn, Cn, 3)},
        "l2b": make_conv_bn(ks[6], Cn, Cn, 1),
        "l3": make_conv_bn(ks[7], Ci, Co, kernel_size),
    }


def pack_cspnet_params(params, Ci, Co):
    """Pack raw params into lane-dense, bf16, fusion-ready layouts."""
    Cn = Ci // 2
    K3 = int(params["l3"]["w"].shape[0])
    Ci_p = _round_up(Ci, LANE)
    Cn_p = _round_up(Cn, LANE)
    Co_p = _round_up(Co, LANE)

    def pad_w(w, Cin_p, Cout_p):
        K, Cin, Cout = w.shape
        wp = jnp.zeros((K, Cin_p, Cout_p), jnp.float32).at[:, :Cin, :Cout].set(w)
        return wp.astype(jnp.bfloat16)

    def fold_sb(p, Cp):
        s = jnp.zeros((Cp,), jnp.float32).at[:p["scale"].shape[0]].set(p["scale"])
        b = jnp.zeros((Cp,), jnp.float32).at[:p["bias"].shape[0]].set(p["bias"])
        return jnp.stack([s, b])                       # (2, Cp): [scale; bias]

    w12 = jnp.zeros((Ci_p, 2 * Cn_p), jnp.float32)
    w12 = (w12.at[:Ci, :Cn].set(params["l1"]["w"][0])
              .at[:Ci, Cn_p:Cn_p + Cn].set(params["l2a"]["w"][0])
           ).astype(jnp.bfloat16)
    sb12 = jnp.zeros((2, 2 * Cn_p), jnp.float32)
    sb12 = (sb12.at[0, :Cn].set(params["l1"]["scale"])
                .at[1, :Cn].set(params["l1"]["bias"])
                .at[0, Cn_p:Cn_p + Cn].set(params["l2a"]["scale"])
                .at[1, Cn_p:Cn_p + Cn].set(params["l2a"]["bias"]))

    w3 = params["l3"]["w"]                             # (K3, 2*Cn, Co)
    return {
        "dims": dict(Ci=Ci, Cn=Cn, Co=Co, K=K3, Ci_p=Ci_p, Cn_p=Cn_p, Co_p=Co_p),
        "w12": w12, "sb12": sb12,
        "wa1": pad_w(params["res1"]["c1"]["w"], Cn_p, Cn_p),
        "sba1": fold_sb(params["res1"]["c1"], Cn_p),
        "wb1": pad_w(params["res1"]["c2"]["w"], Cn_p, Cn_p),
        "sbb1": fold_sb(params["res1"]["c2"], Cn_p),
        "wa2": pad_w(params["res2"]["c1"]["w"], Cn_p, Cn_p),
        "sba2": fold_sb(params["res2"]["c1"], Cn_p),
        "wb2": pad_w(params["res2"]["c2"]["w"], Cn_p, Cn_p),
        "sbb2": fold_sb(params["res2"]["c2"], Cn_p),
        "w2b": pad_w(params["l2b"]["w"], Cn_p, Cn_p)[0],
        "sb2b": fold_sb(params["l2b"], Cn_p),
        "w3a": pad_w(w3[:, :Cn, :], Cn_p, Co_p),
        "w3b": pad_w(w3[:, Cn:, :], Cn_p, Co_p),
        "sb3": fold_sb(params["l3"], Co_p),
    }


# -----------------------------------------------------------------------------
# CSPNetBlock forward (Pallas path): one fused pallas_call.
# -----------------------------------------------------------------------------
def cspnet_block_forward(x_ncl, packed, *, stride, tile_target=512):
    d = packed["dims"]
    N, Ci, L = x_ncl.shape
    assert Ci == d["Ci"] and Ci % 2 == 0
    Ci_p, Cn_p, Co_p, K = d["Ci_p"], d["Cn_p"], d["Co_p"], d["K"]
    p3 = K // 2
    L_full = L + 2 * p3 - K + 1            # stride-1 l3 output length
    Lo = (L + 2 * p3 - K) // stride + 1    # module output length

    T = _pick_tile(L_full, max(Ci_p, Co_p), target=tile_target)
    nLt = -(-L_full // T)
    L_full_pad = nLt * T
    W3 = T + K - 1                         # y1/y2 rows needed per tile
    W_x = W3 + 8                           # + halo 2 per res-block conv
    W_fetch = _round_up(W_x, 8)
    ofs = p3 + 4                           # left halo baked into the x pad
    Lx_pad = max((nLt - 1) * T + W_fetch, ofs + L)

    # NCL -> NLC, channel pad to lanes, L pad with halo offset, cast to bf16.
    x = jnp.transpose(x_ncl, (0, 2, 1))
    xp = jnp.pad(x, ((0, 0), (ofs, Lx_pad - ofs - L),
                     (0, Ci_p - Ci))).astype(jnp.bfloat16)

    kernel = functools.partial(_cspnet_fused_kernel, T=T, K=K, p3=p3, W_x=W_x,
                               W_fetch=W_fetch, Cn_p=Cn_p, L_true=L)

    def c2(n, l):
        return (0, 0)

    def c3(n, l):
        return (0, 0, 0)

    rows = N * nLt * W_x
    flops = int(2 * rows * (Ci_p * 2 * Cn_p + 13 * Cn_p * Cn_p)
                + 2 * N * L_full_pad * 2 * K * Cn_p * Co_p)
    wbytes = 2 * (Ci_p * 2 * Cn_p + 13 * Cn_p * Cn_p + 2 * K * Cn_p * Co_p)
    bytes_acc = int(2 * xp.size + 4 * N * L_full_pad * Co_p + wbytes)

    y_full = pl.pallas_call(
        kernel,
        out_shape=jax.ShapeDtypeStruct((N, L_full_pad, Co_p), jnp.float32),
        grid=(N, nLt),
        in_specs=[
            pl.BlockSpec(memory_space=pl.ANY),          # x: manual halo DMA
            pl.BlockSpec((Ci_p, 2 * Cn_p), c2),         # w12
            pl.BlockSpec((2, 2 * Cn_p), c2),            # sb12
            pl.BlockSpec((3, Cn_p, Cn_p), c3), pl.BlockSpec((2, Cn_p), c2),
            pl.BlockSpec((3, Cn_p, Cn_p), c3), pl.BlockSpec((2, Cn_p), c2),
            pl.BlockSpec((3, Cn_p, Cn_p), c3), pl.BlockSpec((2, Cn_p), c2),
            pl.BlockSpec((3, Cn_p, Cn_p), c3), pl.BlockSpec((2, Cn_p), c2),
            pl.BlockSpec((Cn_p, Cn_p), c2), pl.BlockSpec((2, Cn_p), c2),
            pl.BlockSpec((K, Cn_p, Co_p), c3),          # w3a
            pl.BlockSpec((K, Cn_p, Co_p), c3),          # w3b
            pl.BlockSpec((2, Co_p), c2),                # sb3
        ],
        out_specs=pl.BlockSpec((1, T, Co_p), lambda n, l: (n, l, 0)),
        scratch_shapes=[pltpu.VMEM((2, W_fetch, Ci_p), jnp.bfloat16),
                        pltpu.SemaphoreType.DMA((2,))],
        compiler_params=pltpu.CompilerParams(
            dimension_semantics=("parallel", "arbitrary"),
            vmem_limit_bytes=_VMEM_LIMIT),
        cost_estimate=pl.CostEstimate(flops=flops, transcendentals=0,
                                      bytes_accessed=bytes_acc),
    )(xp, packed["w12"], packed["sb12"],
      packed["wa1"], packed["sba1"], packed["wb1"], packed["sbb1"],
      packed["wa2"], packed["sba2"], packed["wb2"], packed["sbb2"],
      packed["w2b"], packed["sb2b"],
      packed["w3a"], packed["w3b"], packed["sb3"])

    # slice valid rows / channels and decimate for stride>1 (cheap XLA slice).
    y = y_full[:, :L_full:stride, :d["Co"]]
    assert y.shape[1] == Lo
    return jnp.transpose(y, (0, 2, 1))                  # NLC -> NCL


# -----------------------------------------------------------------------------
# Pure-JAX f32 reference (NCL, lax.conv_general_dilated) for correctness check.
# -----------------------------------------------------------------------------
def ref_conv(x_ncl, p, *, stride=1, relu=True, residual=None):
    w = p["w"]
    K = w.shape[0]
    pad = K // 2
    wt = jnp.transpose(w, (2, 1, 0))                    # (Co, Ci, K)
    y = jax.lax.conv_general_dilated(x_ncl, wt, (stride,), [(pad, pad)],
                                     dimension_numbers=("NCH", "OIH", "NCH"))
    y = y * p["scale"][None, :, None] + p["bias"][None, :, None]
    if residual is not None:
        y = y + residual
    if relu:
        y = jnp.maximum(y, 0.0)
    return y


def ref_res_block(x, p):
    h = ref_conv(x, p["c1"])
    return ref_conv(h, p["c2"], residual=x)


def ref_forward(x_ncl, params, *, stride):
    y1 = ref_conv(x_ncl, params["l1"])
    h = ref_conv(x_ncl, params["l2a"])
    h = ref_res_block(h, params["res1"])
    h = ref_res_block(h, params["res2"])
    y2 = ref_conv(h, params["l2b"])
    y = jnp.concatenate([y1, y2], axis=1)
    return ref_conv(y, params["l3"], stride=stride)


# -----------------------------------------------------------------------------
if __name__ == "__main__":
    def run_case(key, *, N, Ci, Co, L, K, stride, tile_target):
        kx, kp = jax.random.split(key)
        x = jax.random.normal(kx, (N, Ci, L), jnp.float32)
        params = make_cspnet_params(kp, Ci, Co, K)
        packed = pack_cspnet_params(params, Ci, Co)
        y = jax.block_until_ready(
            cspnet_block_forward(x, packed, stride=stride,
                                 tile_target=tile_target))
        y_ref = jax.block_until_ready(ref_forward(x, params, stride=stride))
        assert y.shape == y_ref.shape, (y.shape, y_ref.shape)
        y_np, ref_np = np.asarray(y), np.asarray(y_ref)
        # bf16 activations/weights vs f32 reference -> relaxed elementwise tol
        # plus a tight relative-L2 check (catches any structural error).
        np.testing.assert_allclose(y_np, ref_np, rtol=1e-1, atol=1e-1)
        rel = np.linalg.norm(y_np - ref_np) / max(np.linalg.norm(ref_np), 1e-6)
        assert rel < 2e-2, rel

    # small config matching the module (single L-tile, stride 1)
    run_case(jax.random.PRNGKey(0), N=2, Ci=4, Co=8, L=16, K=3, stride=1,
             tile_target=512)
    # multi-tile halo / prefetch path + stride 2 + K=5 (tiny forced tiles)
    run_case(jax.random.PRNGKey(1), N=2, Ci=4, Co=8, L=40, K=5, stride=2,
             tile_target=8)

    print("KERNEL_OK")
</pallas_src>

<mosaic_0001>
module attributes {stable_mosaic.version = 11 : i64} {
  func.func @_cspnet_fused_kernel(%arg0: i32, %arg1: i32, %arg2: memref<2x32x128xbf16, #tpu.memory_space<any>>, %arg3: memref<128x256xbf16, #tpu.memory_space<vmem>>, %arg4: memref<2x256xf32, #tpu.memory_space<vmem>>, %arg5: memref<3x128x128xbf16, #tpu.memory_space<vmem>>, %arg6: memref<2x128xf32, #tpu.memory_space<vmem>>, %arg7: memref<3x128x128xbf16, #tpu.memory_space<vmem>>, %arg8: memref<2x128xf32, #tpu.memory_space<vmem>>, %arg9: memref<3x128x128xbf16, #tpu.memory_space<vmem>>, %arg10: memref<2x128xf32, #tpu.memory_space<vmem>>, %arg11: memref<3x128x128xbf16, #tpu.memory_space<vmem>>, %arg12: memref<2x128xf32, #tpu.memory_space<vmem>>, %arg13: memref<128x128xbf16, #tpu.memory_space<vmem>>, %arg14: memref<2x128xf32, #tpu.memory_space<vmem>>, %arg15: memref<3x128x128xbf16, #tpu.memory_space<vmem>>, %arg16: memref<3x128x128xbf16, #tpu.memory_space<vmem>>, %arg17: memref<2x128xf32, #tpu.memory_space<vmem>>, %arg18: memref<1x16x128xf32, #tpu.memory_space<vmem>>, %arg19: memref<2x32x128xbf16, #tpu.memory_space<vmem>>, %arg20: memref<2x!tpu.dma_semaphore, #tpu.memory_space<semaphore_mem>>) attributes {dimension_semantics = [#tpu.dimension_semantics<parallel>, #tpu.dimension_semantics<arbitrary>], iteration_bounds = array<i64: 2, 1>, scalar_prefetch = 0 : i64, scratch_operands = 2 : i64, tpu.core_type = #tpu.core_type<tc>, window_params = [{}, {pipeline_mode = #tpu.pipeline_mode<synchronous>, transform_indices = @transform_1, window_bounds = array<i64: 128, 256>}, {pipeline_mode = #tpu.pipeline_mode<synchronous>, transform_indices = @transform_2, window_bounds = array<i64: 2, 256>}, {pipeline_mode = #tpu.pipeline_mode<synchronous>, transform_indices = @transform_3, window_bounds = array<i64: 3, 128, 128>}, {pipeline_mode = #tpu.pipeline_mode<synchronous>, transform_indices = @transform_4, window_bounds = array<i64: 2, 128>}, {pipeline_mode = #tpu.pipeline_mode<synchronous>, transform_indices = @transform_5, window_bounds = array<i64: 3, 128, 128>}, {pipeline_mode = #tpu.pipeline_mode<synchronous>, transform_indices = @transform_6, window_bounds = array<i64: 2, 128>}, {pipeline_mode = #tpu.pipeline_mode<synchronous>, transform_indices = @transform_7, window_bounds = array<i64: 3, 128, 128>}, {pipeline_mode = #tpu.pipeline_mode<synchronous>, transform_indices = @transform_8, window_bounds = array<i64: 2, 128>}, {pipeline_mode = #tpu.pipeline_mode<synchronous>, transform_indices = @transform_9, window_bounds = array<i64: 3, 128, 128>}, {pipeline_mode = #tpu.pipeline_mode<synchronous>, transform_indices = @transform_10, window_bounds = array<i64: 2, 128>}, {pipeline_mode = #tpu.pipeline_mode<synchronous>, transform_indices = @transform_11, window_bounds = array<i64: 128, 128>}, {pipeline_mode = #tpu.pipeline_mode<synchronous>, transform_indices = @transform_12, window_bounds = array<i64: 2, 128>}, {pipeline_mode = #tpu.pipeline_mode<synchronous>, transform_indices = @transform_13, window_bounds = array<i64: 3, 128, 128>}, {pipeline_mode = #tpu.pipeline_mode<synchronous>, transform_indices = @transform_14, window_bounds = array<i64: 3, 128, 128>}, {pipeline_mode = #tpu.pipeline_mode<synchronous>, transform_indices = @transform_15, window_bounds = array<i64: 2, 128>}, {transform_indices = @transform_16, window_bounds = array<i64: 1, 16, 128>}]} {
    %c2_i32 = arith.constant 2 : i32
    %0 = arith.remsi %arg1, %c2_i32 : i32
    %c16_i32 = arith.constant 16 : i32
    %1 = arith.muli %arg1, %c16_i32 : i32
    %c5_i32 = arith.constant 5 : i32
    %2 = arith.subi %1, %c5_i32 : i32
    %c0_i32 = arith.constant 0 : i32
    %3 = arith.cmpi eq, %arg1, %c0_i32 : i32
    %4 = arith.extui %3 : i1 to i32
    %c0_i32_0 = arith.constant 0 : i32
    %5 = arith.cmpi ne, %4, %c0_i32_0 : i32
    scf.if %5 {
      %c0_i32_109 = arith.constant 0 : i32
      %215 = tpu.assume_multiple %c0_i32_109, 8 : i32
      %c0_i32_110 = arith.constant 0 : i32
      %c0_i32_111 = arith.constant 0 : i32
      %c0_i32_112 = arith.constant 0 : i32
      %216 = tpu.memref_slice %arg2[%arg0, %215, %c0_i32_112] : memref<2x32x128xbf16, #tpu.memory_space<any>> -> memref<1x32x128xbf16, #tpu.memory_space<any>>
      %217 = tpu.memref_squeeze %216 : memref<1x32x128xbf16, #tpu.memory_space<any>> -> memref<32x128xbf16, #tpu.memory_space<any>>
      %c0_i32_113 = arith.constant 0 : i32
      %c0_i32_114 = arith.constant 0 : i32
      %218 = tpu.memref_slice %arg19[%c0_i32_110, %c0_i32_113, %c0_i32_114] : memref<2x32x128xbf16, #tpu.memory_space<vmem>> -> memref<1x32x128xbf16, #tpu.memory_space<vmem>>
      %219 = tpu.memref_squeeze %218 : memref<1x32x128xbf16, #tpu.memory_space<vmem>> -> memref<32x128xbf16, #tpu.memory_space<vmem>>
      %220 = tpu.memref_slice %arg20[%c0_i32_111] : memref<2x!tpu.dma_semaphore, #tpu.memory_space<semaphore_mem>> -> memref<1x!tpu.dma_semaphore, #tpu.memory_space<semaphore_mem>>
      %221 = tpu.memref_squeeze %220 : memref<1x!tpu.dma_semaphore, #tpu.memory_space<semaphore_mem>> -> memref<!tpu.dma_semaphore, #tpu.memory_space<semaphore_mem>>
      tpu.enqueue_dma source(%217 : memref<32x128xbf16, #tpu.memory_space<any>>) target(%219 : memref<32x128xbf16, #tpu.memory_space<vmem>>) target_semaphore(%221 : memref<!tpu.dma_semaphore, #tpu.memory_space<semaphore_mem>>)
    } else {
    }
    %c1_i32 = arith.constant 1 : i32
    %6 = arith.addi %arg1, %c1_i32 : i32
    %c1_i32_1 = arith.constant 1 : i32
    %7 = arith.cmpi slt, %6, %c1_i32_1 : i32
    %8 = arith.extui %7 : i1 to i32
    %c0_i32_2 = arith.constant 0 : i32
    %9 = arith.cmpi ne, %8, %c0_i32_2 : i32
    scf.if %9 {
      %c1_i32_109 = arith.constant 1 : i32
      %215 = arith.addi %arg1, %c1_i32_109 : i32
      %c1_i32_110 = arith.constant 1 : i32
      %216 = arith.subi %c1_i32_110, %0 : i32
      %c16_i32_111 = arith.constant 16 : i32
      %217 = arith.muli %215, %c16_i32_111 : i32
      %218 = tpu.assume_multiple %217, 8 : i32
      %c0_i32_112 = arith.constant 0 : i32
      %219 = tpu.memref_slice %arg2[%arg0, %218, %c0_i32_112] : memref<2x32x128xbf16, #tpu.memory_space<any>> -> memref<1x32x128xbf16, #tpu.memory_space<any>>
      %220 = tpu.memref_squeeze %219 : memref<1x32x128xbf16, #tpu.memory_space<any>> -> memref<32x128xbf16, #tpu.memory_space<any>>
      %c0_i32_113 = arith.constant 0 : i32
      %c0_i32_114 = arith.constant 0 : i32
      %221 = tpu.memref_slice %arg19[%216, %c0_i32_113, %c0_i32_114] : memref<2x32x128xbf16, #tpu.memory_space<vmem>> -> memref<1x32x128xbf16, #tpu.memory_space<vmem>>
      %222 = tpu.memref_squeeze %221 : memref<1x32x128xbf16, #tpu.memory_space<vmem>> -> memref<32x128xbf16, #tpu.memory_space<vmem>>
      %223 = tpu.memref_slice %arg20[%216] : memref<2x!tpu.dma_semaphore, #tpu.memory_space<semaphore_mem>> -> memref<1x!tpu.dma_semaphore, #tpu.memory_space<semaphore_mem>>
      %224 = tpu.memref_squeeze %223 : memref<1x!tpu.dma_semaphore, #tpu.memory_space<semaphore_mem>> -> memref<!tpu.dma_semaphore, #tpu.memory_space<semaphore_mem>>
      tpu.enqueue_dma source(%220 : memref<32x128xbf16, #tpu.memory_space<any>>) target(%222 : memref<32x128xbf16, #tpu.memory_space<vmem>>) target_semaphore(%224 : memref<!tpu.dma_semaphore, #tpu.memory_space<semaphore_mem>>)
    } else {
    }
    %10 = tpu.iota {dimensions = array<i32: 0>} : vector<32x1xi32>
    %11 = vector.broadcast %2 : i32 to vector<32x1xi32>
    %12 = arith.addi %11, %10 : vector<32x1xi32>
    %c0_i32_3 = arith.constant 0 : i32
    %13 = vector.broadcast %c0_i32_3 : i32 to vector<32x1xi32>
    %14 = arith.cmpi sge, %12, %13 : vector<32x1xi32>
    %c16_i32_4 = arith.constant 16 : i32
    %15 = vector.broadcast %c16_i32_4 : i32 to vector<32x1xi32>
    %16 = arith.cmpi slt, %12, %15 : vector<32x1xi32>
    %17 = arith.andi %14, %16 : vector<32x1xi1>
    %18 = arith.extui %17 : vector<32x1xi1> to vector<32x1xi32>
    %19 = arith.sitofp %18 : vector<32x1xi32> to vector<32x1xf32>
    %c16_i32_5 = arith.constant 16 : i32
    %20 = arith.muli %arg1, %c16_i32_5 : i32
    %21 = tpu.assume_multiple %20, 8 : i32
    %c0_i32_6 = arith.constant 0 : i32
    %22 = tpu.memref_slice %arg2[%arg0, %21, %c0_i32_6] : memref<2x32x128xbf16, #tpu.memory_space<any>> -> memref<1x32x128xbf16, #tpu.memory_space<any>>
    %23 = tpu.memref_squeeze %22 : memref<1x32x128xbf16, #tpu.memory_space<any>> -> memref<32x128xbf16, #tpu.memory_space<any>>
    %c0_i32_7 = arith.constant 0 : i32
    %c0_i32_8 = arith.constant 0 : i32
    %24 = tpu.memref_slice %arg19[%0, %c0_i32_7, %c0_i32_8] : memref<2x32x128xbf16, #tpu.memory_space<vmem>> -> memref<1x32x128xbf16, #tpu.memory_space<vmem>>
    %25 = tpu.memref_squeeze %24 : memref<1x32x128xbf16, #tpu.memory_space<vmem>> -> memref<32x128xbf16, #tpu.memory_space<vmem>>
    %26 = tpu.memref_slice %arg20[%0] : memref<2x!tpu.dma_semaphore, #tpu.memory_space<semaphore_mem>> -> memref<1x!tpu.dma_semaphore, #tpu.memory_space<semaphore_mem>>
    %27 = tpu.memref_squeeze %26 : memref<1x!tpu.dma_semaphore, #tpu.memory_space<semaphore_mem>> -> memref<!tpu.dma_semaphore, #tpu.memory_space<semaphore_mem>>
    tpu.wait_dma2 semaphore(%27 : memref<!tpu.dma_semaphore, #tpu.memory_space<semaphore_mem>>) src(%23 : memref<32x128xbf16, #tpu.memory_space<any>>) dst(%25 : memref<32x128xbf16, #tpu.memory_space<vmem>>)
    %28 = arith.index_cast %0 : i32 to index
    %c0 = arith.constant 0 : index
    %c0_9 = arith.constant 0 : index
    %29 = vector.load %arg19[%28, %c0, %c0_9] : memref<2x32x128xbf16, #tpu.memory_space<vmem>>, vector<1x32x128xbf16>
    %30 = vector.shape_cast %29 : vector<1x32x128xbf16> to vector<32x128xbf16>
    %c0_10 = arith.constant 0 : index
    %c0_11 = arith.constant 0 : index
    %31 = vector.load %arg3[%c0_10, %c0_11] : memref<128x256xbf16, #tpu.memory_space<vmem>>, vector<128x256xbf16>
    %cst = arith.constant dense<0.000000e+00> : vector<32x256xf32>
    %32 = tpu.matmul %30, %31, %cst {dimension_numbers = #tpu.dot_dimension_numbers<[1], [0], [0], [1], [0, 0, 1, 1], [], []>} : vector<32x128xbf16>, vector<128x256xbf16>, vector<32x256xf32> -> vector<32x256xf32>
    %c0_12 = arith.constant 0 : index
    %c0_13 = arith.constant 0 : index
    %33 = vector.load %arg4[%c0_12, %c0_13] : memref<2x256xf32, #tpu.memory_space<vmem>>, vector<2x256xf32>
    %34 = vector.extract_strided_slice %33 {offsets = [0, 0], sizes = [1, 256], strides = [1, 1]} : vector<2x256xf32> to vector<1x256xf32>
    %35 = vector.broadcast %34 : vector<1x256xf32> to vector<32x256xf32>
    %36 = arith.mulf %32, %35 : vector<32x256xf32>
    %37 = vector.extract_strided_slice %33 {offsets = [1, 0], sizes = [1, 256], strides = [1, 1]} : vector<2x256xf32> to vector<1x256xf32>
    %38 = vector.broadcast %37 : vector<1x256xf32> to vector<32x256xf32>
    %39 = arith.addf %36, %38 : vector<32x256xf32>
    %cst_14 = arith.constant 0.000000e+00 : f32
    %40 = vector.broadcast %cst_14 : f32 to vector<32x256xf32>
    %41 = arith.maximumf %39, %40 : vector<32x256xf32>
    %42 = vector.broadcast %19 : vector<32x1xf32> to vector<32x256xf32>
    %43 = arith.mulf %41, %42 : vector<32x256xf32>
    %44 = vector.extract_strided_slice %43 {offsets = [4, 0], sizes = [18, 128], strides = [1, 1]} : vector<32x256xf32> to vector<18x128xf32>
    %45 = arith.truncf %44 : vector<18x128xf32> to vector<18x128xbf16>
    %46 = vector.extract_strided_slice %43 {offsets = [0, 128], sizes = [32, 128], strides = [1, 1]} : vector<32x256xf32> to vector<32x128xf32>
    %47 = arith.truncf %46 : vector<32x128xf32> to vector<32x128xbf16>
    %48 = vector.extract_strided_slice %47 {offsets = [0, 0], sizes = [24, 128], strides = [1, 1]} : vector<32x128xbf16> to vector<24x128xbf16>
    %c0_15 = arith.constant 0 : index
    %c0_16 = arith.constant 0 : index
    %c0_17 = arith.constant 0 : index
    %49 = vector.load %arg5[%c0_15, %c0_16, %c0_17] : memref<3x128x128xbf16, #tpu.memory_space<vmem>>, vector<1x128x128xbf16>
    %50 = vector.shape_cast %49 : vector<1x128x128xbf16> to vector<128x128xbf16>
    %cst_18 = arith.constant dense<0.000000e+00> : vector<24x128xf32>
    %51 = tpu.matmul %48, %50, %cst_18 {dimension_numbers = #tpu.dot_dimension_numbers<[1], [0], [0], [1], [0, 0, 1, 1], [], []>} : vector<24x128xbf16>, vector<128x128xbf16>, vector<24x128xf32> -> vector<24x128xf32>
    %52 = vector.extract_strided_slice %47 {offsets = [1, 0], sizes = [24, 128], strides = [1, 1]} : vector<32x128xbf16> to vector<24x128xbf16>
    %c1 = arith.constant 1 : index
    %c0_19 = arith.constant 0 : index
    %c0_20 = arith.constant 0 : index
    %53 = vector.load %arg5[%c1, %c0_19, %c0_20] : memref<3x128x128xbf16, #tpu.memory_space<vmem>>, vector<1x128x128xbf16>
    %54 = vector.shape_cast %53 : vector<1x128x128xbf16> to vector<128x128xbf16>
    %cst_21 = arith.constant dense<0.000000e+00> : vector<24x128xf32>
    %55 = tpu.matmul %52, %54, %cst_21 {dimension_numbers = #tpu.dot_dimension_numbers<[1], [0], [0], [1], [0, 0, 1, 1], [], []>} : vector<24x128xbf16>, vector<128x128xbf16>, vector<24x128xf32> -> vector<24x128xf32>
    %56 = arith.addf %51, %55 : vector<24x128xf32>
    %57 = vector.extract_strided_slice %47 {offsets = [2, 0], sizes = [24, 128], strides = [1, 1]} : vector<32x128xbf16> to vector<24x128xbf16>
    %c2 = arith.constant 2 : index
    %c0_22 = arith.constant 0 : index
    %c0_23 = arith.constant 0 : index
    %58 = vector.load %arg5[%c2, %c0_22, %c0_23] : memref<3x128x128xbf16, #tpu.memory_space<vmem>>, vector<1x128x128xbf16>
    %59 = vector.shape_cast %58 : vector<1x128x128xbf16> to vector<128x128xbf16>
    %cst_24 = arith.constant dense<0.000000e+00> : vector<24x128xf32>
    %60 = tpu.matmul %57, %59, %cst_24 {dimension_numbers = #tpu.dot_dimension_numbers<[1], [0], [0], [1], [0, 0, 1, 1], [], []>} : vector<24x128xbf16>, vector<128x128xbf16>, vector<24x128xf32> -> vector<24x128xf32>
    %61 = arith.addf %56, %60 : vector<24x128xf32>
    %c0_25 = arith.constant 0 : index
    %c0_26 = arith.constant 0 : index
    %62 = vector.load %arg6[%c0_25, %c0_26] : memref<2x128xf32, #tpu.memory_space<vmem>>, vector<2x128xf32>
    %63 = vector.extract_strided_slice %62 {offsets = [0, 0], sizes = [1, 128], strides = [1, 1]} : vector<2x128xf32> to vector<1x128xf32>
    %64 = vector.broadcast %63 : vector<1x128xf32> to vector<24x128xf32>
    %65 = arith.mulf %61, %64 : vector<24x128xf32>
    %66 = vector.extract_strided_slice %62 {offsets = [1, 0], sizes = [1, 128], strides = [1, 1]} : vector<2x128xf32> to vector<1x128xf32>
    %67 = vector.broadcast %66 : vector<1x128xf32> to vector<24x128xf32>
    %68 = arith.addf %65, %67 : vector<24x128xf32>
    %cst_27 = arith.constant 0.000000e+00 : f32
    %69 = vector.broadcast %cst_27 : f32 to vector<24x128xf32>
    %70 = arith.maximumf %68, %69 : vector<24x128xf32>
    %71 = vector.extract_strided_slice %19 {offsets = [1, 0], sizes = [24, 1], strides = [1, 1]} : vector<32x1xf32> to vector<24x1xf32>
    %72 = vector.broadcast %71 : vector<24x1xf32> to vector<24x128xf32>
    %73 = arith.mulf %70, %72 : vector<24x128xf32>
    %74 = arith.truncf %73 : vector<24x128xf32> to vector<24x128xbf16>
    %75 = vector.extract_strided_slice %74 {offsets = [0, 0], sizes = [22, 128], strides = [1, 1]} : vector<24x128xbf16> to vector<22x128xbf16>
    %c0_28 = arith.constant 0 : index
    %c0_29 = arith.constant 0 : index
    %c0_30 = arith.constant 0 : index
    %76 = vector.load %arg7[%c0_28, %c0_29, %c0_30] : memref<3x128x128xbf16, #tpu.memory_space<vmem>>, vector<1x128x128xbf16>
    %77 = vector.shape_cast %76 : vector<1x128x128xbf16> to vector<128x128xbf16>
    %cst_31 = arith.constant dense<0.000000e+00> : vector<22x128xf32>
    %78 = tpu.matmul %75, %77, %cst_31 {dimension_numbers = #tpu.dot_dimension_numbers<[1], [0], [0], [1], [0, 0, 1, 1], [], []>} : vector<22x128xbf16>, vector<128x128xbf16>, vector<22x128xf32> -> vector<22x128xf32>
    %79 = vector.extract_strided_slice %74 {offsets = [1, 0], sizes = [22, 128], strides = [1, 1]} : vector<24x128xbf16> to vector<22x128xbf16>
    %c1_32 = arith.constant 1 : index
    %c0_33 = arith.constant 0 : index
    %c0_34 = arith.constant 0 : index
    %80 = vector.load %arg7[%c1_32, %c0_33, %c0_34] : memref<3x128x128xbf16, #tpu.memory_space<vmem>>, vector<1x128x128xbf16>
    %81 = vector.shape_cast %80 : vector<1x128x128xbf16> to vector<128x128xbf16>
    %cst_35 = arith.constant dense<0.000000e+00> : vector<22x128xf32>
    %82 = tpu.matmul %79, %81, %cst_35 {dimension_numbers = #tpu.dot_dimension_numbers<[1], [0], [0], [1], [0, 0, 1, 1], [], []>} : vector<22x128xbf16>, vector<128x128xbf16>, vector<22x128xf32> -> vector<22x128xf32>
    %83 = arith.addf %78, %82 : vector<22x128xf32>
    %84 = vector.extract_strided_slice %74 {offsets = [2, 0], sizes = [22, 128], strides = [1, 1]} : vector<24x128xbf16> to vector<22x128xbf16>
    %c2_36 = arith.constant 2 : index
    %c0_37 = arith.constant 0 : index
    %c0_38 = arith.constant 0 : index
    %85 = vector.load %arg7[%c2_36, %c0_37, %c0_38] : memref<3x128x128xbf16, #tpu.memory_space<vmem>>, vector<1x128x128xbf16>
    %86 = vector.shape_cast %85 : vector<1x128x128xbf16> to vector<128x128xbf16>
    %cst_39 = arith.constant dense<0.000000e+00> : vector<22x128xf32>
    %87 = tpu.matmul %84, %86, %cst_39 {dimension_numbers = #tpu.dot_dimension_numbers<[1], [0], [0], [1], [0, 0, 1, 1], [], []>} : vector<22x128xbf16>, vector<128x128xbf16>, vector<22x128xf32> -> vector<22x128xf32>
    %88 = arith.addf %83, %87 : vector<22x128xf32>
    %c0_40 = arith.constant 0 : index
    %c0_41 = arith.constant 0 : index
    %89 = vector.load %arg8[%c0_40, %c0_41] : memref<2x128xf32, #tpu.memory_space<vmem>>, vector<2x128xf32>
    %90 = vector.extract_strided_slice %89 {offsets = [0, 0], sizes = [1, 128], strides = [1, 1]} : vector<2x128xf32> to vector<1x128xf32>
    %91 = vector.broadcast %90 : vector<1x128xf32> to vector<22x128xf32>
    %92 = arith.mulf %88, %91 : vector<22x128xf32>
    %93 = vector.extract_strided_slice %89 {offsets = [1, 0], sizes = [1, 128], strides = [1, 1]} : vector<2x128xf32> to vector<1x128xf32>
    %94 = vector.broadcast %93 : vector<1x128xf32> to vector<22x128xf32>
    %95 = arith.addf %92, %94 : vector<22x128xf32>
    %96 = vector.extract_strided_slice %47 {offsets = [2, 0], sizes = [22, 128], strides = [1, 1]} : vector<32x128xbf16> to vector<22x128xbf16>
    %97 = arith.extf %96 : vector<22x128xbf16> to vector<22x128xf32>
    %98 = arith.addf %95, %97 : vector<22x128xf32>
    %cst_42 = arith.constant 0.000000e+00 : f32
    %99 = vector.broadcast %cst_42 : f32 to vector<22x128xf32>
    %100 = arith.maximumf %98, %99 : vector<22x128xf32>
    %101 = vector.extract_strided_slice %19 {offsets = [2, 0], sizes = [22, 1], strides = [1, 1]} : vector<32x1xf32> to vector<22x1xf32>
    %102 = vector.broadcast %101 : vector<22x1xf32> to vector<22x128xf32>
    %103 = arith.mulf %100, %102 : vector<22x128xf32>
    %104 = arith.truncf %103 : vector<22x128xf32> to vector<22x128xbf16>
    %105 = vector.extract_strided_slice %104 {offsets = [0, 0], sizes = [20, 128], strides = [1, 1]} : vector<22x128xbf16> to vector<20x128xbf16>
    %c0_43 = arith.constant 0 : index
    %c0_44 = arith.constant 0 : index
    %c0_45 = arith.constant 0 : index
    %106 = vector.load %arg9[%c0_43, %c0_44, %c0_45] : memref<3x128x128xbf16, #tpu.memory_space<vmem>>, vector<1x128x128xbf16>
    %107 = vector.shape_cast %106 : vector<1x128x128xbf16> to vector<128x128xbf16>
    %cst_46 = arith.constant dense<0.000000e+00> : vector<20x128xf32>
    %108 = tpu.matmul %105, %107, %cst_46 {dimension_numbers = #tpu.dot_dimension_numbers<[1], [0], [0], [1], [0, 0, 1, 1], [], []>} : vector<20x128xbf16>, vector<128x128xbf16>, vector<20x128xf32> -> vector<20x128xf32>
    %109 = vector.extract_strided_slice %104 {offsets = [1, 0], sizes = [20, 128], strides = [1, 1]} : vector<22x128xbf16> to vector<20x128xbf16>
    %c1_47 = arith.constant 1 : index
    %c0_48 = arith.constant 0 : index
    %c0_49 = arith.constant 0 : index
    %110 = vector.load %arg9[%c1_47, %c0_48, %c0_49] : memref<3x128x128xbf16, #tpu.memory_space<vmem>>, vector<1x128x128xbf16>
    %111 = vector.shape_cast %110 : vector<1x128x128xbf16> to vector<128x128xbf16>
    %cst_50 = arith.constant dense<0.000000e+00> : vector<20x128xf32>
    %112 = tpu.matmul %109, %111, %cst_50 {dimension_numbers = #tpu.dot_dimension_numbers<[1], [0], [0], [1], [0, 0, 1, 1], [], []>} : vector<20x128xbf16>, vector<128x128xbf16>, vector<20x128xf32> -> vector<20x128xf32>
    %113 = arith.addf %108, %112 : vector<20x128xf32>
    %114 = vector.extract_strided_slice %104 {offsets = [2, 0], sizes = [20, 128], strides = [1, 1]} : vector<22x128xbf16> to vector<20x128xbf16>
    %c2_51 = arith.constant 2 : index
    %c0_52 = arith.constant 0 : index
    %c0_53 = arith.constant 0 : index
    %115 = vector.load %arg9[%c2_51, %c0_52, %c0_53] : memref<3x128x128xbf16, #tpu.memory_space<vmem>>, vector<1x128x128xbf16>
    %116 = vector.shape_cast %115 : vector<1x128x128xbf16> to vector<128x128xbf16>
    %cst_54 = arith.constant dense<0.000000e+00> : vector<20x128xf32>
    %117 = tpu.matmul %114, %116, %cst_54 {dimension_numbers = #tpu.dot_dimension_numbers<[1], [0], [0], [1], [0, 0, 1, 1], [], []>} : vector<20x128xbf16>, vector<128x128xbf16>, vector<20x128xf32> -> vector<20x128xf32>
    %118 = arith.addf %113, %117 : vector<20x128xf32>
    %c0_55 = arith.constant 0 : index
    %c0_56 = arith.constant 0 : index
    %119 = vector.load %arg10[%c0_55, %c0_56] : memref<2x128xf32, #tpu.memory_space<vmem>>, vector<2x128xf32>
    %120 = vector.extract_strided_slice %119 {offsets = [0, 0], sizes = [1, 128], strides = [1, 1]} : vector<2x128xf32> to vector<1x128xf32>
    %121 = vector.broadcast %120 : vector<1x128xf32> to vector<20x128xf32>
    %122 = arith.mulf %118, %121 : vector<20x128xf32>
    %123 = vector.extract_strided_slice %119 {offsets = [1, 0], sizes = [1, 128], strides = [1, 1]} : vector<2x128xf32> to vector<1x128xf32>
    %124 = vector.broadcast %123 : vector<1x128xf32> to vector<20x128xf32>
    %125 = arith.addf %122, %124 : vector<20x128xf32>
    %cst_57 = arith.constant 0.000000e+00 : f32
    %126 = vector.broadcast %cst_57 : f32 to vector<20x128xf32>
    %127 = arith.maximumf %125, %126 : vector<20x128xf32>
    %128 = vector.extract_strided_slice %19 {offsets = [3, 0], sizes = [20, 1], strides = [1, 1]} : vector<32x1xf32> to vector<20x1xf32>
    %129 = vector.broadcast %128 : vector<20x1xf32> to vector<20x128xf32>
    %130 = arith.mulf %127, %129 : vector<20x128xf32>
    %131 = arith.truncf %130 : vector<20x128xf32> to vector<20x128xbf16>
    %132 = vector.extract_strided_slice %131 {offsets = [0, 0], sizes = [18, 128], strides = [1, 1]} : vector<20x128xbf16> to vector<18x128xbf16>
    %c0_58 = arith.constant 0 : index
    %c0_59 = arith.constant 0 : index
    %c0_60 = arith.constant 0 : index
    %133 = vector.load %arg11[%c0_58, %c0_59, %c0_60] : memref<3x128x128xbf16, #tpu.memory_space<vmem>>, vector<1x128x128xbf16>
    %134 = vector.shape_cast %133 : vector<1x128x128xbf16> to vector<128x128xbf16>
    %cst_61 = arith.constant dense<0.000000e+00> : vector<18x128xf32>
    %135 = tpu.matmul %132, %134, %cst_61 {dimension_numbers = #tpu.dot_dimension_numbers<[1], [0], [0], [1], [0, 0, 1, 1], [], []>} : vector<18x128xbf16>, vector<128x128xbf16>, vector<18x128xf32> -> vector<18x128xf32>
    %136 = vector.extract_strided_slice %131 {offsets = [1, 0], sizes = [18, 128], strides = [1, 1]} : vector<20x128xbf16> to vector<18x128xbf16>
    %c1_62 = arith.constant 1 : index
    %c0_63 = arith.constant 0 : index
    %c0_64 = arith.constant 0 : index
    %137 = vector.load %arg11[%c1_62, %c0_63, %c0_64] : memref<3x128x128xbf16, #tpu.memory_space<vmem>>, vector<1x128x128xbf16>
    %138 = vector.shape_cast %137 : vector<1x128x128xbf16> to vector<128x128xbf16>
    %cst_65 = arith.constant dense<0.000000e+00> : vector<18x128xf32>
    %139 = tpu.matmul %136, %138, %cst_65 {dimension_numbers = #tpu.dot_dimension_numbers<[1], [0], [0], [1], [0, 0, 1, 1], [], []>} : vector<18x128xbf16>, vector<128x128xbf16>, vector<18x128xf32> -> vector<18x128xf32>
    %140 = arith.addf %135, %139 : vector<18x128xf32>
    %141 = vector.extract_strided_slice %131 {offsets = [2, 0], sizes = [18, 128], strides = [1, 1]} : vector<20x128xbf16> to vector<18x128xbf16>
    %c2_66 = arith.constant 2 : index
    %c0_67 = arith.constant 0 : index
    %c0_68 = arith.constant 0 : index
    %142 = vector.load %arg11[%c2_66, %c0_67, %c0_68] : memref<3x128x128xbf16, #tpu.memory_space<vmem>>, vector<1x128x128xbf16>
    %143 = vector.shape_cast %142 : vector<1x128x128xbf16> to vector<128x128xbf16>
    %cst_69 = arith.constant dense<0.000000e+00> : vector<18x128xf32>
    %144 = tpu.matmul %141, %143, %cst_69 {dimension_numbers = #tpu.dot_dimension_numbers<[1], [0], [0], [1], [0, 0, 1, 1], [], []>} : vector<18x128xbf16>, vector<128x128xbf16>, vector<18x128xf32> -> vector<18x128xf32>
    %145 = arith.addf %140, %144 : vector<18x128xf32>
    %c0_70 = arith.constant 0 : index
    %c0_71 = arith.constant 0 : index
    %146 = vector.load %arg12[%c0_70, %c0_71] : memref<2x128xf32, #tpu.memory_space<vmem>>, vector<2x128xf32>
    %147 = vector.extract_strided_slice %146 {offsets = [0, 0], sizes = [1, 128], strides = [1, 1]} : vector<2x128xf32> to vector<1x128xf32>
    %148 = vector.broadcast %147 : vector<1x128xf32> to vector<18x128xf32>
    %149 = arith.mulf %145, %148 : vector<18x128xf32>
    %150 = vector.extract_strided_slice %146 {offsets = [1, 0], sizes = [1, 128], strides = [1, 1]} : vector<2x128xf32> to vector<1x128xf32>
    %151 = vector.broadcast %150 : vector<1x128xf32> to vector<18x128xf32>
    %152 = arith.addf %149, %151 : vector<18x128xf32>
    %153 = vector.extract_strided_slice %104 {offsets = [2, 0], sizes = [18, 128], strides = [1, 1]} : vector<22x128xbf16> to vector<18x128xbf16>
    %154 = arith.extf %153 : vector<18x128xbf16> to vector<18x128xf32>
    %155 = arith.addf %152, %154 : vector<18x128xf32>
    %cst_72 = arith.constant 0.000000e+00 : f32
    %156 = vector.broadcast %cst_72 : f32 to vector<18x128xf32>
    %157 = arith.maximumf %155, %156 : vector<18x128xf32>
    %158 = arith.truncf %157 : vector<18x128xf32> to vector<18x128xbf16>
    %c0_73 = arith.constant 0 : index
    %c0_74 = arith.constant 0 : index
    %159 = vector.load %arg13[%c0_73, %c0_74] : memref<128x128xbf16, #tpu.memory_space<vmem>>, vector<128x128xbf16>
    %cst_75 = arith.constant dense<0.000000e+00> : vector<18x128xf32>
    %160 = tpu.matmul %158, %159, %cst_75 {dimension_numbers = #tpu.dot_dimension_numbers<[1], [0], [0], [1], [0, 0, 1, 1], [], []>} : vector<18x128xbf16>, vector<128x128xbf16>, vector<18x128xf32> -> vector<18x128xf32>
    %c0_76 = arith.constant 0 : index
    %c0_77 = arith.constant 0 : index
    %161 = vector.load %arg14[%c0_76, %c0_77] : memref<2x128xf32, #tpu.memory_space<vmem>>, vector<2x128xf32>
    %162 = vector.extract_strided_slice %161 {offsets = [0, 0], sizes = [1, 128], strides = [1, 1]} : vector<2x128xf32> to vector<1x128xf32>
    %163 = vector.broadcast %162 : vector<1x128xf32> to vector<18x128xf32>
    %164 = arith.mulf %160, %163 : vector<18x128xf32>
    %165 = vector.extract_strided_slice %161 {offsets = [1, 0], sizes = [1, 128], strides = [1, 1]} : vector<2x128xf32> to vector<1x128xf32>
    %166 = vector.broadcast %165 : vector<1x128xf32> to vector<18x128xf32>
    %167 = arith.addf %164, %166 : vector<18x128xf32>
    %cst_78 = arith.constant 0.000000e+00 : f32
    %168 = vector.broadcast %cst_78 : f32 to vector<18x128xf32>
    %169 = arith.maximumf %167, %168 : vector<18x128xf32>
    %170 = vector.extract_strided_slice %19 {offsets = [4, 0], sizes = [18, 1], strides = [1, 1]} : vector<32x1xf32> to vector<18x1xf32>
    %171 = vector.broadcast %170 : vector<18x1xf32> to vector<18x128xf32>
    %172 = arith.mulf %169, %171 : vector<18x128xf32>
    %173 = arith.truncf %172 : vector<18x128xf32> to vector<18x128xbf16>
    %174 = vector.extract_strided_slice %45 {offsets = [0, 0], sizes = [16, 128], strides = [1, 1]} : vector<18x128xbf16> to vector<16x128xbf16>
    %c0_79 = arith.constant 0 : index
    %c0_80 = arith.constant 0 : index
    %c0_81 = arith.constant 0 : index
    %175 = vector.load %arg15[%c0_79, %c0_80, %c0_81] : memref<3x128x128xbf16, #tpu.memory_space<vmem>>, vector<1x128x128xbf16>
    %176 = vector.shape_cast %175 : vector<1x128x128xbf16> to vector<128x128xbf16>
    %cst_82 = arith.constant dense<0.000000e+00> : vector<16x128xf32>
    %177 = tpu.matmul %174, %176, %cst_82 {dimension_numbers = #tpu.dot_dimension_numbers<[1], [0], [0], [1], [0, 0, 1, 1], [], []>} : vector<16x128xbf16>, vector<128x128xbf16>, vector<16x128xf32> -> vector<16x128xf32>
    %178 = vector.extract_strided_slice %173 {offsets = [0, 0], sizes = [16, 128], strides = [1, 1]} : vector<18x128xbf16> to vector<16x128xbf16>
    %c0_83 = arith.constant 0 : index
    %c0_84 = arith.constant 0 : index
    %c0_85 = arith.constant 0 : index
    %179 = vector.load %arg16[%c0_83, %c0_84, %c0_85] : memref<3x128x128xbf16, #tpu.memory_space<vmem>>, vector<1x128x128xbf16>
    %180 = vector.shape_cast %179 : vector<1x128x128xbf16> to vector<128x128xbf16>
    %cst_86 = arith.constant dense<0.000000e+00> : vector<16x128xf32>
    %181 = tpu.matmul %178, %180, %cst_86 {dimension_numbers = #tpu.dot_dimension_numbers<[1], [0], [0], [1], [0, 0, 1, 1], [], []>} : vector<16x128xbf16>, vector<128x128xbf16>, vector<16x128xf32> -> vector<16x128xf32>
    %182 = arith.addf %177, %181 : vector<16x128xf32>
    %183 = vector.extract_strided_slice %45 {offsets = [1, 0], sizes = [16, 128], strides = [1, 1]} : vector<18x128xbf16> to vector<16x128xbf16>
    %c1_87 = arith.constant 1 : index
    %c0_88 = arith.constant 0 : index
    %c0_89 = arith.constant 0 : index
    %184 = vector.load %arg15[%c1_87, %c0_88, %c0_89] : memref<3x128x128xbf16, #tpu.memory_space<vmem>>, vector<1x128x128xbf16>
    %185 = vector.shape_cast %184 : vector<1x128x128xbf16> to vector<128x128xbf16>
    %cst_90 = arith.constant dense<0.000000e+00> : vector<16x128xf32>
    %186 = tpu.matmul %183, %185, %cst_90 {dimension_numbers = #tpu.dot_dimension_numbers<[1], [0], [0], [1], [0, 0, 1, 1], [], []>} : vector<16x128xbf16>, vector<128x128xbf16>, vector<16x128xf32> -> vector<16x128xf32>
    %187 = arith.addf %182, %186 : vector<16x128xf32>
    %188 = vector.extract_strided_slice %173 {offsets = [1, 0], sizes = [16, 128], strides = [1, 1]} : vector<18x128xbf16> to vector<16x128xbf16>
    %c1_91 = arith.constant 1 : index
    %c0_92 = arith.constant 0 : index
    %c0_93 = arith.constant 0 : index
    %189 = vector.load %arg16[%c1_91, %c0_92, %c0_93] : memref<3x128x128xbf16, #tpu.memory_space<vmem>>, vector<1x128x128xbf16>
    %190 = vector.shape_cast %189 : vector<1x128x128xbf16> to vector<128x128xbf16>
    %cst_94 = arith.constant dense<0.000000e+00> : vector<16x128xf32>
    %191 = tpu.matmul %188, %190, %cst_94 {dimension_numbers = #tpu.dot_dimension_numbers<[1], [0], [0], [1], [0, 0, 1, 1], [], []>} : vector<16x128xbf16>, vector<128x128xbf16>, vector<16x128xf32> -> vector<16x128xf32>
    %192 = arith.addf %187, %191 : vector<16x128xf32>
    %193 = vector.extract_strided_slice %45 {offsets = [2, 0], sizes = [16, 128], strides = [1, 1]} : vector<18x128xbf16> to vector<16x128xbf16>
    %c2_95 = arith.constant 2 : index
    %c0_96 = arith.constant 0 : index
    %c0_97 = arith.constant 0 : index
    %194 = vector.load %arg15[%c2_95, %c0_96, %c0_97] : memref<3x128x128xbf16, #tpu.memory_space<vmem>>, vector<1x128x128xbf16>
    %195 = vector.shape_cast %194 : vector<1x128x128xbf16> to vector<128x128xbf16>
    %cst_98 = arith.constant dense<0.000000e+00> : vector<16x128xf32>
    %196 = tpu.matmul %193, %195, %cst_98 {dimension_numbers = #tpu.dot_dimension_numbers<[1], [0], [0], [1], [0, 0, 1, 1], [], []>} : vector<16x128xbf16>, vector<128x128xbf16>, vector<16x128xf32> -> vector<16x128xf32>
    %197 = arith.addf %192, %196 : vector<16x128xf32>
    %198 = vector.extract_strided_slice %173 {offsets = [2, 0], sizes = [16, 128], strides = [1, 1]} : vector<18x128xbf16> to vector<16x128xbf16>
    %c2_99 = arith.constant 2 : index
    %c0_100 = arith.constant 0 : index
    %c0_101 = arith.constant 0 : index
    %199 = vector.load %arg16[%c2_99, %c0_100, %c0_101] : memref<3x128x128xbf16, #tpu.memory_space<vmem>>, vector<1x128x128xbf16>
    %200 = vector.shape_cast %199 : vector<1x128x128xbf16> to vector<128x128xbf16>
    %cst_102 = arith.constant dense<0.000000e+00> : vector<16x128xf32>
    %201 = tpu.matmul %198, %200, %cst_102 {dimension_numbers = #tpu.dot_dimension_numbers<[1], [0], [0], [1], [0, 0, 1, 1], [], []>} : vector<16x128xbf16>, vector<128x128xbf16>, vector<16x128xf32> -> vector<16x128xf32>
    %202 = arith.addf %197, %201 : vector<16x128xf32>
    %c0_103 = arith.constant 0 : index
    %c0_104 = arith.constant 0 : index
    %203 = vector.load %arg17[%c0_103, %c0_104] : memref<2x128xf32, #tpu.memory_space<vmem>>, vector<2x128xf32>
    %204 = vector.extract_strided_slice %203 {offsets = [0, 0], sizes = [1, 128], strides = [1, 1]} : vector<2x128xf32> to vector<1x128xf32>
    %205 = vector.broadcast %204 : vector<1x128xf32> to vector<16x128xf32>
    %206 = arith.mulf %202, %205 : vector<16x128xf32>
    %207 = vector.extract_strided_slice %203 {offsets = [1, 0], sizes = [1, 128], strides = [1, 1]} : vector<2x128xf32> to vector<1x128xf32>
    %208 = vector.broadcast %207 : vector<1x128xf32> to vector<16x128xf32>
    %209 = arith.addf %206, %208 : vector<16x128xf32>
    %cst_105 = arith.constant 0.000000e+00 : f32
    %210 = vector.broadcast %cst_105 : f32 to vector<16x128xf32>
    %211 = arith.maximumf %209, %210 : vector<16x128xf32>
    %c0_106 = arith.constant 0 : index
    %c0_107 = arith.constant 0 : index
    %c0_108 = arith.constant 0 : index
    %212 = vector.load %arg18[%c0_106, %c0_107, %c0_108] : memref<1x16x128xf32, #tpu.memory_space<vmem>>, vector<1x16x128xf32>
    %213 = vector.shape_cast %212 : vector<1x16x128xf32> to vector<16x128xf32>
    %214 = vector.shape_cast %211 : vector<16x128xf32> to vector<1x16x128xf32>
    tpu.vector_store %arg18[%c0_106, %c0_107, %c0_108], %214 {strides = array<i32>} : memref<1x16x128xf32, #tpu.memory_space<vmem>>, vector<1x16x128xf32>,
    return
  }
  func.func @transform_1(%arg0: i32, %arg1: i32) -> (i32, i32) {
    %c0_i32 = arith.constant 0 : i32
    %c0_i32_0 = arith.constant 0 : i32
    %c0_i32_1 = arith.constant 0 : i32
    return %c0_i32, %c0_i32_0 : i32, i32
  }
  func.func @transform_2(%arg0: i32, %arg1: i32) -> (i32, i32) {
    %c0_i32 = arith.constant 0 : i32
    %c0_i32_0 = arith.constant 0 : i32
    %c0_i32_1 = arith.constant 0 : i32
    return %c0_i32, %c0_i32_0 : i32, i32
  }
  func.func @transform_3(%arg0: i32, %arg1: i32) -> (i32, i32, i32) {
    %c0_i32 = arith.constant 0 : i32
    %c0_i32_0 = arith.constant 0 : i32
    %c0_i32_1 = arith.constant 0 : i32
    %c0_i32_2 = arith.constant 0 : i32
    return %c0_i32, %c0_i32_0, %c0_i32_1 : i32, i32, i32
  }
  func.func @transform_4(%arg0: i32, %arg1: i32) -> (i32, i32) {
    %c0_i32 = arith.constant 0 : i32
    %c0_i32_0 = arith.constant 0 : i32
    %c0_i32_1 = arith.constant 0 : i32
    return %c0_i32, %c0_i32_0 : i32, i32
  }
  func.func @transform_5(%arg0: i32, %arg1: i32) -> (i32, i32, i32) {
    %c0_i32 = arith.constant 0 : i32
    %c0_i32_0 = arith.constant 0 : i32
    %c0_i32_1 = arith.constant 0 : i32
    %c0_i32_2 = arith.constant 0 : i32
    return %c0_i32, %c0_i32_0, %c0_i32_1 : i32, i32, i32
  }
  func.func @transform_6(%arg0: i32, %arg1: i32) -> (i32, i32) {
    %c0_i32 = arith.constant 0 : i32
    %c0_i32_0 = arith.constant 0 : i32
    %c0_i32_1 = arith.constant 0 : i32
    return %c0_i32, %c0_i32_0 : i32, i32
  }
  func.func @transform_7(%arg0: i32, %arg1: i32) -> (i32, i32, i32) {
    %c0_i32 = arith.constant 0 : i32
    %c0_i32_0 = arith.constant 0 : i32
    %c0_i32_1 = arith.constant 0 : i32
    %c0_i32_2 = arith.constant 0 : i32
    return %c0_i32, %c0_i32_0, %c0_i32_1 : i32, i32, i32
  }
  func.func @transform_8(%arg0: i32, %arg1: i32) -> (i32, i32) {
    %c0_i32 = arith.constant 0 : i32
    %c0_i32_0 = arith.constant 0 : i32
    %c0_i32_1 = arith.constant 0 : i32
    return %c0_i32, %c0_i32_0 : i32, i32
  }
  func.func @transform_9(%arg0: i32, %arg1: i32) -> (i32, i32, i32) {
    %c0_i32 = arith.constant 0 : i32
    %c0_i32_0 = arith.constant 0 : i32
    %c0_i32_1 = arith.constant 0 : i32
    %c0_i32_2 = arith.constant 0 : i32
    return %c0_i32, %c0_i32_0, %c0_i32_1 : i32, i32, i32
  }
  func.func @transform_10(%arg0: i32, %arg1: i32) -> (i32, i32) {
    %c0_i32 = arith.constant 0 : i32
    %c0_i32_0 = arith.constant 0 : i32
    %c0_i32_1 = arith.constant 0 : i32
    return %c0_i32, %c0_i32_0 : i32, i32
  }
  func.func @transform_11(%arg0: i32, %arg1: i32) -> (i32, i32) {
    %c0_i32 = arith.constant 0 : i32
    %c0_i32_0 = arith.constant 0 : i32
    %c0_i32_1 = arith.constant 0 : i32
    return %c0_i32, %c0_i32_0 : i32, i32
  }
  func.func @transform_12(%arg0: i32, %arg1: i32) -> (i32, i32) {
    %c0_i32 = arith.constant 0 : i32
    %c0_i32_0 = arith.constant 0 : i32
    %c0_i32_1 = arith.constant 0 : i32
    return %c0_i32, %c0_i32_0 : i32, i32
  }
  func.func @transform_13(%arg0: i32, %arg1: i32) -> (i32, i32, i32) {
    %c0_i32 = arith.constant 0 : i32
    %c0_i32_0 = arith.constant 0 : i32
    %c0_i32_1 = arith.constant 0 : i32
    %c0_i32_2 = arith.constant 0 : i32
    return %c0_i32, %c0_i32_0, %c0_i32_1 : i32, i32, i32
  }
  func.func @transform_14(%arg0: i32, %arg1: i32) -> (i32, i32, i32) {
    %c0_i32 = arith.constant 0 : i32
    %c0_i32_0 = arith.constant 0 : i32
    %c0_i32_1 = arith.constant 0 : i32
    %c0_i32_2 = arith.constant 0 : i32
    return %c0_i32, %c0_i32_0, %c0_i32_1 : i32, i32, i32
  }
  func.func @transform_15(%arg0: i32, %arg1: i32) -> (i32, i32) {
    %c0_i32 = arith.constant 0 : i32
    %c0_i32_0 = arith.constant 0 : i32
    %c0_i32_1 = arith.constant 0 : i32
    return %c0_i32, %c0_i32_0 : i32, i32
  }
  func.func @transform_16(%arg0: i32, %arg1: i32) -> (i32, i32, i32) {
    %c0_i32 = arith.constant 0 : i32
    %c0_i32_0 = arith.constant 0 : i32
    return %arg0, %arg1, %c0_i32 : i32, i32, i32
  }
}

</mosaic_0001>

<llo_original>
// kernel: tpu_custom_call.1
$region0: #{tpu_custom_call.1}
  #allocation0 [shape = 'u32[]', space=smem, size = 0x4, offset = 0x4, fixed_abs, tag = 'smem constant byte address 0x4 - core index']
  #allocation1 [shape = 'u32[144,128]{1,0:T(1,128)}', space=vmem, size = 0x12000, scoped, tag = 'internal scratch']
  #allocation2 [shape = 'bf16[2,32,128]{2,1,0:T(16,128)(2,1)}', space=vmem, size = 0x4000, scoped, tag = 'scratch operand']
  #allocation3 [shape = 's32[2]{0}', space=sflag, size = 0x8, scoped, tag = 'scratch operand']
  #allocation19 [shape = 's32[]', space=sflag, size = 0x4, offset = 0, fixed_abs, tag = 'sflag constant byte address 0x0 - dummy sync flag']
  #allocation20 [shape = 's32[]', space=sflag, size = 0x4, offset = 0, fixed_abs, tag = 'sflag constant byte address 0x0 - dummy sync flag']
  #allocation21 [shape = 'u32[]', space=smem, size = 0x4, offset = 0x44, fixed_abs, tag = 'smem constant byte address 0x44 - assertion arg 0']
  #allocation22 [shape = 'u32[]', space=smem, size = 0x4, offset = 0x48, fixed_abs, tag = 'smem constant byte address 0x48 - assertion arg 1']
  #allocation23 [shape = 's32[]', space=sflag, size = 0x4, offset = 0, fixed_abs, tag = 'sflag constant byte address 0x0 - dummy sync flag']
  #allocation24 [shape = 's32[]', space=sflag, size = 0x4, offset = 0, fixed_abs, tag = 'sflag constant byte address 0x0 - dummy sync flag']
  %s0 = inlined_call_operand.hbm [shape: bf16[2,32,128], index: 0, kind: input, shape index: {}]
  %s1 = inlined_call_operand.hbm [shape: bf16[128,256], index: 1, kind: input, shape index: {}]
  %s2 = inlined_call_operand.vmem [shape: f32[2,256], index: 2, kind: input, shape index: {}]
  %s3 = inlined_call_operand.hbm [shape: bf16[3,128,128], index: 3, kind: input, shape index: {}]
  %s4 = inlined_call_operand.vmem [shape: f32[2,128], index: 4, kind: input, shape index: {}]
  %s5 = inlined_call_operand.hbm [shape: bf16[3,128,128], index: 5, kind: input, shape index: {}]
  %s6 = inlined_call_operand.vmem [shape: f32[2,128], index: 6, kind: input, shape index: {}]
  %s7 = inlined_call_operand.hbm [shape: bf16[3,128,128], index: 7, kind: input, shape index: {}]
  %s8 = inlined_call_operand.vmem [shape: f32[2,128], index: 8, kind: input, shape index: {}]
  %s9 = inlined_call_operand.hbm [shape: bf16[3,128,128], index: 9, kind: input, shape index: {}]
  %s10 = inlined_call_operand.vmem [shape: f32[2,128], index: 10, kind: input, shape index: {}]
  %s11 = inlined_call_operand.hbm [shape: bf16[128,128], index: 11, kind: input, shape index: {}]
  %s12 = inlined_call_operand.vmem [shape: f32[2,128], index: 12, kind: input, shape index: {}]
  %s13 = inlined_call_operand.hbm [shape: bf16[3,128,128], index: 13, kind: input, shape index: {}]
  %s14 = inlined_call_operand.hbm [shape: bf16[3,128,128], index: 14, kind: input, shape index: {}]
  %s15 = inlined_call_operand.vmem [shape: f32[2,128], index: 15, kind: input, shape index: {}]
  %s16 = inlined_call_operand.hbm [shape: f32[2,16,128], index: 16, kind: output, shape index: {}]
  %s17 = sld [smem:[#allocation0]]
  $region141: #{tpu_custom_call.1} parent=0
    _
  %s19 = ssub.s32 1, %s17
  %s20 = scalar_select 0, %s19, %s17
  $region1: #{tpu_custom_call.1} parent=0
    #allocation4 [shape = 'u8[65536]{0}', space=vmem, size = 0x10000, scoped, tag = 'input window, operand 1, single buffered']
    #allocation5 [shape = 's32[2]{0}', space=sflag, size = 0x8, scoped, tag = 'scoped memory for tpu_custom_call.1']
    #allocation6 [shape = 's32[2]{0}', space=sflag, size = 0x8, scoped, tag = 'scoped memory for tpu_custom_call.1']
    #allocation7 [shape = 'u8[98304]{0}', space=vmem, size = 0x18000, scoped, tag = 'input window, operand 3, single buffered']
    #allocation8 [shape = 's32[1]{0}', space=sflag, size = 0x4, scoped, tag = 'scoped memory for tpu_custom_call.1']
    #allocation9 [shape = 'u8[98304]{0}', space=vmem, size = 0x18000, scoped, tag = 'input window, operand 5, single buffered']
    #allocation10 [shape = 'u8[98304]{0}', space=vmem, size = 0x18000, scoped, tag = 'input window, operand 7, single buffered']
    #allocation11 [shape = 's32[1]{0}', space=sflag, size = 0x4, scoped, tag = 'scoped memory for tpu_custom_call.1']
    #allocation12 [shape = 'u8[98304]{0}', space=vmem, size = 0x18000, scoped, tag = 'input window, operand 9, single buffered']
    #allocation13 [shape = 'u8[32768]{0}', space=vmem, size = 0x8000, scoped, tag = 'input window, operand 11, single buffered']
    #allocation14 [shape = 's32[1]{0}', space=sflag, size = 0x4, scoped, tag = 'scoped memory for tpu_custom_call.1']
    #allocation15 [shape = 'u8[98304]{0}', space=vmem, size = 0x18000, scoped, tag = 'input window, operand 13, single buffered']
    #allocation16 [shape = 'u8[98304]{0}', space=vmem, size = 0x18000, scoped, tag = 'input window, operand 14, single buffered']
    #allocation17 [shape = 's32[1]{0}', space=sflag, size = 0x4, scoped, tag = 'scoped memory for tpu_custom_call.1']
    #allocation18 [shape = 'u8[16384]{0}', space=vmem, size = 0x4000, scoped, tag = 'output window, operand 0']
    %21 = vsyncpa [#allocation5], 0
    %22 = vsyncpa [#allocation8], 0
    %23 = vsyncpa [#allocation11], 0
    %24 = vsyncpa [#allocation14], 0
    %25 = vsyncpa [#allocation17], 0
    %26 = vsyncpa [#allocation6], 0
    %s27 = scalar_lea.sflag [#allocation6], 1
    %28 = vsyncpa %s27, 0
    loop: start=0, step=1, limit=4
    $region2: #{tpu_custom_call.1} parent=1 // loop_pre_header
      _
    $region3: #{tpu_custom_call.1} parent=1 // loop_header
      %s30 = sphi 0, %s34
      %p31 = scmp.ge.s32.totalorder %s30, 4
      %s37 = sphi 0, %s49
      %s38 = sphi 0, %s45
      %s39 = sphi 0, %s37
      %s40 = sphi 0, %s38
      %s41 = sphi 0, %s39
      %s42 = sphi 0, %s40
      %s50 = sphi 0, %s50
      %s52 = sphi 0, %s50
      %s53 = sphi 0, %s52
      %s67 = sphi 0, %s53
      %s71 = sphi 0, %s71
      %s73 = sphi 0, %s71
      %s74 = sphi 0, %s73
      %s88 = sphi 0, %s74
      %s92 = sphi 0, %s92
      %s94 = sphi 0, %s92
      %s95 = sphi 0, %s94
      %s109 = sphi 0, %s95
      %s113 = sphi 0, %s113
      %s115 = sphi 0, %s113
      %s116 = sphi 0, %s115
      %s130 = sphi 0, %s116
      %s134 = sphi 0, %s134
      %s136 = sphi 0, %s134
      %s137 = sphi 0, %s136
      %s151 = sphi 0, %s137
      %s155 = sphi 0, %s155
      %s157 = sphi 0, %s155
      %s158 = sphi 0, %s157
      %s172 = sphi 0, %s158
      %s176 = sphi 0, %s176
      %s178 = sphi 0, %s176
      %s179 = sphi 0, %s178
      %s193 = sphi 0, %s179
      %s197 = sphi 0, %s197
      %s199 = sphi 0, %s197
      %s200 = sphi 0, %s199
      %s214 = sphi 0, %s200
      %s218 = sphi 0, %s218
      %s220 = sphi 0, %s218
      %s221 = sphi 0, %s220
      %s235 = sphi 0, %s221
      %s239 = sphi 0, %s239
      %s241 = sphi 0, %s239
      %s242 = sphi 0, %s241
      %s256 = sphi 0, %s242
      %s260 = sphi 0, %s260
      %s262 = sphi 0, %s260
      %s263 = sphi 0, %s262
      %s277 = sphi 0, %s263
      %s281 = sphi 0, %s281
      %s283 = sphi 0, %s281
      %s284 = sphi 0, %s283
      %s298 = sphi 0, %s284
      %s302 = sphi 0, %s302
      %s304 = sphi 0, %s302
      %s305 = sphi 0, %s304
      %s319 = sphi 0, %s305
      %s323 = sphi 0, %s323
      %s325 = sphi 0, %s323
      %s326 = sphi 0, %s325
      %s340 = sphi 0, %s326
      %s344 = sphi 0, %s344
      %s346 = sphi 0, %s344
      %s347 = sphi 0, %s346
      %s361 = sphi 0, %s347
      %s369 = sphi 0, %s371
      %s372 = sphi 0, %s369
      %s373 = sphi 0, %s372
      %s389 = sphi 0, %s373
    $region4: #{tpu_custom_call.1} parent=1 // loop_header_branch
      %33 = sbr.rel (%p31) target = $region8
    $region5: #{tpu_custom_call.1} parent=1 // loop_body
      %s35 = ssub.s32 %s30, 1
      %s36 = ssub.s32 %s30, 2
      %s43 = sadd.s32 1, %s38
      %p44 = scmp.ge.s32.totalorder %s43, 1
      %s45 = scalar_select %p44, 0, %s43
      %s46 = sadd.s32 1, %s37
      %s47 = scalar_select %p44, %s46, %s37
      %p48 = scmp.ge.s32.totalorder %s47, 2
      %s49 = scalar_select %p48, 0, %s47
      %s51 = sadd.s32 %s50, 1
      %p54 = scmp.eq.s32.totalorder %s30, 1
      %p55 = scmp.ne.s32.totalorder %s50, %s52
      %p56 = scmp.eq.s32.totalorder %s30, 0
      %p57 = por %p55, %p56
      %p58 = scmp.ne.s32.totalorder %s50, %s52
      %p59 = scmp.eq.s32.totalorder %s35, 1
      %p60 = por %p58, %p59
      %p61 = scmp.ne.s32.totalorder %s52, %s53
      %p62 = scmp.eq.s32.totalorder %s35, 0
      %p63 = por %p61, %p62
      %p64 = scmp.ne.s32.totalorder %s52, %s53
      %p65 = scmp.eq.s32.totalorder %s36, 1
      %p66 = por %p64, %p65
      %p68 = scmp.ne.s32.totalorder %s53, %s67
      %p69 = scmp.eq.s32.totalorder %s36, 0
      %p70 = por %p68, %p69
      %s72 = sadd.s32 %s71, 1
      %p75 = scmp.eq.s32.totalorder %s30, 1
      %p76 = scmp.ne.s32.totalorder %s71, %s73
      %p77 = scmp.eq.s32.totalorder %s30, 0
      %p78 = por %p76, %p77
      %p79 = scmp.ne.s32.totalorder %s71, %s73
      %p80 = scmp.eq.s32.totalorder %s35, 1
      %p81 = por %p79, %p80
      %p82 = scmp.ne.s32.totalorder %s73, %s74
      %p83 = scmp.eq.s32.totalorder %s35, 0
      %p84 = por %p82, %p83
      %p85 = scmp.ne.s32.totalorder %s73, %s74
      %p86 = scmp.eq.s32.totalorder %s36, 1
      %p87 = por %p85, %p86
      %p89 = scmp.ne.s32.totalorder %s74, %s88
      %p90 = scmp.eq.s32.totalorder %s36, 0
      %p91 = por %p89, %p90
      %s93 = sadd.s32 %s92, 1
      %p96 = scmp.eq.s32.totalorder %s30, 1
      %p97 = scmp.ne.s32.totalorder %s92, %s94
      %p98 = scmp.eq.s32.totalorder %s30, 0
      %p99 = por %p97, %p98
      %p100 = scmp.ne.s32.totalorder %s92, %s94
      %p101 = scmp.eq.s32.totalorder %s35, 1
      %p102 = por %p100, %p101
      %p103 = scmp.ne.s32.totalorder %s94, %s95
      %p104 = scmp.eq.s32.totalorder %s35, 0
      %p105 = por %p103, %p104
      %p106 = scmp.ne.s32.totalorder %s94, %s95
      %p107 = scmp.eq.s32.totalorder %s36, 1
      %p108 = por %p106, %p107
      %p110 = scmp.ne.s32.totalorder %s95, %s109
      %p111 = scmp.eq.s32.totalorder %s36, 0
      %p112 = por %p110, %p111
      %s114 = sadd.s32 %s113, 1
      %p117 = scmp.eq.s32.totalorder %s30, 1
      %p118 = scmp.ne.s32.totalorder %s113, %s115
      %p119 = scmp.eq.s32.totalorder %s30, 0
      %p120 = por %p118, %p119
      %p121 = scmp.ne.s32.totalorder %s113, %s115
      %p122 = scmp.eq.s32.totalorder %s35, 1
      %p123 = por %p121, %p122
      %p124 = scmp.ne.s32.totalorder %s115, %s116
      %p125 = scmp.eq.s32.totalorder %s35, 0
      %p126 = por %p124, %p125
      %p127 = scmp.ne.s32.totalorder %s115, %s116
      %p128 = scmp.eq.s32.totalorder %s36, 1
      %p129 = por %p127, %p128
      %p131 = scmp.ne.s32.totalorder %s116, %s130
      %p132 = scmp.eq.s32.totalorder %s36, 0
      %p133 = por %p131, %p132
      %s135 = sadd.s32 %s134, 1
      %p138 = scmp.eq.s32.totalorder %s30, 1
      %p139 = scmp.ne.s32.totalorder %s134, %s136
      %p140 = scmp.eq.s32.totalorder %s30, 0
      %p141 = por %p139, %p140
      %p142 = scmp.ne.s32.totalorder %s134, %s136
      %p143 = scmp.eq.s32.totalorder %s35, 1
      %p144 = por %p142, %p143
      %p145 = scmp.ne.s32.totalorder %s136, %s137
      %p146 = scmp.eq.s32.totalorder %s35, 0
      %p147 = por %p145, %p146
      %p148 = scmp.ne.s32.totalorder %s136, %s137
      %p149 = scmp.eq.s32.totalorder %s36, 1
      %p150 = por %p148, %p149
      %p152 = scmp.ne.s32.totalorder %s137, %s151
      %p153 = scmp.eq.s32.totalorder %s36, 0
      %p154 = por %p152, %p153
      %s156 = sadd.s32 %s155, 1
      %p159 = scmp.eq.s32.totalorder %s30, 1
      %p160 = scmp.ne.s32.totalorder %s155, %s157
      %p161 = scmp.eq.s32.totalorder %s30, 0
      %p162 = por %p160, %p161
      %p163 = scmp.ne.s32.totalorder %s155, %s157
      %p164 = scmp.eq.s32.totalorder %s35, 1
      %p165 = por %p163, %p164
      %p166 = scmp.ne.s32.totalorder %s157, %s158
      %p167 = scmp.eq.s32.totalorder %s35, 0
      %p168 = por %p166, %p167
      %p169 = scmp.ne.s32.totalorder %s157, %s158
      %p170 = scmp.eq.s32.totalorder %s36, 1
      %p171 = por %p169, %p170
      %p173 = scmp.ne.s32.totalorder %s158, %s172
      %p174 = scmp.eq.s32.totalorder %s36, 0
      %p175 = por %p173, %p174
      %s177 = sadd.s32 %s176, 1
      %p180 = scmp.eq.s32.totalorder %s30, 1
      %p181 = scmp.ne.s32.totalorder %s176, %s178
      %p182 = scmp.eq.s32.totalorder %s30, 0
      %p183 = por %p181, %p182
      %p184 = scmp.ne.s32.totalorder %s176, %s178
      %p185 = scmp.eq.s32.totalorder %s35, 1
      %p186 = por %p184, %p185
      %p187 = scmp.ne.s32.totalorder %s178, %s179
      %p188 = scmp.eq.s32.totalorder %s35, 0
      %p189 = por %p187, %p188
      %p190 = scmp.ne.s32.totalorder %s178, %s179
      %p191 = scmp.eq.s32.totalorder %s36, 1
      %p192 = por %p190, %p191
      %p194 = scmp.ne.s32.totalorder %s179, %s193
      %p195 = scmp.eq.s32.totalorder %s36, 0
      %p196 = por %p194, %p195
      %s198 = sadd.s32 %s197, 1
      %p201 = scmp.eq.s32.totalorder %s30, 1
      %p202 = scmp.ne.s32.totalorder %s197, %s199
      %p203 = scmp.eq.s32.totalorder %s30, 0
      %p204 = por %p202, %p203
      %p205 = scmp.ne.s32.totalorder %s197, %s199
      %p206 = scmp.eq.s32.totalorder %s35, 1
      %p207 = por %p205, %p206
      %p208 = scmp.ne.s32.totalorder %s199, %s200
      %p209 = scmp.eq.s32.totalorder %s35, 0
      %p210 = por %p208, %p209
      %p211 = scmp.ne.s32.totalorder %s199, %s200
      %p212 = scmp.eq.s32.totalorder %s36, 1
      %p213 = por %p211, %p212
      %p215 = scmp.ne.s32.totalorder %s200, %s214
      %p216 = scmp.eq.s32.totalorder %s36, 0
      %p217 = por %p215, %p216
      %s219 = sadd.s32 %s218, 1
      %p222 = scmp.eq.s32.totalorder %s30, 1
      %p223 = scmp.ne.s32.totalorder %s218, %s220
      %p224 = scmp.eq.s32.totalorder %s30, 0
      %p225 = por %p223, %p224
      %p226 = scmp.ne.s32.totalorder %s218, %s220
      %p227 = scmp.eq.s32.totalorder %s35, 1
      %p228 = por %p226, %p227
      %p229 = scmp.ne.s32.totalorder %s220, %s221
      %p230 = scmp.eq.s32.totalorder %s35, 0
      %p231 = por %p229, %p230
      %p232 = scmp.ne.s32.totalorder %s220, %s221
      %p233 = scmp.eq.s32.totalorder %s36, 1
      %p234 = por %p232, %p233
      %p236 = scmp.ne.s32.totalorder %s221, %s235
      %p237 = scmp.eq.s32.totalorder %s36, 0
      %p238 = por %p236, %p237
      %s240 = sadd.s32 %s239, 1
      %p243 = scmp.eq.s32.totalorder %s30, 1
      %p244 = scmp.ne.s32.totalorder %s239, %s241
      %p245 = scmp.eq.s32.totalorder %s30, 0
      %p246 = por %p244, %p245
      %p247 = scmp.ne.s32.totalorder %s239, %s241
      %p248 = scmp.eq.s32.totalorder %s35, 1
      %p249 = por %p247, %p248
      %p250 = scmp.ne.s32.totalorder %s241, %s242
      %p251 = scmp.eq.s32.totalorder %s35, 0
      %p252 = por %p250, %p251
      %p253 = scmp.ne.s32.totalorder %s241, %s242
      %p254 = scmp.eq.s32.totalorder %s36, 1
      %p255 = por %p253, %p254
      %p257 = scmp.ne.s32.totalorder %s242, %s256
      %p258 = scmp.eq.s32.totalorder %s36, 0
      %p259 = por %p257, %p258
      %s261 = sadd.s32 %s260, 1
      %p264 = scmp.eq.s32.totalorder %s30, 1
      %p265 = scmp.ne.s32.totalorder %s260, %s262
      %p266 = scmp.eq.s32.totalorder %s30, 0
      %p267 = por %p265, %p266
      %p268 = scmp.ne.s32.totalorder %s260, %s262
      %p269 = scmp.eq.s32.totalorder %s35, 1
      %p270 = por %p268, %p269
      %p271 = scmp.ne.s32.totalorder %s262, %s263
      %p272 = scmp.eq.s32.totalorder %s35, 0
      %p273 = por %p271, %p272
      %p274 = scmp.ne.s32.totalorder %s262, %s263
      %p275 = scmp.eq.s32.totalorder %s36, 1
      %p276 = por %p274, %p275
      %p278 = scmp.ne.s32.totalorder %s263, %s277
      %p279 = scmp.eq.s32.totalorder %s36, 0
      %p280 = por %p278, %p279
      %s282 = sadd.s32 %s281, 1
      %p285 = scmp.eq.s32.totalorder %s30, 1
      %p286 = scmp.ne.s32.totalorder %s281, %s283
      %p287 = scmp.eq.s32.totalorder %s30, 0
      %p288 = por %p286, %p287
      %p289 = scmp.ne.s32.totalorder %s281, %s283
      %p290 = scmp.eq.s32.totalorder %s35, 1
      %p291 = por %p289, %p290
      %p292 = scmp.ne.s32.totalorder %s283, %s284
      %p293 = scmp.eq.s32.totalorder %s35, 0
      %p294 = por %p292, %p293
      %p295 = scmp.ne.s32.totalorder %s283, %s284
      %p296 = scmp.eq.s32.totalorder %s36, 1
      %p297 = por %p295, %p296
      %p299 = scmp.ne.s32.totalorder %s284, %s298
      %p300 = scmp.eq.s32.totalorder %s36, 0
      %p301 = por %p299, %p300
      %s303 = sadd.s32 %s302, 1
      %p306 = scmp.eq.s32.totalorder %s30, 1
      %p307 = scmp.ne.s32.totalorder %s302, %s304
      %p308 = scmp.eq.s32.totalorder %s30, 0
      %p309 = por %p307, %p308
      %p310 = scmp.ne.s32.totalorder %s302, %s304
      %p311 = scmp.eq.s32.totalorder %s35, 1
      %p312 = por %p310, %p311
      %p313 = scmp.ne.s32.totalorder %s304, %s305
      %p314 = scmp.eq.s32.totalorder %s35, 0
      %p315 = por %p313, %p314
      %p316 = scmp.ne.s32.totalorder %s304, %s305
      %p317 = scmp.eq.s32.totalorder %s36, 1
      %p318 = por %p316, %p317
      %p320 = scmp.ne.s32.totalorder %s305, %s319
      %p321 = scmp.eq.s32.totalorder %s36, 0
      %p322 = por %p320, %p321
      %s324 = sadd.s32 %s323, 1
      %p327 = scmp.eq.s32.totalorder %s30, 1
      %p328 = scmp.ne.s32.totalorder %s323, %s325
      %p329 = scmp.eq.s32.totalorder %s30, 0
      %p330 = por %p328, %p329
      %p331 = scmp.ne.s32.totalorder %s323, %s325
      %p332 = scmp.eq.s32.totalorder %s35, 1
      %p333 = por %p331, %p332
      %p334 = scmp.ne.s32.totalorder %s325, %s326
      %p335 = scmp.eq.s32.totalorder %s35, 0
      %p336 = por %p334, %p335
      %p337 = scmp.ne.s32.totalorder %s325, %s326
      %p338 = scmp.eq.s32.totalorder %s36, 1
      %p339 = por %p337, %p338
      %p341 = scmp.ne.s32.totalorder %s326, %s340
      %p342 = scmp.eq.s32.totalorder %s36, 0
      %p343 = por %p341, %p342
      %s345 = sadd.s32 %s344, 1
      %p348 = scmp.eq.s32.totalorder %s30, 1
      %p349 = scmp.ne.s32.totalorder %s344, %s346
      %p350 = scmp.eq.s32.totalorder %s30, 0
      %p351 = por %p349, %p350
      %p352 = scmp.ne.s32.totalorder %s344, %s346
      %p353 = scmp.eq.s32.totalorder %s35, 1
      %p354 = por %p352, %p353
      %p355 = scmp.ne.s32.totalorder %s346, %s347
      %p356 = scmp.eq.s32.totalorder %s35, 0
      %p357 = por %p355, %p356
      %p358 = scmp.ne.s32.totalorder %s346, %s347
      %p359 = scmp.eq.s32.totalorder %s36, 1
      %p360 = por %p358, %p359
      %p362 = scmp.ne.s32.totalorder %s347, %s361
      %p363 = scmp.eq.s32.totalorder %s36, 0
      %p364 = por %p362, %p363
      %s365 = ssub.s32 %s37, %s49
      %s366 = ssub.s32 %s38, %s45
      %s367 = sor.u32 %s365, %s366
      %p368 = scmp.eq.s32.totalorder %s367, 0
      %s370 = sadd.s32 %s369, 1
      %s371 = scalar_select %p368, %s369, %s370
      %p374 = pneg %p368
      %p375 = scmp.eq.s32.totalorder %s30, 1
      %p376 = por %p374, %p375
      %p377 = scmp.ne.s32.totalorder %s369, %s372
      %p378 = scmp.eq.s32.totalorder %s30, 0
      %p379 = por %p377, %p378
      %p380 = scmp.ne.s32.totalorder %s369, %s372
      %p381 = scmp.eq.s32.totalorder %s35, 1
      %p382 = por %p380, %p381
      %p383 = scmp.ne.s32.totalorder %s372, %s373
      %p384 = scmp.eq.s32.totalorder %s35, 0
      %p385 = por %p383, %p384
      %p386 = scmp.ne.s32.totalorder %s372, %s373
      %p387 = scmp.eq.s32.totalorder %s36, 1
      %p388 = por %p386, %p387
      %p390 = scmp.ne.s32.totalorder %s373, %s389
      %p391 = scmp.eq.s32.totalorder %s36, 0
      %p392 = por %p390, %p391
      %p393 = scmp.le.s32.totalorder 1, %s30
      %p394 = scmp.lt.s32.totalorder %s30, 3
      %p395 = pnand %p393, %p394
      %p396 = pneg %p395
      // Predicated region
      $region9: #{tpu_custom_call.1} parent=5 // pred_check
        _
      $region10: #{tpu_custom_call.1} parent=5 // pred_check_branch
        %398 = sbr.rel (%p395) target = $region12
      $region11: #{tpu_custom_call.1} parent=5 // pred_region
        %s399 = ssub.s32 %s30, 1
        // Predicated region
        $region13: #{tpu_custom_call.1} parent=11 // pred_check
          %p400 = pneg %p63
        $region14: #{tpu_custom_call.1} parent=11 // pred_check_branch
          %402 = sbr.rel (%p400) target = $region16
        $region15: #{tpu_custom_call.1} parent=11 // pred_region
          %s404 = ssub.s32 2048, 2048
          %405 = vsyncadd [#allocation5], %s404
          %s406 = sshll.u32 [#allocation4], 4
          %s407 = int_to_ptr.vmem [resolvable:$true] %s406
          %412 = dma.hbm_to_vmem [thread:$0]  %s1, 2048, %s407, [#allocation5], 128, 128, 8
        $region16: #{tpu_custom_call.1} parent=11 // pred_fallthru
          _
        // Predicated region
        $region17: #{tpu_custom_call.1} parent=11 // pred_check
          %p413 = pneg %p84
        $region18: #{tpu_custom_call.1} parent=11 // pred_check_branch
          %415 = sbr.rel (%p413) target = $region20
        $region19: #{tpu_custom_call.1} parent=11 // pred_region
          _
        $region20: #{tpu_custom_call.1} parent=11 // pred_fallthru
          _
        // Predicated region
        $region21: #{tpu_custom_call.1} parent=11 // pred_check
          %p416 = pneg %p105
        $region22: #{tpu_custom_call.1} parent=11 // pred_check_branch
          %418 = sbr.rel (%p416) target = $region24
        $region23: #{tpu_custom_call.1} parent=11 // pred_region
          %s420 = ssub.s32 3072, 3072
          %421 = vsyncadd [#allocation8], %s420
          %s422 = sshll.u32 [#allocation7], 4
          %s423 = int_to_ptr.vmem [resolvable:$true] %s422
          %428 = dma.hbm_to_vmem [thread:$0]  %s3, 3072, %s423, [#allocation8], 64, 64, 4
        $region24: #{tpu_custom_call.1} parent=11 // pred_fallthru
          _
        // Predicated region
        $region25: #{tpu_custom_call.1} parent=11 // pred_check
          %p429 = pneg %p126
        $region26: #{tpu_custom_call.1} parent=11 // pred_check_branch
          %431 = sbr.rel (%p429) target = $region28
        $region27: #{tpu_custom_call.1} parent=11 // pred_region
          _
        $region28: #{tpu_custom_call.1} parent=11 // pred_fallthru
          _
        // Predicated region
        $region29: #{tpu_custom_call.1} parent=11 // pred_check
          %p432 = pneg %p147
        $region30: #{tpu_custom_call.1} parent=11 // pred_check_branch
          %434 = sbr.rel (%p432) target = $region32
        $region31: #{tpu_custom_call.1} parent=11 // pred_region
          %s436 = ssub.s32 3072, 3072
          %437 = vsyncadd [#allocation8], %s436
          %s438 = sshll.u32 [#allocation9], 4
          %s439 = int_to_ptr.vmem [resolvable:$true] %s438
          %444 = dma.hbm_to_vmem [thread:$0]  %s5, 3072, %s439, [#allocation8], 64, 64, 4
        $region32: #{tpu_custom_call.1} parent=11 // pred_fallthru
          _
        // Predicated region
        $region33: #{tpu_custom_call.1} parent=11 // pred_check
          %p445 = pneg %p168
        $region34: #{tpu_custom_call.1} parent=11 // pred_check_branch
          %447 = sbr.rel (%p445) target = $region36
        $region35: #{tpu_custom_call.1} parent=11 // pred_region
          _
        $region36: #{tpu_custom_call.1} parent=11 // pred_fallthru
          _
        // Predicated region
        $region37: #{tpu_custom_call.1} parent=11 // pred_check
          %p448 = pneg %p189
        $region38: #{tpu_custom_call.1} parent=11 // pred_check_branch
          %450 = sbr.rel (%p448) target = $region40
        $region39: #{tpu_custom_call.1} parent=11 // pred_region
          %s452 = ssub.s32 3072, 3072
          %453 = vsyncadd [#allocation11], %s452
          %s454 = sshll.u32 [#allocation10], 4
          %s455 = int_to_ptr.vmem [resolvable:$true] %s454
          %460 = dma.hbm_to_vmem [thread:$0]  %s7, 3072, %s455, [#allocation11], 64, 64, 4
        $region40: #{tpu_custom_call.1} parent=11 // pred_fallthru
          _
        // Predicated region
        $region41: #{tpu_custom_call.1} parent=11 // pred_check
          %p461 = pneg %p210
        $region42: #{tpu_custom_call.1} parent=11 // pred_check_branch
          %463 = sbr.rel (%p461) target = $region44
        $region43: #{tpu_custom_call.1} parent=11 // pred_region
          _
        $region44: #{tpu_custom_call.1} parent=11 // pred_fallthru
          _
        // Predicated region
        $region45: #{tpu_custom_call.1} parent=11 // pred_check
          %p464 = pneg %p231
        $region46: #{tpu_custom_call.1} parent=11 // pred_check_branch
          %466 = sbr.rel (%p464) target = $region48
        $region47: #{tpu_custom_call.1} parent=11 // pred_region
          %s468 = ssub.s32 3072, 3072
          %469 = vsyncadd [#allocation11], %s468
          %s470 = sshll.u32 [#allocation12], 4
          %s471 = int_to_ptr.vmem [resolvable:$true] %s470
          %476 = dma.hbm_to_vmem [thread:$0]  %s9, 3072, %s471, [#allocation11], 64, 64, 4
        $region48: #{tpu_custom_call.1} parent=11 // pred_fallthru
          _
        // Predicated region
        $region49: #{tpu_custom_call.1} parent=11 // pred_check
          %p477 = pneg %p252
        $region50: #{tpu_custom_call.1} parent=11 // pred_check_branch
          %479 = sbr.rel (%p477) target = $region52
        $region51: #{tpu_custom_call.1} parent=11 // pred_region
          _
        $region52: #{tpu_custom_call.1} parent=11 // pred_fallthru
          _
        // Predicated region
        $region53: #{tpu_custom_call.1} parent=11 // pred_check
          %p480 = pneg %p273
        $region54: #{tpu_custom_call.1} parent=11 // pred_check_branch
          %482 = sbr.rel (%p480) target = $region56
        $region55: #{tpu_custom_call.1} parent=11 // pred_region
          %s484 = ssub.s32 1024, 1024
          %485 = vsyncadd [#allocation14], %s484
          %s486 = sshll.u32 [#allocation13], 4
          %s487 = int_to_ptr.vmem [resolvable:$true] %s486
          %492 = dma.hbm_to_vmem [thread:$0]  %s11, 1024, %s487, [#allocation14], 64, 64, 4
        $region56: #{tpu_custom_call.1} parent=11 // pred_fallthru
          _
        // Predicated region
        $region57: #{tpu_custom_call.1} parent=11 // pred_check
          %p493 = pneg %p294
        $region58: #{tpu_custom_call.1} parent=11 // pred_check_branch
          %495 = sbr.rel (%p493) target = $region60
        $region59: #{tpu_custom_call.1} parent=11 // pred_region
          _
        $region60: #{tpu_custom_call.1} parent=11 // pred_fallthru
          _
        // Predicated region
        $region61: #{tpu_custom_call.1} parent=11 // pred_check
          %p496 = pneg %p315
        $region62: #{tpu_custom_call.1} parent=11 // pred_check_branch
          %498 = sbr.rel (%p496) target = $region64
        $region63: #{tpu_custom_call.1} parent=11 // pred_region
          %s500 = ssub.s32 3072, 3072
          %501 = vsyncadd [#allocation14], %s500
          %s502 = sshll.u32 [#allocation15], 4
          %s503 = int_to_ptr.vmem [resolvable:$true] %s502
          %508 = dma.hbm_to_vmem [thread:$0]  %s13, 3072, %s503, [#allocation14], 64, 64, 4
        $region64: #{tpu_custom_call.1} parent=11 // pred_fallthru
          _
        // Predicated region
        $region65: #{tpu_custom_call.1} parent=11 // pred_check
          %p509 = pneg %p336
        $region66: #{tpu_custom_call.1} parent=11 // pred_check_branch
          %511 = sbr.rel (%p509) target = $region68
        $region67: #{tpu_custom_call.1} parent=11 // pred_region
          %s513 = ssub.s32 3072, 3072
          %514 = vsyncadd [#allocation17], %s513
          %s515 = sshll.u32 [#allocation16], 4
          %s516 = int_to_ptr.vmem [resolvable:$true] %s515
          %521 = dma.hbm_to_vmem [thread:$0]  %s14, 3072, %s516, [#allocation17], 64, 64, 4
        $region68: #{tpu_custom_call.1} parent=11 // pred_fallthru
          _
        // Predicated region
        $region69: #{tpu_custom_call.1} parent=11 // pred_check
          %p522 = pneg %p357
        $region70: #{tpu_custom_call.1} parent=11 // pred_check_branch
          %524 = sbr.rel (%p522) target = $region72
        $region71: #{tpu_custom_call.1} parent=11 // pred_region
          _
        $region72: #{tpu_custom_call.1} parent=11 // pred_fallthru
          _
      $region12: #{tpu_custom_call.1} parent=5 // pred_fallthru
        _
      %p525 = scmp.lt.s32.totalorder %s30, 2
      // Predicated region
      $region73: #{tpu_custom_call.1} parent=5 // pred_check
        %p526 = pneg %p525
      $region74: #{tpu_custom_call.1} parent=5 // pred_check_branch
        %528 = sbr.rel (%p526) target = $region76
      $region75: #{tpu_custom_call.1} parent=5 // pred_region
        _
      $region76: #{tpu_custom_call.1} parent=5 // pred_fallthru
        _
      %p529 = scmp.le.s32.totalorder 1, %s30
      %p530 = scmp.lt.s32.totalorder %s30, 3
      %p531 = pnand %p529, %p530
      %p532 = pneg %p531
      // Predicated region
      $region77: #{tpu_custom_call.1} parent=5 // pred_check
        _
      $region78: #{tpu_custom_call.1} parent=5 // pred_check_branch
        %534 = sbr.rel (%p531) target = $region80
      $region79: #{tpu_custom_call.1} parent=5 // pred_region
        %s535 = ssub.s32 %s30, 1
        // Predicated region
        $region81: #{tpu_custom_call.1} parent=79 // pred_check
          %p536 = pneg %p63
        $region82: #{tpu_custom_call.1} parent=79 // pred_check_branch
          %538 = sbr.rel (%p536) target = $region84
        $region83: #{tpu_custom_call.1} parent=79 // pred_region
          %539 = dma.done [#allocation5], 2048
        $region84: #{tpu_custom_call.1} parent=79 // pred_fallthru
          _
        // Predicated region
        $region85: #{tpu_custom_call.1} parent=79 // pred_check
          %p540 = pneg %p105
        $region86: #{tpu_custom_call.1} parent=79 // pred_check_branch
          %542 = sbr.rel (%p540) target = $region88
        $region87: #{tpu_custom_call.1} parent=79 // pred_region
          %543 = dma.done [#allocation8], 3072
        $region88: #{tpu_custom_call.1} parent=79 // pred_fallthru
          _
        // Predicated region
        $region89: #{tpu_custom_call.1} parent=79 // pred_check
          %p544 = pneg %p147
        $region90: #{tpu_custom_call.1} parent=79 // pred_check_branch
          %546 = sbr.rel (%p544) target = $region92
        $region91: #{tpu_custom_call.1} parent=79 // pred_region
          %547 = dma.done [#allocation8], 3072
        $region92: #{tpu_custom_call.1} parent=79 // pred_fallthru
          _
        // Predicated region
        $region93: #{tpu_custom_call.1} parent=79 // pred_check
          %p548 = pneg %p189
        $region94: #{tpu_custom_call.1} parent=79 // pred_check_branch
          %550 = sbr.rel (%p548) target = $region96
        $region95: #{tpu_custom_call.1} parent=79 // pred_region
          %551 = dma.done [#allocation11], 3072
        $region96: #{tpu_custom_call.1} parent=79 // pred_fallthru
          _
        // Predicated region
        $region97: #{tpu_custom_call.1} parent=79 // pred_check
          %p552 = pneg %p231
        $region98: #{tpu_custom_call.1} parent=79 // pred_check_branch
          %554 = sbr.rel (%p552) target = $region100
        $region99: #{tpu_custom_call.1} parent=79 // pred_region
          %555 = dma.done [#allocation11], 3072
        $region100: #{tpu_custom_call.1} parent=79 // pred_fallthru
          _
        // Predicated region
        $region101: #{tpu_custom_call.1} parent=79 // pred_check
          %p556 = pneg %p273
        $region102: #{tpu_custom_call.1} parent=79 // pred_check_branch
          %558 = sbr.rel (%p556) target = $region104
        $region103: #{tpu_custom_call.1} parent=79 // pred_region
          %559 = dma.done [#allocation14], 1024
        $region104: #{tpu_custom_call.1} parent=79 // pred_fallthru
          _
        // Predicated region
        $region105: #{tpu_custom_call.1} parent=79 // pred_check
          %p560 = pneg %p315
        $region106: #{tpu_custom_call.1} parent=79 // pred_check_branch
          %562 = sbr.rel (%p560) target = $region108
        $region107: #{tpu_custom_call.1} parent=79 // pred_region
          %563 = dma.done [#allocation14], 3072
        $region108: #{tpu_custom_call.1} parent=79 // pred_fallthru
          _
        // Predicated region
        $region109: #{tpu_custom_call.1} parent=79 // pred_check
          %p564 = pneg %p336
        $region110: #{tpu_custom_call.1} parent=79 // pred_check_branch
          %566 = sbr.rel (%p564) target = $region112
        $region111: #{tpu_custom_call.1} parent=79 // pred_region
          %567 = dma.done [#allocation17], 3072
        $region112: #{tpu_custom_call.1} parent=79 // pred_fallthru
          _
        %p568 = pneg %p63
        %p569 = pneg %p60
        %p570 = pneg %p84
        %p571 = pneg %p81
        %p572 = pneg %p105
        %p573 = pneg %p102
        %p574 = pneg %p126
        %p575 = pneg %p123
        %p576 = pneg %p147
        %p577 = pneg %p144
        %p578 = pneg %p168
        %p579 = pneg %p165
        %p580 = pneg %p189
        %p581 = pneg %p186
        %p582 = pneg %p210
        %p583 = pneg %p207
        %p584 = pneg %p231
        %p585 = pneg %p228
        %p586 = pneg %p252
        %p587 = pneg %p249
        %p588 = pneg %p273
        %p589 = pneg %p270
        %p590 = pneg %p294
        %p591 = pneg %p291
        %p592 = pneg %p315
        %p593 = pneg %p312
        %p594 = pneg %p336
        %p595 = pneg %p333
        %p596 = pneg %p357
        %p597 = pneg %p354
        %p598 = pneg %p385
        %p599 = pneg %p382
        %s600 = sand.u32 %s372, 1
        %s601 = scalar_lea.sflag [#allocation6], %s600
        %s602 = sand.u32 %s372, 1
        %s603 = smul.addr %s602, 16
        %s604 = scalar_lea.vmem [#allocation18], %s603
        %s605 = smul.u32 2, %s40
        %p607 = scmp.lt.s32.totalorder %s40, 0
        %s608 = ssub.s32 0, %s40
        %s609 = scalar_select %p607, %s608, %s40
        %s610 = sand.u32 %s609, 1
        %s611 = ssub.s32 0, %s610
        %s612 = scalar_select %p607, %s611, %s610
        %s613 = smul.u32 %s40, 16
        %s614 = ssub.s32 %s613, 5
        %p615 = scmp.eq.s32.totalorder %s40, 0
        // Predicated region
        $region113: #{tpu_custom_call.1} parent=79 // pred_check
          %p616 = pneg %p615
        $region114: #{tpu_custom_call.1} parent=79 // pred_check_branch
          %618 = sbr.rel (%p616) target = $region116
        $region115: #{tpu_custom_call.1} parent=79 // pred_region
          %s619 = smul.u32 %s39, 4
          %s620 = sadd.s32 0, %s619
          %s621 = smul.addr %s620, 64
          %s622 = scalar_lea.hbm %s0, %s621
          // Predicated region
          $region117: #{tpu_custom_call.1} parent=115 // pred_check
            _
          $region118: #{tpu_custom_call.1} parent=115 // pred_check_branch
            %624 = sbr.rel target = $region120
          $region119: #{tpu_custom_call.1} parent=115 // pred_region
            %625 = sst [smem:[#allocation21]] [#allocation20]
            %626 = sst [smem:[#allocation22]] [#allocation19]
          $region120: #{tpu_custom_call.1} parent=115 // pred_fallthru
            _
          %628 = shalt.err (0)
          %s630 = sshll.u32 [#allocation2], 4
          %s631 = int_to_ptr.vmem [resolvable:$true] %s630
          %633 = dma.hbm_to_vmem [thread:$0]  %s622, 256, %s631, [#allocation3]
        $region116: #{tpu_custom_call.1} parent=79 // pred_fallthru
          _
        %s634 = sadd.s32 %s40, 1
        %p635 = scmp.lt.s32.totalorder %s634, 1
        // Predicated region
        $region121: #{tpu_custom_call.1} parent=79 // pred_check
          %p636 = pneg %p635
        $region122: #{tpu_custom_call.1} parent=79 // pred_check_branch
          %638 = sbr.rel (%p636) target = $region124
        $region123: #{tpu_custom_call.1} parent=79 // pred_region
          %s639 = ssub.s32 1, %s612
          %s640 = smul.u32 %s634, 16
          %s641 = sshra.s32 %s640, 3
          %s642 = sand.u32 %s640, 7
          %s643 = smul.u32 %s39, 4
          %s644 = sadd.s32 %s641, %s643
          %s645 = smul.addr %s644, 64
          %s646 = scalar_lea.hbm %s0, %s645
          %s647 = smul.u32 %s639, 2
          %s648 = smul.addr %s647, 8
          %s649 = scalar_lea.vmem [#allocation2], %s648
          %s650 = scalar_lea.sflag [#allocation3], %s639
          // Predicated region
          $region125: #{tpu_custom_call.1} parent=123 // pred_check
            _
          $region126: #{tpu_custom_call.1} parent=123 // pred_check_branch
            %652 = sbr.rel target = $region128
          $region127: #{tpu_custom_call.1} parent=123 // pred_region
            %653 = sst [smem:[#allocation21]] [#allocation24]
            %654 = sst [smem:[#allocation22]] [#allocation23]
          $region128: #{tpu_custom_call.1} parent=123 // pred_fallthru
            _
          %656 = shalt.err (0)
          %s658 = sshll.u32 %s649, 4
          %s659 = int_to_ptr.vmem [resolvable:$true] %s658
          %661 = dma.hbm_to_vmem [thread:$0]  %s646, 256, %s659, %s650
        $region124: #{tpu_custom_call.1} parent=79 // pred_fallthru
          _
        %v662 = vlaneseq
        %v663 = vshrl.u32 %v662, 7
        %v664 = vadd.s32 %v663, 8
        %v665 = vadd.s32 %v663, 16
        %v666 = vadd.s32 %v663, 24
        %v667 = vstv %s614
        %v668 = vadd.s32 %v667, %v663
        %v669 = vadd.s32 %v667, %v664
        %v670 = vadd.s32 %v667, %v665
        %v671 = vadd.s32 %v667, %v666
        %vm672 = vcmp.ge.s32.totalorder %v668, 0
        %vm673 = vcmp.ge.s32.totalorder %v669, 0
        %vm674 = vcmp.ge.s32.totalorder %v670, 0
        %vm675 = vcmp.ge.s32.totalorder %v671, 0
        %vm676 = vcmp.lt.s32.totalorder %v668, 16
        %vm677 = vcmp.lt.s32.totalorder %v669, 16
        %vm678 = vcmp.lt.s32.totalorder %v670, 16
        %vm679 = vcmp.lt.s32.totalorder %v671, 16
        %vm680 = vmand %vm672, %vm676
        %vm681 = vmand %vm673, %vm677
        %vm682 = vmand %vm674, %vm678
        %vm683 = vmand %vm675, %vm679
        %v684 = vsel %vm680, 1, 0
        %v685 = vsel %vm681, 1, 0
        %v686 = vsel %vm682, 1, 0
        %v687 = vsel %vm683, 1, 0
        %v688 = vcvt.s32.f32 %v684
        %v689 = vcvt.s32.f32 %v685
        %v690 = vcvt.s32.f32 %v686
        %v691 = vcvt.s32.f32 %v687
        %s692 = smul.u32 %s612, 2
        %s693 = smul.addr %s692, 8
        %s694 = scalar_lea.vmem [#allocation2], %s693
        %s695 = scalar_lea.sflag [#allocation3], %s612
        %s696 = smul.u32 4, 4
        %s697 = smul.u32 %s696, 1
        %s698 = sshll.u32 %s697, 4
        %699 = dma.done %s695, %s698
        %v700 = vld [vmem:[%s694] sm:$0xff]
        %v701 = vld [vmem:[%s694 + $0x8] sm:$0xff]
        %v702 = vld [vmem:[#allocation4] sm:$0xff]
        %v703 = vld [vmem:[#allocation4 + $0x8] sm:$0xff]
        %v704 = vld [vmem:[#allocation4 + $0x10] sm:$0xff]
        %v705 = vld [vmem:[#allocation4 + $0x18] sm:$0xff]
        %v706 = vld [vmem:[#allocation4 + $0x20] sm:$0xff]
        %v707 = vld [vmem:[#allocation4 + $0x28] sm:$0xff]
        %v708 = vld [vmem:[#allocation4 + $0x30] sm:$0xff]
        %v709 = vld [vmem:[#allocation4 + $0x38] sm:$0xff]
        %v710 = vld [vmem:[#allocation4 + $0x40] sm:$0xff]
        %v711 = vld [vmem:[#allocation4 + $0x48] sm:$0xff]
        %v712 = vld [vmem:[#allocation4 + $0x50] sm:$0xff]
        %v713 = vld [vmem:[#allocation4 + $0x58] sm:$0xff]
        %v714 = vld [vmem:[#allocation4 + $0x60] sm:$0xff]
        %v715 = vld [vmem:[#allocation4 + $0x68] sm:$0xff]
        %v716 = vld [vmem:[#allocation4 + $0x70] sm:$0xff]
        %v717 = vld [vmem:[#allocation4 + $0x78] sm:$0xff]
        %v734 = vunpack.c.l.b16 %v702
        %v735 = vunpack.c.h.b16 %v702
        %v736 = vunpack.c.l.b16 %v703
        %v737 = vunpack.c.h.b16 %v703
        %v738 = vunpack.c.l.b16 %v704
        %v739 = vunpack.c.h.b16 %v704
        %v740 = vunpack.c.l.b16 %v705
        %v741 = vunpack.c.h.b16 %v705
        %v742 = vunpack.c.l.b16 %v706
        %v743 = vunpack.c.h.b16 %v706
        %v744 = vunpack.c.l.b16 %v707
        %v745 = vunpack.c.h.b16 %v707
        %v746 = vunpack.c.l.b16 %v708
        %v747 = vunpack.c.h.b16 %v708
        %v748 = vunpack.c.l.b16 %v709
        %v749 = vunpack.c.h.b16 %v709
        %v750 = vunpack.c.l.b16 %v710
        %v751 = vunpack.c.h.b16 %v710
        %v752 = vunpack.c.l.b16 %v711
        %v753 = vunpack.c.h.b16 %v711
        %v754 = vunpack.c.l.b16 %v712
        %v755 = vunpack.c.h.b16 %v712
        %v756 = vunpack.c.l.b16 %v713
        %v757 = vunpack.c.h.b16 %v713
        %v758 = vunpack.c.l.b16 %v714
        %v759 = vunpack.c.h.b16 %v714
        %v760 = vunpack.c.l.b16 %v715
        %v761 = vunpack.c.h.b16 %v715
        %v762 = vunpack.c.l.b16 %v716
        %v763 = vunpack.c.h.b16 %v716
        %v764 = vunpack.c.l.b16 %v717
        %v765 = vunpack.c.h.b16 %v717
        %v766 = vpack.c.b16 %v736, %v734
        %v767 = vpack.c.b16 %v737, %v735
        %v768 = vpack.c.b16 %v740, %v738
        %v769 = vpack.c.b16 %v741, %v739
        %v770 = vpack.c.b16 %v744, %v742
        %v771 = vpack.c.b16 %v745, %v743
        %v772 = vpack.c.b16 %v748, %v746
        %v773 = vpack.c.b16 %v749, %v747
        %v774 = vpack.c.b16 %v752, %v750
        %v775 = vpack.c.b16 %v753, %v751
        %v776 = vpack.c.b16 %v756, %v754
        %v777 = vpack.c.b16 %v757, %v755
        %v778 = vpack.c.b16 %v760, %v758
        %v779 = vpack.c.b16 %v761, %v759
        %v780 = vpack.c.b16 %v764, %v762
        %v781 = vpack.c.b16 %v765, %v763
        %798 = vmatprep.subr.bf16.mxu0 %v767
        %799 = vmatpush1.bf16.msra.mxu0 %v766
        %800 = vmatprep.subr.bf16.mxu0 %v769
        %801 = vmatpush1.bf16.msra.mxu0 %v768
        %802 = vmatprep.subr.bf16.mxu0 %v771
        %803 = vmatpush1.bf16.msra.mxu0 %v770
        %804 = vmatprep.subr.bf16.mxu0 %v773
        %805 = vmatpush1.bf16.msra.mxu0 %v772
        %806 = vmatprep.subr.bf16.mxu0 %v775
        %807 = vmatpush1.bf16.msra.mxu0 %v774
        %808 = vmatprep.subr.bf16.mxu0 %v777
        %809 = vmatpush1.bf16.msra.mxu0 %v776
        %810 = vmatprep.subr.bf16.mxu0 %v779
        %811 = vmatpush1.bf16.msra.mxu0 %v778
        %812 = vmatprep.subr.bf16.mxu0 %v781
        %813 = vmatpush1.bf16.msra.mxu0 %v780
        %814 = vmatprep.subr.bf16.mxu0 0
        %815 = vmatpush1.bf16.msra.mxu0 0
        %816 = vmatprep.subr.bf16.mxu0 0
        %817 = vmatpush1.bf16.msra.mxu0 0
        %818 = vmatprep.subr.bf16.mxu0 0
        %819 = vmatpush1.bf16.msra.mxu0 0
        %820 = vmatprep.subr.bf16.mxu0 0
        %821 = vmatpush1.bf16.msra.mxu0 0
        %822 = vmatprep.subr.bf16.mxu0 0
        %823 = vmatpush1.bf16.msra.mxu0 0
        %824 = vmatprep.subr.bf16.mxu0 0
        %825 = vmatpush1.bf16.msra.mxu0 0
        %826 = vmatprep.subr.bf16.mxu0 0
        %827 = vmatpush1.bf16.msra.mxu0 0
        %828 = vmatprep.subr.bf16.mxu0 0
        %829 = vmatpush1.bf16.msra.mxu0 0
        %830 = vmatprep.mubr.bf16.mxu0 0
        %831 = vmatmul.mubr.bf16.gmra.mrb[0].mxu0 %v700
        %v832 = vpop.f32.mrb[0].mxu0
        %v833 = vadd.f32 0.0, %v832
        %v834 = vpop.f32.mrb[0].mxu0
        %v835 = vadd.f32 0.0, %v834
        %v836 = vpop.f32.mrb[0].mxu0
        %v837 = vadd.f32 0.0, %v836
        %v838 = vpop.f32.mrb[0].mxu0
        %v839 = vadd.f32 0.0, %v838
        %840 = vmatprep.mubr.bf16.mxu0 0
        %841 = vmatmul.mubr.bf16.gmra.mrb[0].mxu0 %v701
        %v842 = vpop.f32.mrb[0].mxu0
        %v843 = vadd.f32 0.0, %v842
        %v844 = vpop.f32.mrb[0].mxu0
        %v845 = vadd.f32 0.0, %v844
        %v846 = vpop.f32.mrb[0].mxu0
        %v847 = vpop.f32.mrb[0].mxu0
        %v848 = vadd.f32 0.0, %v847
        %849 = vdwg.mxu0
        %v850 = vld [vmem:[%s2] sm:$0xf]
        %v852 = vlaneseq
        %v853 = vshrl.u32 %v852, 7
        %v854 = vsub.s32 0, %v853
        %v855 = vrot.slane %v850, %v854
        %v856 = vlaneseq
        %v857 = vshrl.u32 %v856, 7
        %v858 = vsub.s32 2, %v857
        %v859 = vrot.slane %v850, %v858
        %v862 = vlaneseq
        %v863 = vshrl.u32 %v862, 7
        %v864 = vsub.s32 0, %v863
        %v865 = vrot.slane %v855, %v864
        %v866 = vlaneseq
        %v867 = vshrl.u32 %v866, 7
        %v868 = vsub.s32 0, %v867
        %v869 = vrot.slane %v859, %v868
        %v870 = vmul.f32 %v833, %v865
        %v871 = vmul.f32 %v835, %v869
        %v872 = vmul.f32 %v837, %v865
        %v873 = vmul.f32 %v839, %v869
        %v874 = vmul.f32 %v843, %v865
        %v875 = vmul.f32 %v845, %v869
        %v876 = vmul.f32 %v848, %v869
        %v877 = vlaneseq
        %v878 = vshrl.u32 %v877, 7
        %v879 = vsub.s32 1, %v878
        %v880 = vrot.slane %v850, %v879
        %v881 = vlaneseq
        %v882 = vshrl.u32 %v881, 7
        %v883 = vsub.s32 3, %v882
        %v884 = vrot.slane %v850, %v883
        %v887 = vlaneseq
        %v888 = vshrl.u32 %v887, 7
        %v889 = vsub.s32 1, %v888
        %v890 = vrot.slane %v880, %v889
        %v891 = vlaneseq
        %v892 = vshrl.u32 %v891, 7
        %v893 = vsub.s32 1, %v892
        %v894 = vrot.slane %v884, %v893
        %v895 = vadd.f32 %v870, %v890
        %v896 = vadd.f32 %v871, %v894
        %v897 = vadd.f32 %v872, %v890
        %v898 = vadd.f32 %v873, %v894
        %v899 = vadd.f32 %v874, %v890
        %v900 = vadd.f32 %v875, %v894
        %v901 = vadd.f32 %v876, %v894
        %v902 = vmax.f32 %v895, 0.0
        %v903 = vmax.f32 %v896, 0.0
        %v904 = vmax.f32 %v897, 0.0
        %v905 = vmax.f32 %v898, 0.0
        %v906 = vmax.f32 %v899, 0.0
        %v907 = vmax.f32 %v900, 0.0
        %v908 = vmax.f32 %v901, 0.0
        %v909 = vmul.f32 %v902, %v688
        %v910 = vmul.f32 %v903, %v688
        %v911 = vmul.f32 %v904, %v689
        %v912 = vmul.f32 %v905, %v689
        %v913 = vmul.f32 %v906, %v690
        %v914 = vmul.f32 %v907, %v690
        %v915 = vmul.f32 %v908, %v691
        %v916 = vpack.c.bf16 %v911, %v909
        %v917 = vpack.c.bf16 %v913, %v913
        %v918 = vpack.c.bf16 %v912, %v910
        %v919 = vpack.c.bf16 %v915, %v914
        %v920 = vld [vmem:[#allocation7] sm:$0xf]
        %v921 = vld [vmem:[#allocation7 + $0x4] sm:$0xf]
        %v922 = vld [vmem:[#allocation7 + $0x8] sm:$0xf]
        %v923 = vld [vmem:[#allocation7 + $0xc] sm:$0xf]
        %v924 = vld [vmem:[#allocation7 + $0x10] sm:$0xf]
        %v925 = vld [vmem:[#allocation7 + $0x14] sm:$0xf]
        %v926 = vld [vmem:[#allocation7 + $0x18] sm:$0xf]
        %v927 = vld [vmem:[#allocation7 + $0x1c] sm:$0xf]
        %v928 = vld [vmem:[#allocation7 + $0x20] sm:$0xf]
        %v929 = vld [vmem:[#allocation7 + $0x24] sm:$0xf]
        %v930 = vld [vmem:[#allocation7 + $0x28] sm:$0xf]
        %v931 = vld [vmem:[#allocation7 + $0x2c] sm:$0xf]
        %v932 = vld [vmem:[#allocation7 + $0x30] sm:$0xf]
        %v933 = vld [vmem:[#allocation7 + $0x34] sm:$0xf]
        %v934 = vld [vmem:[#allocation7 + $0x38] sm:$0xf]
        %v935 = vld [vmem:[#allocation7 + $0x3c] sm:$0xf]
        %s936 = scalar_lea.vmem [#allocation7], 64
        %v937 = vld [vmem:[%s936] sm:$0xf]
        %v938 = vld [vmem:[%s936 + $0x4] sm:$0xf]
        %v939 = vld [vmem:[%s936 + $0x8] sm:$0xf]
        %v940 = vld [vmem:[%s936 + $0xc] sm:$0xf]
        %v941 = vld [vmem:[%s936 + $0x10] sm:$0xf]
        %v942 = vld [vmem:[%s936 + $0x14] sm:$0xf]
        %v943 = vld [vmem:[%s936 + $0x18] sm:$0xf]
        %v944 = vld [vmem:[%s936 + $0x1c] sm:$0xf]
        %v945 = vld [vmem:[%s936 + $0x20] sm:$0xf]
        %v946 = vld [vmem:[%s936 + $0x24] sm:$0xf]
        %v947 = vld [vmem:[%s936 + $0x28] sm:$0xf]
        %v948 = vld [vmem:[%s936 + $0x2c] sm:$0xf]
        %v949 = vld [vmem:[%s936 + $0x30] sm:$0xf]
        %v950 = vld [vmem:[%s936 + $0x34] sm:$0xf]
        %v951 = vld [vmem:[%s936 + $0x38] sm:$0xf]
        %v952 = vld [vmem:[%s936 + $0x3c] sm:$0xf]
        %vm953 = vsmask.f32 7424
        %v955 = vshrl.u32 %v918, 16
        %v957 = vshll.u32 %v918, 16
        %v959 = vrot.slane %v957, 1
        %v960 = vor.u32 %v955, %v959
        %v962 = vshll.u32 %v919, 16
        %v964 = vrot.slane %v962, 1
        %v965 = vsel %vm953, %v960, %v964
        %v966 = vshrl.u32 %v919, 16
        %v968 = vor.u32 %v966, %v964
        %v987 = vunpack.c.l.b16 %v937
        %v988 = vunpack.c.l.b16 %v938
        %v989 = vunpack.c.l.b16 %v939
        %v990 = vunpack.c.l.b16 %v940
        %v991 = vunpack.c.l.b16 %v941
        %v992 = vunpack.c.l.b16 %v942
        %v993 = vunpack.c.l.b16 %v943
        %v994 = vunpack.c.l.b16 %v944
        %v995 = vunpack.c.l.b16 %v945
        %v996 = vunpack.c.l.b16 %v946
        %v997 = vunpack.c.l.b16 %v947
        %v998 = vunpack.c.l.b16 %v948
        %v999 = vunpack.c.l.b16 %v949
        %v1000 = vunpack.c.l.b16 %v950
        %v1001 = vunpack.c.l.b16 %v951
        %v1002 = vunpack.c.l.b16 %v952
        %v1003 = vpack.c.b16 %v988, %v987
        %v1004 = vpack.c.b16 %v990, %v989
        %v1005 = vpack.c.b16 %v992, %v991
        %v1006 = vpack.c.b16 %v994, %v993
        %v1007 = vpack.c.b16 %v996, %v995
        %v1008 = vpack.c.b16 %v998, %v997
        %v1009 = vpack.c.b16 %v1000, %v999
        %v1010 = vpack.c.b16 %v1002, %v1001
        %1019 = vmatprep.subr.bf16.mxu0 0
        %1020 = vmatpush1.bf16.msra.mxu0 %v1003
        %1021 = vmatprep.subr.bf16.mxu0 0
        %1022 = vmatpush1.bf16.msra.mxu0 %v1004
        %1023 = vmatprep.subr.bf16.mxu0 0
        %1024 = vmatpush1.bf16.msra.mxu0 %v1005
        %1025 = vmatprep.subr.bf16.mxu0 0
        %1026 = vmatpush1.bf16.msra.mxu0 %v1006
        %1027 = vmatprep.subr.bf16.mxu0 0
        %1028 = vmatpush1.bf16.msra.mxu0 %v1007
        %1029 = vmatprep.subr.bf16.mxu0 0
        %1030 = vmatpush1.bf16.msra.mxu0 %v1008
        %1031 = vmatprep.subr.bf16.mxu0 0
        %1032 = vmatpush1.bf16.msra.mxu0 %v1009
        %1033 = vmatprep.subr.bf16.mxu0 0
        %1034 = vmatpush1.bf16.msra.mxu0 %v1010
        %1035 = vmatprep.subr.bf16.mxu0 0
        %1036 = vmatpush1.bf16.msra.mxu0 0
        %1037 = vmatprep.subr.bf16.mxu0 0
        %1038 = vmatpush1.bf16.msra.mxu0 0
        %1039 = vmatprep.subr.bf16.mxu0 0
        %1040 = vmatpush1.bf16.msra.mxu0 0
        %1041 = vmatprep.subr.bf16.mxu0 0
        %1042 = vmatpush1.bf16.msra.mxu0 0
        %1043 = vmatprep.subr.bf16.mxu0 0
        %1044 = vmatpush1.bf16.msra.mxu0 0
        %1045 = vmatprep.subr.bf16.mxu0 0
        %1046 = vmatpush1.bf16.msra.mxu0 0
        %1047 = vmatprep.subr.bf16.mxu0 0
        %1048 = vmatpush1.bf16.msra.mxu0 0
        %1049 = vmatprep.subr.bf16.mxu0 0
        %1050 = vmatpush1.bf16.msra.mxu0 0
        %1051 = vmatprep.mubr.bf16.mxu0 0
        %1052 = vmatmul.mubr.bf16.gmra.mrb[0].mxu0 %v965
        %v1053 = vpop.f32.mrb[0].mxu0
        %v1054 = vadd.f32 0.0, %v1053
        %v1055 = vpop.f32.mrb[0].mxu0
        %v1056 = vpop.f32.mrb[0].mxu0
        %v1057 = vadd.f32 0.0, %v1056
        %v1058 = vpop.f32.mrb[0].mxu0
        %1059 = vmatprep.mubr.bf16.mxu0 0
        %1060 = vmatmul.mubr.bf16.gmra.mrb[0].mxu0 %v968
        %v1061 = vpop.f32.mrb[0].mxu0
        %v1062 = vadd.f32 0.0, %v1061
        %v1063 = vpop.f32.mrb[0].mxu0
        %v1064 = vpop.f32.mrb[0].mxu0
        %v1065 = vpop.f32.mrb[0].mxu0
        %1066 = vdwg.mxu0
        %v1083 = vunpack.c.l.b16 %v920
        %v1084 = vunpack.c.l.b16 %v921
        %v1085 = vunpack.c.l.b16 %v922
        %v1086 = vunpack.c.l.b16 %v923
        %v1087 = vunpack.c.l.b16 %v924
        %v1088 = vunpack.c.l.b16 %v925
        %v1089 = vunpack.c.l.b16 %v926
        %v1090 = vunpack.c.l.b16 %v927
        %v1091 = vunpack.c.l.b16 %v928
        %v1092 = vunpack.c.l.b16 %v929
        %v1093 = vunpack.c.l.b16 %v930
        %v1094 = vunpack.c.l.b16 %v931
        %v1095 = vunpack.c.l.b16 %v932
        %v1096 = vunpack.c.l.b16 %v933
        %v1097 = vunpack.c.l.b16 %v934
        %v1098 = vunpack.c.l.b16 %v935
        %v1099 = vpack.c.b16 %v1084, %v1083
        %v1100 = vpack.c.b16 %v1086, %v1085
        %v1101 = vpack.c.b16 %v1088, %v1087
        %v1102 = vpack.c.b16 %v1090, %v1089
        %v1103 = vpack.c.b16 %v1092, %v1091
        %v1104 = vpack.c.b16 %v1094, %v1093
        %v1105 = vpack.c.b16 %v1096, %v1095
        %v1106 = vpack.c.b16 %v1098, %v1097
        %1115 = vmatprep.subr.bf16.mxu0 0
        %1116 = vmatpush1.bf16.msra.mxu0 %v1099
        %1117 = vmatprep.subr.bf16.mxu0 0
        %1118 = vmatpush1.bf16.msra.mxu0 %v1100
        %1119 = vmatprep.subr.bf16.mxu0 0
        %1120 = vmatpush1.bf16.msra.mxu0 %v1101
        %1121 = vmatprep.subr.bf16.mxu0 0
        %1122 = vmatpush1.bf16.msra.mxu0 %v1102
        %1123 = vmatprep.subr.bf16.mxu0 0
        %1124 = vmatpush1.bf16.msra.mxu0 %v1103
        %1125 = vmatprep.subr.bf16.mxu0 0
        %1126 = vmatpush1.bf16.msra.mxu0 %v1104
        %1127 = vmatprep.subr.bf16.mxu0 0
        %1128 = vmatpush1.bf16.msra.mxu0 %v1105
        %1129 = vmatprep.subr.bf16.mxu0 0
        %1130 = vmatpush1.bf16.msra.mxu0 %v1106
        %1131 = vmatprep.subr.bf16.mxu0 0
        %1132 = vmatpush1.bf16.msra.mxu0 0
        %1133 = vmatprep.subr.bf16.mxu0 0
        %1134 = vmatpush1.bf16.msra.mxu0 0
        %1135 = vmatprep.subr.bf16.mxu0 0
        %1136 = vmatpush1.bf16.msra.mxu0 0
        %1137 = vmatprep.subr.bf16.mxu0 0
        %1138 = vmatpush1.bf16.msra.mxu0 0
        %1139 = vmatprep.subr.bf16.mxu0 0
        %1140 = vmatpush1.bf16.msra.mxu0 0
        %1141 = vmatprep.subr.bf16.mxu0 0
        %1142 = vmatpush1.bf16.msra.mxu0 0
        %1143 = vmatprep.subr.bf16.mxu0 0
        %1144 = vmatpush1.bf16.msra.mxu0 0
        %1145 = vmatprep.subr.bf16.mxu0 0
        %1146 = vmatpush1.bf16.msra.mxu0 0
        %1147 = vmatprep.mubr.bf16.mxu0 0
        %1148 = vmatmul.mubr.bf16.gmra.mrb[0].mxu0 %v918
        %v1149 = vpop.f32.mrb[0].mxu0
        %v1150 = vadd.f32 %v1054, %v1149
        %v1151 = vpop.f32.mrb[0].mxu0
        %v1152 = vpop.f32.mrb[0].mxu0
        %v1153 = vadd.f32 %v1057, %v1152
        %v1154 = vpop.f32.mrb[0].mxu0
        %1155 = vmatprep.mubr.bf16.mxu0 0
        %1156 = vmatmul.mubr.bf16.gmra.mrb[0].mxu0 %v919
        %v1157 = vpop.f32.mrb[0].mxu0
        %v1158 = vadd.f32 %v1062, %v1157
        %v1159 = vpop.f32.mrb[0].mxu0
        %v1160 = vpop.f32.mrb[0].mxu0
        %v1161 = vpop.f32.mrb[0].mxu0
        %1162 = vdwg.mxu0
        %s1163 = scalar_lea.vmem [#allocation7], 128
        %v1164 = vld [vmem:[%s1163] sm:$0xf]
        %v1165 = vld [vmem:[%s1163 + $0x4] sm:$0xf]
        %v1166 = vld [vmem:[%s1163 + $0x8] sm:$0xf]
        %v1167 = vld [vmem:[%s1163 + $0xc] sm:$0xf]
        %v1168 = vld [vmem:[%s1163 + $0x10] sm:$0xf]
        %v1169 = vld [vmem:[%s1163 + $0x14] sm:$0xf]
        %v1170 = vld [vmem:[%s1163 + $0x18] sm:$0xf]
        %v1171 = vld [vmem:[%s1163 + $0x1c] sm:$0xf]
        %v1172 = vld [vmem:[%s1163 + $0x20] sm:$0xf]
        %v1173 = vld [vmem:[%s1163 + $0x24] sm:$0xf]
        %v1174 = vld [vmem:[%s1163 + $0x28] sm:$0xf]
        %v1175 = vld [vmem:[%s1163 + $0x2c] sm:$0xf]
        %v1176 = vld [vmem:[%s1163 + $0x30] sm:$0xf]
        %v1177 = vld [vmem:[%s1163 + $0x34] sm:$0xf]
        %v1178 = vld [vmem:[%s1163 + $0x38] sm:$0xf]
        %v1179 = vld [vmem:[%s1163 + $0x3c] sm:$0xf]
        %vm1182 = vcmask 1046528
        %v1183 = vrot.slane %v918, 1
        %v1184 = vrot.slane %v919, 1
        %v1185 = vsel %vm1182, %v1183, %v1184
        %v1204 = vunpack.c.l.b16 %v1164
        %v1205 = vunpack.c.l.b16 %v1165
        %v1206 = vunpack.c.l.b16 %v1166
        %v1207 = vunpack.c.l.b16 %v1167
        %v1208 = vunpack.c.l.b16 %v1168
        %v1209 = vunpack.c.l.b16 %v1169
        %v1210 = vunpack.c.l.b16 %v1170
        %v1211 = vunpack.c.l.b16 %v1171
        %v1212 = vunpack.c.l.b16 %v1172
        %v1213 = vunpack.c.l.b16 %v1173
        %v1214 = vunpack.c.l.b16 %v1174
        %v1215 = vunpack.c.l.b16 %v1175
        %v1216 = vunpack.c.l.b16 %v1176
        %v1217 = vunpack.c.l.b16 %v1177
        %v1218 = vunpack.c.l.b16 %v1178
        %v1219 = vunpack.c.l.b16 %v1179
        %v1220 = vpack.c.b16 %v1205, %v1204
        %v1221 = vpack.c.b16 %v1207, %v1206
        %v1222 = vpack.c.b16 %v1209, %v1208
        %v1223 = vpack.c.b16 %v1211, %v1210
        %v1224 = vpack.c.b16 %v1213, %v1212
        %v1225 = vpack.c.b16 %v1215, %v1214
        %v1226 = vpack.c.b16 %v1217, %v1216
        %v1227 = vpack.c.b16 %v1219, %v1218
        %1236 = vmatprep.subr.bf16.mxu0 0
        %1237 = vmatpush1.bf16.msra.mxu0 %v1220
        %1238 = vmatprep.subr.bf16.mxu0 0
        %1239 = vmatpush1.bf16.msra.mxu0 %v1221
        %1240 = vmatprep.subr.bf16.mxu0 0
        %1241 = vmatpush1.bf16.msra.mxu0 %v1222
        %1242 = vmatprep.subr.bf16.mxu0 0
        %1243 = vmatpush1.bf16.msra.mxu0 %v1223
        %1244 = vmatprep.subr.bf16.mxu0 0
        %1245 = vmatpush1.bf16.msra.mxu0 %v1224
        %1246 = vmatprep.subr.bf16.mxu0 0
        %1247 = vmatpush1.bf16.msra.mxu0 %v1225
        %1248 = vmatprep.subr.bf16.mxu0 0
        %1249 = vmatpush1.bf16.msra.mxu0 %v1226
        %1250 = vmatprep.subr.bf16.mxu0 0
        %1251 = vmatpush1.bf16.msra.mxu0 %v1227
        %1252 = vmatprep.subr.bf16.mxu0 0
        %1253 = vmatpush1.bf16.msra.mxu0 0
        %1254 = vmatprep.subr.bf16.mxu0 0
        %1255 = vmatpush1.bf16.msra.mxu0 0
        %1256 = vmatprep.subr.bf16.mxu0 0
        %1257 = vmatpush1.bf16.msra.mxu0 0
        %1258 = vmatprep.subr.bf16.mxu0 0
        %1259 = vmatpush1.bf16.msra.mxu0 0
        %1260 = vmatprep.subr.bf16.mxu0 0
        %1261 = vmatpush1.bf16.msra.mxu0 0
        %1262 = vmatprep.subr.bf16.mxu0 0
        %1263 = vmatpush1.bf16.msra.mxu0 0
        %1264 = vmatprep.subr.bf16.mxu0 0
        %1265 = vmatpush1.bf16.msra.mxu0 0
        %1266 = vmatprep.subr.bf16.mxu0 0
        %1267 = vmatpush1.bf16.msra.mxu0 0
        %1268 = vmatprep.mubr.bf16.mxu0 0
        %1269 = vmatmul.mubr.bf16.gmra.mrb[0].mxu0 %v1185
        %v1270 = vpop.f32.mrb[0].mxu0
        %v1271 = vadd.f32 0.0, %v1270
        %v1272 = vpop.f32.mrb[0].mxu0
        %v1273 = vpop.f32.mrb[0].mxu0
        %v1274 = vadd.f32 0.0, %v1273
        %v1275 = vpop.f32.mrb[0].mxu0
        %1276 = vmatprep.mubr.bf16.mxu0 0
        %1277 = vmatmul.mubr.bf16.gmra.mrb[0].mxu0 %v1184
        %v1278 = vpop.f32.mrb[0].mxu0
        %v1279 = vadd.f32 0.0, %v1278
        %v1280 = vpop.f32.mrb[0].mxu0
        %v1281 = vpop.f32.mrb[0].mxu0
        %v1282 = vpop.f32.mrb[0].mxu0
        %1283 = vdwg.mxu0
        %v1284 = vadd.f32 %v1150, %v1271
        %v1285 = vadd.f32 %v1153, %v1274
        %v1286 = vadd.f32 %v1158, %v1279
        %v1287 = vld [vmem:[%s4] sm:$0x3]
        %v1288 = vlaneseq
        %v1289 = vshrl.u32 %v1288, 7
        %v1290 = vsub.s32 0, %v1289
        %v1291 = vrot.slane %v1287, %v1290
        %v1292 = vmul.f32 %v1284, %v1291
        %v1293 = vmul.f32 %v1285, %v1291
        %v1294 = vmul.f32 %v1286, %v1291
        %v1295 = vlaneseq
        %v1296 = vshrl.u32 %v1295, 7
        %v1297 = vsub.s32 1, %v1296
        %v1298 = vrot.slane %v1287, %v1297
        %v1299 = vadd.f32 %v1292, %v1298
        %v1300 = vadd.f32 %v1293, %v1298
        %v1301 = vadd.f32 %v1294, %v1298
        %v1302 = vmax.f32 %v1299, 0.0
        %v1303 = vmax.f32 %v1300, 0.0
        %v1304 = vmax.f32 %v1301, 0.0
        %vm1309 = vcmask 1046528
        %v1310 = vrot.slane %v688, 1
        %v1311 = vrot.slane %v689, 1
        %v1312 = vsel %vm1309, %v1310, %v1311
        %v1313 = vrot.slane %v690, 1
        %v1314 = vsel %vm1309, %v1311, %v1313
        %v1315 = vrot.slane %v691, 1
        %v1316 = vsel %vm1309, %v1313, %v1315
        %v1320 = vmul.f32 %v1302, %v1312
        %v1321 = vmul.f32 %v1303, %v1314
        %v1322 = vmul.f32 %v1304, %v1316
        %v1323 = vpack.c.bf16 %v1321, %v1320
        %v1324 = vpack.c.bf16 %v1322, %v1322
        %v1325 = vld [vmem:[#allocation9] sm:$0xf]
        %v1326 = vld [vmem:[#allocation9 + $0x4] sm:$0xf]
        %v1327 = vld [vmem:[#allocation9 + $0x8] sm:$0xf]
        %v1328 = vld [vmem:[#allocation9 + $0xc] sm:$0xf]
        %v1329 = vld [vmem:[#allocation9 + $0x10] sm:$0xf]
        %v1330 = vld [vmem:[#allocation9 + $0x14] sm:$0xf]
        %v1331 = vld [vmem:[#allocation9 + $0x18] sm:$0xf]
        %v1332 = vld [vmem:[#allocation9 + $0x1c] sm:$0xf]
        %v1333 = vld [vmem:[#allocation9 + $0x20] sm:$0xf]
        %v1334 = vld [vmem:[#allocation9 + $0x24] sm:$0xf]
        %v1335 = vld [vmem:[#allocation9 + $0x28] sm:$0xf]
        %v1336 = vld [vmem:[#allocation9 + $0x2c] sm:$0xf]
        %v1337 = vld [vmem:[#allocation9 + $0x30] sm:$0xf]
        %v1338 = vld [vmem:[#allocation9 + $0x34] sm:$0xf]
        %v1339 = vld [vmem:[#allocation9 + $0x38] sm:$0xf]
        %v1340 = vld [vmem:[#allocation9 + $0x3c] sm:$0xf]
        %s1341 = scalar_lea.vmem [#allocation9], 64
        %v1342 = vld [vmem:[%s1341] sm:$0xf]
        %v1343 = vld [vmem:[%s1341 + $0x4] sm:$0xf]
        %v1344 = vld [vmem:[%s1341 + $0x8] sm:$0xf]
        %v1345 = vld [vmem:[%s1341 + $0xc] sm:$0xf]
        %v1346 = vld [vmem:[%s1341 + $0x10] sm:$0xf]
        %v1347 = vld [vmem:[%s1341 + $0x14] sm:$0xf]
        %v1348 = vld [vmem:[%s1341 + $0x18] sm:$0xf]
        %v1349 = vld [vmem:[%s1341 + $0x1c] sm:$0xf]
        %v1350 = vld [vmem:[%s1341 + $0x20] sm:$0xf]
        %v1351 = vld [vmem:[%s1341 + $0x24] sm:$0xf]
        %v1352 = vld [vmem:[%s1341 + $0x28] sm:$0xf]
        %v1353 = vld [vmem:[%s1341 + $0x2c] sm:$0xf]
        %v1354 = vld [vmem:[%s1341 + $0x30] sm:$0xf]
        %v1355 = vld [vmem:[%s1341 + $0x34] sm:$0xf]
        %v1356 = vld [vmem:[%s1341 + $0x38] sm:$0xf]
        %v1357 = vld [vmem:[%s1341 + $0x3c] sm:$0xf]
        %v1359 = vshrl.u32 %v1323, 16
        %v1361 = vshll.u32 %v1323, 16
        %v1363 = vrot.slane %v1361, 1
        %v1364 = vor.u32 %v1359, %v1363
        %v1366 = vshll.u32 %v1324, 16
        %v1368 = vrot.slane %v1366, 1
        %v1369 = vsel %vm953, %v1364, %v1368
        %v1370 = vshrl.u32 %v1324, 16
        %v1372 = vor.u32 %v1370, %v1368
        %v1391 = vunpack.c.l.b16 %v1342
        %v1392 = vunpack.c.l.b16 %v1343
        %v1393 = vunpack.c.l.b16 %v1344
        %v1394 = vunpack.c.l.b16 %v1345
        %v1395 = vunpack.c.l.b16 %v1346
        %v1396 = vunpack.c.l.b16 %v1347
        %v1397 = vunpack.c.l.b16 %v1348
        %v1398 = vunpack.c.l.b16 %v1349
        %v1399 = vunpack.c.l.b16 %v1350
        %v1400 = vunpack.c.l.b16 %v1351
        %v1401 = vunpack.c.l.b16 %v1352
        %v1402 = vunpack.c.l.b16 %v1353
        %v1403 = vunpack.c.l.b16 %v1354
        %v1404 = vunpack.c.l.b16 %v1355
        %v1405 = vunpack.c.l.b16 %v1356
        %v1406 = vunpack.c.l.b16 %v1357
        %v1407 = vpack.c.b16 %v1392, %v1391
        %v1408 = vpack.c.b16 %v1394, %v1393
        %v1409 = vpack.c.b16 %v1396, %v1395
        %v1410 = vpack.c.b16 %v1398, %v1397
        %v1411 = vpack.c.b16 %v1400, %v1399
        %v1412 = vpack.c.b16 %v1402, %v1401
        %v1413 = vpack.c.b16 %v1404, %v1403
        %v1414 = vpack.c.b16 %v1406, %v1405
        %1423 = vmatprep.subr.bf16.mxu0 0
        %1424 = vmatpush1.bf16.msra.mxu0 %v1407
        %1425 = vmatprep.subr.bf16.mxu0 0
        %1426 = vmatpush1.bf16.msra.mxu0 %v1408
        %1427 = vmatprep.subr.bf16.mxu0 0
        %1428 = vmatpush1.bf16.msra.mxu0 %v1409
        %1429 = vmatprep.subr.bf16.mxu0 0
        %1430 = vmatpush1.bf16.msra.mxu0 %v1410
        %1431 = vmatprep.subr.bf16.mxu0 0
        %1432 = vmatpush1.bf16.msra.mxu0 %v1411
        %1433 = vmatprep.subr.bf16.mxu0 0
        %1434 = vmatpush1.bf16.msra.mxu0 %v1412
        %1435 = vmatprep.subr.bf16.mxu0 0
        %1436 = vmatpush1.bf16.msra.mxu0 %v1413
        %1437 = vmatprep.subr.bf16.mxu0 0
        %1438 = vmatpush1.bf16.msra.mxu0 %v1414
        %1439 = vmatprep.subr.bf16.mxu0 0
        %1440 = vmatpush1.bf16.msra.mxu0 0
        %1441 = vmatprep.subr.bf16.mxu0 0
        %1442 = vmatpush1.bf16.msra.mxu0 0
        %1443 = vmatprep.subr.bf16.mxu0 0
        %1444 = vmatpush1.bf16.msra.mxu0 0
        %1445 = vmatprep.subr.bf16.mxu0 0
        %1446 = vmatpush1.bf16.msra.mxu0 0
        %1447 = vmatprep.subr.bf16.mxu0 0
        %1448 = vmatpush1.bf16.msra.mxu0 0
        %1449 = vmatprep.subr.bf16.mxu0 0
        %1450 = vmatpush1.bf16.msra.mxu0 0
        %1451 = vmatprep.subr.bf16.mxu0 0
        %1452 = vmatpush1.bf16.msra.mxu0 0
        %1453 = vmatprep.subr.bf16.mxu0 0
        %1454 = vmatpush1.bf16.msra.mxu0 0
        %1455 = vmatprep.mubr.bf16.mxu0 0
        %1456 = vmatmul.mubr.bf16.gmra.mrb[0].mxu0 %v1369
        %v1457 = vpop.f32.mrb[0].mxu0
        %v1458 = vadd.f32 0.0, %v1457
        %v1459 = vpop.f32.mrb[0].mxu0
        %v1460 = vpop.f32.mrb[0].mxu0
        %v1461 = vadd.f32 0.0, %v1460
        %v1462 = vpop.f32.mrb[0].mxu0
        %1463 = vmatprep.mubr.bf16.mxu0 0
        %1464 = vmatmul.mubr.bf16.gmra.mrb[0].mxu0 %v1372
        %v1465 = vpop.f32.mrb[0].mxu0
        %v1466 = vadd.f32 0.0, %v1465
        %v1467 = vpop.f32.mrb[0].mxu0
        %v1468 = vpop.f32.mrb[0].mxu0
        %v1469 = vpop.f32.mrb[0].mxu0
        %1470 = vdwg.mxu0
        %v1487 = vunpack.c.l.b16 %v1325
        %v1488 = vunpack.c.l.b16 %v1326
        %v1489 = vunpack.c.l.b16 %v1327
        %v1490 = vunpack.c.l.b16 %v1328
        %v1491 = vunpack.c.l.b16 %v1329
        %v1492 = vunpack.c.l.b16 %v1330
        %v1493 = vunpack.c.l.b16 %v1331
        %v1494 = vunpack.c.l.b16 %v1332
        %v1495 = vunpack.c.l.b16 %v1333
        %v1496 = vunpack.c.l.b16 %v1334
        %v1497 = vunpack.c.l.b16 %v1335
        %v1498 = vunpack.c.l.b16 %v1336
        %v1499 = vunpack.c.l.b16 %v1337
        %v1500 = vunpack.c.l.b16 %v1338
        %v1501 = vunpack.c.l.b16 %v1339
        %v1502 = vunpack.c.l.b16 %v1340
        %v1503 = vpack.c.b16 %v1488, %v1487
        %v1504 = vpack.c.b16 %v1490, %v1489
        %v1505 = vpack.c.b16 %v1492, %v1491
        %v1506 = vpack.c.b16 %v1494, %v1493
        %v1507 = vpack.c.b16 %v1496, %v1495
        %v1508 = vpack.c.b16 %v1498, %v1497
        %v1509 = vpack.c.b16 %v1500, %v1499
        %v1510 = vpack.c.b16 %v1502, %v1501
        %1519 = vmatprep.subr.bf16.mxu0 0
        %1520 = vmatpush1.bf16.msra.mxu0 %v1503
        %1521 = vmatprep.subr.bf16.mxu0 0
        %1522 = vmatpush1.bf16.msra.mxu0 %v1504
        %1523 = vmatprep.subr.bf16.mxu0 0
        %1524 = vmatpush1.bf16.msra.mxu0 %v1505
        %1525 = vmatprep.subr.bf16.mxu0 0
        %1526 = vmatpush1.bf16.msra.mxu0 %v1506
        %1527 = vmatprep.subr.bf16.mxu0 0
        %1528 = vmatpush1.bf16.msra.mxu0 %v1507
        %1529 = vmatprep.subr.bf16.mxu0 0
        %1530 = vmatpush1.bf16.msra.mxu0 %v1508
        %1531 = vmatprep.subr.bf16.mxu0 0
        %1532 = vmatpush1.bf16.msra.mxu0 %v1509
        %1533 = vmatprep.subr.bf16.mxu0 0
        %1534 = vmatpush1.bf16.msra.mxu0 %v1510
        %1535 = vmatprep.subr.bf16.mxu0 0
        %1536 = vmatpush1.bf16.msra.mxu0 0
        %1537 = vmatprep.subr.bf16.mxu0 0
        %1538 = vmatpush1.bf16.msra.mxu0 0
        %1539 = vmatprep.subr.bf16.mxu0 0
        %1540 = vmatpush1.bf16.msra.mxu0 0
        %1541 = vmatprep.subr.bf16.mxu0 0
        %1542 = vmatpush1.bf16.msra.mxu0 0
        %1543 = vmatprep.subr.bf16.mxu0 0
        %1544 = vmatpush1.bf16.msra.mxu0 0
        %1545 = vmatprep.subr.bf16.mxu0 0
        %1546 = vmatpush1.bf16.msra.mxu0 0
        %1547 = vmatprep.subr.bf16.mxu0 0
        %1548 = vmatpush1.bf16.msra.mxu0 0
        %1549 = vmatprep.subr.bf16.mxu0 0
        %1550 = vmatpush1.bf16.msra.mxu0 0
        %1551 = vmatprep.mubr.bf16.mxu0 0
        %1552 = vmatmul.mubr.bf16.gmra.mrb[0].mxu0 %v1323
        %v1553 = vpop.f32.mrb[0].mxu0
        %v1554 = vadd.f32 %v1458, %v1553
        %v1555 = vpop.f32.mrb[0].mxu0
        %v1556 = vpop.f32.mrb[0].mxu0
        %v1557 = vadd.f32 %v1461, %v1556
        %v1558 = vpop.f32.mrb[0].mxu0
        %1559 = vmatprep.mubr.bf16.mxu0 0
        %1560 = vmatmul.mubr.bf16.gmra.mrb[0].mxu0 %v1324
        %v1561 = vpop.f32.mrb[0].mxu0
        %v1562 = vadd.f32 %v1466, %v1561
        %v1563 = vpop.f32.mrb[0].mxu0
        %v1564 = vpop.f32.mrb[0].mxu0
        %v1565 = vpop.f32.mrb[0].mxu0
        %1566 = vdwg.mxu0
        %s1567 = scalar_lea.vmem [#allocation9], 128
        %v1568 = vld [vmem:[%s1567] sm:$0xf]
        %v1569 = vld [vmem:[%s1567 + $0x4] sm:$0xf]
        %v1570 = vld [vmem:[%s1567 + $0x8] sm:$0xf]
        %v1571 = vld [vmem:[%s1567 + $0xc] sm:$0xf]
        %v1572 = vld [vmem:[%s1567 + $0x10] sm:$0xf]
        %v1573 = vld [vmem:[%s1567 + $0x14] sm:$0xf]
        %v1574 = vld [vmem:[%s1567 + $0x18] sm:$0xf]
        %v1575 = vld [vmem:[%s1567 + $0x1c] sm:$0xf]
        %v1576 = vld [vmem:[%s1567 + $0x20] sm:$0xf]
        %v1577 = vld [vmem:[%s1567 + $0x24] sm:$0xf]
        %v1578 = vld [vmem:[%s1567 + $0x28] sm:$0xf]
        %v1579 = vld [vmem:[%s1567 + $0x2c] sm:$0xf]
        %v1580 = vld [vmem:[%s1567 + $0x30] sm:$0xf]
        %v1581 = vld [vmem:[%s1567 + $0x34] sm:$0xf]
        %v1582 = vld [vmem:[%s1567 + $0x38] sm:$0xf]
        %v1583 = vld [vmem:[%s1567 + $0x3c] sm:$0xf]
        %v1586 = vrot.slane %v1323, 1
        %v1587 = vrot.slane %v1324, 1
        %v1588 = vsel %vm1182, %v1586, %v1587
        %v1607 = vunpack.c.l.b16 %v1568
        %v1608 = vunpack.c.l.b16 %v1569
        %v1609 = vunpack.c.l.b16 %v1570
        %v1610 = vunpack.c.l.b16 %v1571
        %v1611 = vunpack.c.l.b16 %v1572
        %v1612 = vunpack.c.l.b16 %v1573
        %v1613 = vunpack.c.l.b16 %v1574
        %v1614 = vunpack.c.l.b16 %v1575
        %v1615 = vunpack.c.l.b16 %v1576
        %v1616 = vunpack.c.l.b16 %v1577
        %v1617 = vunpack.c.l.b16 %v1578
        %v1618 = vunpack.c.l.b16 %v1579
        %v1619 = vunpack.c.l.b16 %v1580
        %v1620 = vunpack.c.l.b16 %v1581
        %v1621 = vunpack.c.l.b16 %v1582
        %v1622 = vunpack.c.l.b16 %v1583
        %v1623 = vpack.c.b16 %v1608, %v1607
        %v1624 = vpack.c.b16 %v1610, %v1609
        %v1625 = vpack.c.b16 %v1612, %v1611
        %v1626 = vpack.c.b16 %v1614, %v1613
        %v1627 = vpack.c.b16 %v1616, %v1615
        %v1628 = vpack.c.b16 %v1618, %v1617
        %v1629 = vpack.c.b16 %v1620, %v1619
        %v1630 = vpack.c.b16 %v1622, %v1621
        %1639 = vmatprep.subr.bf16.mxu0 0
        %1640 = vmatpush1.bf16.msra.mxu0 %v1623
        %1641 = vmatprep.subr.bf16.mxu0 0
        %1642 = vmatpush1.bf16.msra.mxu0 %v1624
        %1643 = vmatprep.subr.bf16.mxu0 0
        %1644 = vmatpush1.bf16.msra.mxu0 %v1625
        %1645 = vmatprep.subr.bf16.mxu0 0
        %1646 = vmatpush1.bf16.msra.mxu0 %v1626
        %1647 = vmatprep.subr.bf16.mxu0 0
        %1648 = vmatpush1.bf16.msra.mxu0 %v1627
        %1649 = vmatprep.subr.bf16.mxu0 0
        %1650 = vmatpush1.bf16.msra.mxu0 %v1628
        %1651 = vmatprep.subr.bf16.mxu0 0
        %1652 = vmatpush1.bf16.msra.mxu0 %v1629
        %1653 = vmatprep.subr.bf16.mxu0 0
        %1654 = vmatpush1.bf16.msra.mxu0 %v1630
        %1655 = vmatprep.subr.bf16.mxu0 0
        %1656 = vmatpush1.bf16.msra.mxu0 0
        %1657 = vmatprep.subr.bf16.mxu0 0
        %1658 = vmatpush1.bf16.msra.mxu0 0
        %1659 = vmatprep.subr.bf16.mxu0 0
        %1660 = vmatpush1.bf16.msra.mxu0 0
        %1661 = vmatprep.subr.bf16.mxu0 0
        %1662 = vmatpush1.bf16.msra.mxu0 0
        %1663 = vmatprep.subr.bf16.mxu0 0
        %1664 = vmatpush1.bf16.msra.mxu0 0
        %1665 = vmatprep.subr.bf16.mxu0 0
        %1666 = vmatpush1.bf16.msra.mxu0 0
        %1667 = vmatprep.subr.bf16.mxu0 0
        %1668 = vmatpush1.bf16.msra.mxu0 0
        %1669 = vmatprep.subr.bf16.mxu0 0
        %1670 = vmatpush1.bf16.msra.mxu0 0
        %1671 = vmatprep.mubr.bf16.mxu0 0
        %1672 = vmatmul.mubr.bf16.gmra.mrb[0].mxu0 %v1588
        %v1673 = vpop.f32.mrb[0].mxu0
        %v1674 = vadd.f32 0.0, %v1673
        %v1675 = vpop.f32.mrb[0].mxu0
        %v1676 = vpop.f32.mrb[0].mxu0
        %v1677 = vadd.f32 0.0, %v1676
        %v1678 = vpop.f32.mrb[0].mxu0
        %1679 = vmatprep.mubr.bf16.mxu0 0
        %1680 = vmatmul.mubr.bf16.gmra.mrb[0].mxu0 %v1587
        %v1681 = vpop.f32.mrb[0].mxu0
        %v1682 = vadd.f32 0.0, %v1681
        %v1683 = vpop.f32.mrb[0].mxu0
        %v1684 = vpop.f32.mrb[0].mxu0
        %v1685 = vpop.f32.mrb[0].mxu0
        %1686 = vdwg.mxu0
        %v1687 = vadd.f32 %v1554, %v1674
        %v1688 = vadd.f32 %v1557, %v1677
        %v1689 = vadd.f32 %v1562, %v1682
        %v1690 = vld [vmem:[%s6] sm:$0x3]
        %v1691 = vlaneseq
        %v1692 = vshrl.u32 %v1691, 7
        %v1693 = vsub.s32 0, %v1692
        %v1694 = vrot.slane %v1690, %v1693
        %v1695 = vmul.f32 %v1687, %v1694
        %v1696 = vmul.f32 %v1688, %v1694
        %v1697 = vmul.f32 %v1689, %v1694
        %v1698 = vlaneseq
        %v1699 = vshrl.u32 %v1698, 7
        %v1700 = vsub.s32 1, %v1699
        %v1701 = vrot.slane %v1690, %v1700
        %v1702 = vadd.f32 %v1695, %v1701
        %v1703 = vadd.f32 %v1696, %v1701
        %v1704 = vadd.f32 %v1697, %v1701
        %v1705 = vunpack.c.l.bf16 %v918
        %v1706 = vunpack.c.h.bf16 %v918
        %v1707 = vunpack.c.l.bf16 %v919
        %vm1711 = vcmask 1045504
        %v1712 = vrot.slane %v1705, 2
        %v1713 = vrot.slane %v1706, 2
        %v1714 = vsel %vm1711, %v1712, %v1713
        %v1715 = vrot.slane %v1707, 2
        %v1716 = vsel %vm1711, %v1713, %v1715
        %v1720 = vadd.f32 %v1702, %v1714
        %v1721 = vadd.f32 %v1703, %v1716
        %v1722 = vadd.f32 %v1704, %v1715
        %v1723 = vmax.f32 %v1720, 0.0
        %v1724 = vmax.f32 %v1721, 0.0
        %v1725 = vmax.f32 %v1722, 0.0
        %v1726 = vrot.slane %v688, 2
        %v1727 = vrot.slane %v689, 2
        %v1728 = vsel %vm1711, %v1726, %v1727
        %v1729 = vrot.slane %v690, 2
        %v1730 = vsel %vm1711, %v1727, %v1729
        %v1734 = vmul.f32 %v1723, %v1728
        %v1735 = vmul.f32 %v1724, %v1730
        %v1736 = vmul.f32 %v1725, %v1729
        %v1737 = vpack.c.bf16 %v1735, %v1734
        %v1738 = vpack.c.bf16 %v1736, %v1736
        %v1739 = vld [vmem:[#allocation10] sm:$0xf]
        %v1740 = vld [vmem:[#allocation10 + $0x4] sm:$0xf]
        %v1741 = vld [vmem:[#allocation10 + $0x8] sm:$0xf]
        %v1742 = vld [vmem:[#allocation10 + $0xc] sm:$0xf]
        %v1743 = vld [vmem:[#allocation10 + $0x10] sm:$0xf]
        %v1744 = vld [vmem:[#allocation10 + $0x14] sm:$0xf]
        %v1745 = vld [vmem:[#allocation10 + $0x18] sm:$0xf]
        %v1746 = vld [vmem:[#allocation10 + $0x1c] sm:$0xf]
        %v1747 = vld [vmem:[#allocation10 + $0x20] sm:$0xf]
        %v1748 = vld [vmem:[#allocation10 + $0x24] sm:$0xf]
        %v1749 = vld [vmem:[#allocation10 + $0x28] sm:$0xf]
        %v1750 = vld [vmem:[#allocation10 + $0x2c] sm:$0xf]
        %v1751 = vld [vmem:[#allocation10 + $0x30] sm:$0xf]
        %v1752 = vld [vmem:[#allocation10 + $0x34] sm:$0xf]
        %v1753 = vld [vmem:[#allocation10 + $0x38] sm:$0xf]
        %v1754 = vld [vmem:[#allocation10 + $0x3c] sm:$0xf]
        %s1755 = scalar_lea.vmem [#allocation10], 64
        %v1756 = vld [vmem:[%s1755] sm:$0xf]
        %v1757 = vld [vmem:[%s1755 + $0x4] sm:$0xf]
        %v1758 = vld [vmem:[%s1755 + $0x8] sm:$0xf]
        %v1759 = vld [vmem:[%s1755 + $0xc] sm:$0xf]
        %v1760 = vld [vmem:[%s1755 + $0x10] sm:$0xf]
        %v1761 = vld [vmem:[%s1755 + $0x14] sm:$0xf]
        %v1762 = vld [vmem:[%s1755 + $0x18] sm:$0xf]
        %v1763 = vld [vmem:[%s1755 + $0x1c] sm:$0xf]
        %v1764 = vld [vmem:[%s1755 + $0x20] sm:$0xf]
        %v1765 = vld [vmem:[%s1755 + $0x24] sm:$0xf]
        %v1766 = vld [vmem:[%s1755 + $0x28] sm:$0xf]
        %v1767 = vld [vmem:[%s1755 + $0x2c] sm:$0xf]
        %v1768 = vld [vmem:[%s1755 + $0x30] sm:$0xf]
        %v1769 = vld [vmem:[%s1755 + $0x34] sm:$0xf]
        %v1770 = vld [vmem:[%s1755 + $0x38] sm:$0xf]
        %v1771 = vld [vmem:[%s1755 + $0x3c] sm:$0xf]
        %v1773 = vshrl.u32 %v1737, 16
        %v1775 = vshll.u32 %v1737, 16
        %v1777 = vrot.slane %v1775, 1
        %v1778 = vor.u32 %v1773, %v1777
        %v1780 = vshll.u32 %v1738, 16
        %v1782 = vrot.slane %v1780, 1
        %v1783 = vsel %vm953, %v1778, %v1782
        %v1784 = vshrl.u32 %v1738, 16
        %v1786 = vor.u32 %v1784, %v1782
        %v1805 = vunpack.c.l.b16 %v1756
        %v1806 = vunpack.c.l.b16 %v1757
        %v1807 = vunpack.c.l.b16 %v1758
        %v1808 = vunpack.c.l.b16 %v1759
        %v1809 = vunpack.c.l.b16 %v1760
        %v1810 = vunpack.c.l.b16 %v1761
        %v1811 = vunpack.c.l.b16 %v1762
        %v1812 = vunpack.c.l.b16 %v1763
        %v1813 = vunpack.c.l.b16 %v1764
        %v1814 = vunpack.c.l.b16 %v1765
        %v1815 = vunpack.c.l.b16 %v1766
        %v1816 = vunpack.c.l.b16 %v1767
        %v1817 = vunpack.c.l.b16 %v1768
        %v1818 = vunpack.c.l.b16 %v1769
        %v1819 = vunpack.c.l.b16 %v1770
        %v1820 = vunpack.c.l.b16 %v1771
        %v1821 = vpack.c.b16 %v1806, %v1805
        %v1822 = vpack.c.b16 %v1808, %v1807
        %v1823 = vpack.c.b16 %v1810, %v1809
        %v1824 = vpack.c.b16 %v1812, %v1811
        %v1825 = vpack.c.b16 %v1814, %v1813
        %v1826 = vpack.c.b16 %v1816, %v1815
        %v1827 = vpack.c.b16 %v1818, %v1817
        %v1828 = vpack.c.b16 %v1820, %v1819
        %1837 = vmatprep.subr.bf16.mxu0 0
        %1838 = vmatpush1.bf16.msra.mxu0 %v1821
        %1839 = vmatprep.subr.bf16.mxu0 0
        %1840 = vmatpush1.bf16.msra.mxu0 %v1822
        %1841 = vmatprep.subr.bf16.mxu0 0
        %1842 = vmatpush1.bf16.msra.mxu0 %v1823
        %1843 = vmatprep.subr.bf16.mxu0 0
        %1844 = vmatpush1.bf16.msra.mxu0 %v1824
        %1845 = vmatprep.subr.bf16.mxu0 0
        %1846 = vmatpush1.bf16.msra.mxu0 %v1825
        %1847 = vmatprep.subr.bf16.mxu0 0
        %1848 = vmatpush1.bf16.msra.mxu0 %v1826
        %1849 = vmatprep.subr.bf16.mxu0 0
        %1850 = vmatpush1.bf16.msra.mxu0 %v1827
        %1851 = vmatprep.subr.bf16.mxu0 0
        %1852 = vmatpush1.bf16.msra.mxu0 %v1828
        %1853 = vmatprep.subr.bf16.mxu0 0
        %1854 = vmatpush1.bf16.msra.mxu0 0
        %1855 = vmatprep.subr.bf16.mxu0 0
        %1856 = vmatpush1.bf16.msra.mxu0 0
        %1857 = vmatprep.subr.bf16.mxu0 0
        %1858 = vmatpush1.bf16.msra.mxu0 0
        %1859 = vmatprep.subr.bf16.mxu0 0
        %1860 = vmatpush1.bf16.msra.mxu0 0
        %1861 = vmatprep.subr.bf16.mxu0 0
        %1862 = vmatpush1.bf16.msra.mxu0 0
        %1863 = vmatprep.subr.bf16.mxu0 0
        %1864 = vmatpush1.bf16.msra.mxu0 0
        %1865 = vmatprep.subr.bf16.mxu0 0
        %1866 = vmatpush1.bf16.msra.mxu0 0
        %1867 = vmatprep.subr.bf16.mxu0 0
        %1868 = vmatpush1.bf16.msra.mxu0 0
        %1869 = vmatprep.mubr.bf16.mxu0 0
        %1870 = vmatmul.mubr.bf16.gmra.mrb[0].mxu0 %v1783
        %v1871 = vpop.f32.mrb[0].mxu0
        %v1872 = vadd.f32 0.0, %v1871
        %v1873 = vpop.f32.mrb[0].mxu0
        %v1874 = vpop.f32.mrb[0].mxu0
        %v1875 = vadd.f32 0.0, %v1874
        %v1876 = vpop.f32.mrb[0].mxu0
        %1877 = vmatprep.mubr.bf16.mxu0 0
        %1878 = vmatmul.mubr.bf16.gmra.mrb[0].mxu0 %v1786
        %v1879 = vpop.f32.mrb[0].mxu0
        %v1880 = vadd.f32 0.0, %v1879
        %v1881 = vpop.f32.mrb[0].mxu0
        %v1882 = vpop.f32.mrb[0].mxu0
        %v1883 = vpop.f32.mrb[0].mxu0
        %1884 = vdwg.mxu0
        %v1901 = vunpack.c.l.b16 %v1739
        %v1902 = vunpack.c.l.b16 %v1740
        %v1903 = vunpack.c.l.b16 %v1741
        %v1904 = vunpack.c.l.b16 %v1742
        %v1905 = vunpack.c.l.b16 %v1743
        %v1906 = vunpack.c.l.b16 %v1744
        %v1907 = vunpack.c.l.b16 %v1745
        %v1908 = vunpack.c.l.b16 %v1746
        %v1909 = vunpack.c.l.b16 %v1747
        %v1910 = vunpack.c.l.b16 %v1748
        %v1911 = vunpack.c.l.b16 %v1749
        %v1912 = vunpack.c.l.b16 %v1750
        %v1913 = vunpack.c.l.b16 %v1751
        %v1914 = vunpack.c.l.b16 %v1752
        %v1915 = vunpack.c.l.b16 %v1753
        %v1916 = vunpack.c.l.b16 %v1754
        %v1917 = vpack.c.b16 %v1902, %v1901
        %v1918 = vpack.c.b16 %v1904, %v1903
        %v1919 = vpack.c.b16 %v1906, %v1905
        %v1920 = vpack.c.b16 %v1908, %v1907
        %v1921 = vpack.c.b16 %v1910, %v1909
        %v1922 = vpack.c.b16 %v1912, %v1911
        %v1923 = vpack.c.b16 %v1914, %v1913
        %v1924 = vpack.c.b16 %v1916, %v1915
        %1933 = vmatprep.subr.bf16.mxu0 0
        %1934 = vmatpush1.bf16.msra.mxu0 %v1917
        %1935 = vmatprep.subr.bf16.mxu0 0
        %1936 = vmatpush1.bf16.msra.mxu0 %v1918
        %1937 = vmatprep.subr.bf16.mxu0 0
        %1938 = vmatpush1.bf16.msra.mxu0 %v1919
        %1939 = vmatprep.subr.bf16.mxu0 0
        %1940 = vmatpush1.bf16.msra.mxu0 %v1920
        %1941 = vmatprep.subr.bf16.mxu0 0
        %1942 = vmatpush1.bf16.msra.mxu0 %v1921
        %1943 = vmatprep.subr.bf16.mxu0 0
        %1944 = vmatpush1.bf16.msra.mxu0 %v1922
        %1945 = vmatprep.subr.bf16.mxu0 0
        %1946 = vmatpush1.bf16.msra.mxu0 %v1923
        %1947 = vmatprep.subr.bf16.mxu0 0
        %1948 = vmatpush1.bf16.msra.mxu0 %v1924
        %1949 = vmatprep.subr.bf16.mxu0 0
        %1950 = vmatpush1.bf16.msra.mxu0 0
        %1951 = vmatprep.subr.bf16.mxu0 0
        %1952 = vmatpush1.bf16.msra.mxu0 0
        %1953 = vmatprep.subr.bf16.mxu0 0
        %1954 = vmatpush1.bf16.msra.mxu0 0
        %1955 = vmatprep.subr.bf16.mxu0 0
        %1956 = vmatpush1.bf16.msra.mxu0 0
        %1957 = vmatprep.subr.bf16.mxu0 0
        %1958 = vmatpush1.bf16.msra.mxu0 0
        %1959 = vmatprep.subr.bf16.mxu0 0
        %1960 = vmatpush1.bf16.msra.mxu0 0
        %1961 = vmatprep.subr.bf16.mxu0 0
        %1962 = vmatpush1.bf16.msra.mxu0 0
        %1963 = vmatprep.subr.bf16.mxu0 0
        %1964 = vmatpush1.bf16.msra.mxu0 0
        %1965 = vmatprep.mubr.bf16.mxu0 0
        %1966 = vmatmul.mubr.bf16.gmra.mrb[0].mxu0 %v1737
        %v1967 = vpop.f32.mrb[0].mxu0
        %v1968 = vadd.f32 %v1872, %v1967
        %v1969 = vpop.f32.mrb[0].mxu0
        %v1970 = vpop.f32.mrb[0].mxu0
        %v1971 = vadd.f32 %v1875, %v1970
        %v1972 = vpop.f32.mrb[0].mxu0
        %1973 = vmatprep.mubr.bf16.mxu0 0
        %1974 = vmatmul.mubr.bf16.gmra.mrb[0].mxu0 %v1738
        %v1975 = vpop.f32.mrb[0].mxu0
        %v1976 = vadd.f32 %v1880, %v1975
        %v1977 = vpop.f32.mrb[0].mxu0
        %v1978 = vpop.f32.mrb[0].mxu0
        %v1979 = vpop.f32.mrb[0].mxu0
        %1980 = vdwg.mxu0
        %s1981 = scalar_lea.vmem [#allocation10], 128
        %v1982 = vld [vmem:[%s1981] sm:$0xf]
        %v1983 = vld [vmem:[%s1981 + $0x4] sm:$0xf]
        %v1984 = vld [vmem:[%s1981 + $0x8] sm:$0xf]
        %v1985 = vld [vmem:[%s1981 + $0xc] sm:$0xf]
        %v1986 = vld [vmem:[%s1981 + $0x10] sm:$0xf]
        %v1987 = vld [vmem:[%s1981 + $0x14] sm:$0xf]
        %v1988 = vld [vmem:[%s1981 + $0x18] sm:$0xf]
        %v1989 = vld [vmem:[%s1981 + $0x1c] sm:$0xf]
        %v1990 = vld [vmem:[%s1981 + $0x20] sm:$0xf]
        %v1991 = vld [vmem:[%s1981 + $0x24] sm:$0xf]
        %v1992 = vld [vmem:[%s1981 + $0x28] sm:$0xf]
        %v1993 = vld [vmem:[%s1981 + $0x2c] sm:$0xf]
        %v1994 = vld [vmem:[%s1981 + $0x30] sm:$0xf]
        %v1995 = vld [vmem:[%s1981 + $0x34] sm:$0xf]
        %v1996 = vld [vmem:[%s1981 + $0x38] sm:$0xf]
        %v1997 = vld [vmem:[%s1981 + $0x3c] sm:$0xf]
        %v2000 = vrot.slane %v1737, 1
        %v2001 = vrot.slane %v1738, 1
        %v2002 = vsel %vm1182, %v2000, %v2001
        %v2021 = vunpack.c.l.b16 %v1982
        %v2022 = vunpack.c.l.b16 %v1983
        %v2023 = vunpack.c.l.b16 %v1984
        %v2024 = vunpack.c.l.b16 %v1985
        %v2025 = vunpack.c.l.b16 %v1986
        %v2026 = vunpack.c.l.b16 %v1987
        %v2027 = vunpack.c.l.b16 %v1988
        %v2028 = vunpack.c.l.b16 %v1989
        %v2029 = vunpack.c.l.b16 %v1990
        %v2030 = vunpack.c.l.b16 %v1991
        %v2031 = vunpack.c.l.b16 %v1992
        %v2032 = vunpack.c.l.b16 %v1993
        %v2033 = vunpack.c.l.b16 %v1994
        %v2034 = vunpack.c.l.b16 %v1995
        %v2035 = vunpack.c.l.b16 %v1996
        %v2036 = vunpack.c.l.b16 %v1997
        %v2037 = vpack.c.b16 %v2022, %v2021
        %v2038 = vpack.c.b16 %v2024, %v2023
        %v2039 = vpack.c.b16 %v2026, %v2025
        %v2040 = vpack.c.b16 %v2028, %v2027
        %v2041 = vpack.c.b16 %v2030, %v2029
        %v2042 = vpack.c.b16 %v2032, %v2031
        %v2043 = vpack.c.b16 %v2034, %v2033
        %v2044 = vpack.c.b16 %v2036, %v2035
        %2053 = vmatprep.subr.bf16.mxu0 0
        %2054 = vmatpush1.bf16.msra.mxu0 %v2037
        %2055 = vmatprep.subr.bf16.mxu0 0
        %2056 = vmatpush1.bf16.msra.mxu0 %v2038
        %2057 = vmatprep.subr.bf16.mxu0 0
        %2058 = vmatpush1.bf16.msra.mxu0 %v2039
        %2059 = vmatprep.subr.bf16.mxu0 0
        %2060 = vmatpush1.bf16.msra.mxu0 %v2040
        %2061 = vmatprep.subr.bf16.mxu0 0
        %2062 = vmatpush1.bf16.msra.mxu0 %v2041
        %2063 = vmatprep.subr.bf16.mxu0 0
        %2064 = vmatpush1.bf16.msra.mxu0 %v2042
        %2065 = vmatprep.subr.bf16.mxu0 0
        %2066 = vmatpush1.bf16.msra.mxu0 %v2043
        %2067 = vmatprep.subr.bf16.mxu0 0
        %2068 = vmatpush1.bf16.msra.mxu0 %v2044
        %2069 = vmatprep.subr.bf16.mxu0 0
        %2070 = vmatpush1.bf16.msra.mxu0 0
        %2071 = vmatprep.subr.bf16.mxu0 0
        %2072 = vmatpush1.bf16.msra.mxu0 0
        %2073 = vmatprep.subr.bf16.mxu0 0
        %2074 = vmatpush1.bf16.msra.mxu0 0
        %2075 = vmatprep.subr.bf16.mxu0 0
        %2076 = vmatpush1.bf16.msra.mxu0 0
        %2077 = vmatprep.subr.bf16.mxu0 0
        %2078 = vmatpush1.bf16.msra.mxu0 0
        %2079 = vmatprep.subr.bf16.mxu0 0
        %2080 = vmatpush1.bf16.msra.mxu0 0
        %2081 = vmatprep.subr.bf16.mxu0 0
        %2082 = vmatpush1.bf16.msra.mxu0 0
        %2083 = vmatprep.subr.bf16.mxu0 0
        %2084 = vmatpush1.bf16.msra.mxu0 0
        %2085 = vmatprep.mubr.bf16.mxu0 0
        %2086 = vmatmul.mubr.bf16.gmra.mrb[0].mxu0 %v2002
        %v2087 = vpop.f32.mrb[0].mxu0
        %v2088 = vadd.f32 0.0, %v2087
        %v2089 = vpop.f32.mrb[0].mxu0
        %v2090 = vpop.f32.mrb[0].mxu0
        %v2091 = vadd.f32 0.0, %v2090
        %v2092 = vpop.f32.mrb[0].mxu0
        %2093 = vmatprep.mubr.bf16.mxu0 0
        %2094 = vmatmul.mubr.bf16.gmra.mrb[0].mxu0 %v2001
        %v2095 = vpop.f32.mrb[0].mxu0
        %v2096 = vadd.f32 0.0, %v2095
        %v2097 = vpop.f32.mrb[0].mxu0
        %v2098 = vpop.f32.mrb[0].mxu0
        %v2099 = vpop.f32.mrb[0].mxu0
        %2100 = vdwg.mxu0
        %v2101 = vadd.f32 %v1968, %v2088
        %v2102 = vadd.f32 %v1971, %v2091
        %v2103 = vadd.f32 %v1976, %v2096
        %v2104 = vld [vmem:[%s8] sm:$0x3]
        %v2105 = vlaneseq
        %v2106 = vshrl.u32 %v2105, 7
        %v2107 = vsub.s32 0, %v2106
        %v2108 = vrot.slane %v2104, %v2107
        %v2109 = vmul.f32 %v2101, %v2108
        %v2110 = vmul.f32 %v2102, %v2108
        %v2111 = vmul.f32 %v2103, %v2108
        %v2112 = vlaneseq
        %v2113 = vshrl.u32 %v2112, 7
        %v2114 = vsub.s32 1, %v2113
        %v2115 = vrot.slane %v2104, %v2114
        %v2116 = vadd.f32 %v2109, %v2115
        %v2117 = vadd.f32 %v2110, %v2115
        %v2118 = vadd.f32 %v2111, %v2115
        %v2119 = vmax.f32 %v2116, 0.0
        %v2120 = vmax.f32 %v2117, 0.0
        %v2121 = vmax.f32 %v2118, 0.0
        %vm2122 = vcmask 1044480
        %v2123 = vrot.slane %v688, 3
        %v2124 = vrot.slane %v689, 3
        %v2125 = vsel %vm2122, %v2123, %v2124
        %v2126 = vrot.slane %v690, 3
        %v2127 = vsel %vm2122, %v2124, %v2126
        %v2131 = vmul.f32 %v2119, %v2125
        %v2132 = vmul.f32 %v2120, %v2127
        %v2133 = vmul.f32 %v2121, %v2126
        %v2134 = vpack.c.bf16 %v2132, %v2131
        %v2135 = vpack.c.bf16 %v2133, %v2133
        %v2136 = vld [vmem:[#allocation12] sm:$0xf]
        %v2137 = vld [vmem:[#allocation12 + $0x4] sm:$0xf]
        %v2138 = vld [vmem:[#allocation12 + $0x8] sm:$0xf]
        %v2139 = vld [vmem:[#allocation12 + $0xc] sm:$0xf]
        %v2140 = vld [vmem:[#allocation12 + $0x10] sm:$0xf]
        %v2141 = vld [vmem:[#allocation12 + $0x14] sm:$0xf]
        %v2142 = vld [vmem:[#allocation12 + $0x18] sm:$0xf]
        %v2143 = vld [vmem:[#allocation12 + $0x1c] sm:$0xf]
        %v2144 = vld [vmem:[#allocation12 + $0x20] sm:$0xf]
        %v2145 = vld [vmem:[#allocation12 + $0x24] sm:$0xf]
        %v2146 = vld [vmem:[#allocation12 + $0x28] sm:$0xf]
        %v2147 = vld [vmem:[#allocation12 + $0x2c] sm:$0xf]
        %v2148 = vld [vmem:[#allocation12 + $0x30] sm:$0xf]
        %v2149 = vld [vmem:[#allocation12 + $0x34] sm:$0xf]
        %v2150 = vld [vmem:[#allocation12 + $0x38] sm:$0xf]
        %v2151 = vld [vmem:[#allocation12 + $0x3c] sm:$0xf]
        %s2152 = scalar_lea.vmem [#allocation12], 64
        %v2153 = vld [vmem:[%s2152] sm:$0xf]
        %v2154 = vld [vmem:[%s2152 + $0x4] sm:$0xf]
        %v2155 = vld [vmem:[%s2152 + $0x8] sm:$0xf]
        %v2156 = vld [vmem:[%s2152 + $0xc] sm:$0xf]
        %v2157 = vld [vmem:[%s2152 + $0x10] sm:$0xf]
        %v2158 = vld [vmem:[%s2152 + $0x14] sm:$0xf]
        %v2159 = vld [vmem:[%s2152 + $0x18] sm:$0xf]
        %v2160 = vld [vmem:[%s2152 + $0x1c] sm:$0xf]
        %v2161 = vld [vmem:[%s2152 + $0x20] sm:$0xf]
        %v2162 = vld [vmem:[%s2152 + $0x24] sm:$0xf]
        %v2163 = vld [vmem:[%s2152 + $0x28] sm:$0xf]
        %v2164 = vld [vmem:[%s2152 + $0x2c] sm:$0xf]
        %v2165 = vld [vmem:[%s2152 + $0x30] sm:$0xf]
        %v2166 = vld [vmem:[%s2152 + $0x34] sm:$0xf]
        %v2167 = vld [vmem:[%s2152 + $0x38] sm:$0xf]
        %v2168 = vld [vmem:[%s2152 + $0x3c] sm:$0xf]
        %v2170 = vshrl.u32 %v2134, 16
        %v2172 = vshll.u32 %v2134, 16
        %v2174 = vrot.slane %v2172, 1
        %v2175 = vor.u32 %v2170, %v2174
        %v2177 = vshll.u32 %v2135, 16
        %v2179 = vrot.slane %v2177, 1
        %v2180 = vsel %vm953, %v2175, %v2179
        %v2181 = vshrl.u32 %v2135, 16
        %v2183 = vor.u32 %v2181, %v2179
        %v2202 = vunpack.c.l.b16 %v2153
        %v2203 = vunpack.c.l.b16 %v2154
        %v2204 = vunpack.c.l.b16 %v2155
        %v2205 = vunpack.c.l.b16 %v2156
        %v2206 = vunpack.c.l.b16 %v2157
        %v2207 = vunpack.c.l.b16 %v2158
        %v2208 = vunpack.c.l.b16 %v2159
        %v2209 = vunpack.c.l.b16 %v2160
        %v2210 = vunpack.c.l.b16 %v2161
        %v2211 = vunpack.c.l.b16 %v2162
        %v2212 = vunpack.c.l.b16 %v2163
        %v2213 = vunpack.c.l.b16 %v2164
        %v2214 = vunpack.c.l.b16 %v2165
        %v2215 = vunpack.c.l.b16 %v2166
        %v2216 = vunpack.c.l.b16 %v2167
        %v2217 = vunpack.c.l.b16 %v2168
        %v2218 = vpack.c.b16 %v2203, %v2202
        %v2219 = vpack.c.b16 %v2205, %v2204
        %v2220 = vpack.c.b16 %v2207, %v2206
        %v2221 = vpack.c.b16 %v2209, %v2208
        %v2222 = vpack.c.b16 %v2211, %v2210
        %v2223 = vpack.c.b16 %v2213, %v2212
        %v2224 = vpack.c.b16 %v2215, %v2214
        %v2225 = vpack.c.b16 %v2217, %v2216
        %2234 = vmatprep.subr.bf16.mxu0 0
        %2235 = vmatpush1.bf16.msra.mxu0 %v2218
        %2236 = vmatprep.subr.bf16.mxu0 0
        %2237 = vmatpush1.bf16.msra.mxu0 %v2219
        %2238 = vmatprep.subr.bf16.mxu0 0
        %2239 = vmatpush1.bf16.msra.mxu0 %v2220
        %2240 = vmatprep.subr.bf16.mxu0 0
        %2241 = vmatpush1.bf16.msra.mxu0 %v2221
        %2242 = vmatprep.subr.bf16.mxu0 0
        %2243 = vmatpush1.bf16.msra.mxu0 %v2222
        %2244 = vmatprep.subr.bf16.mxu0 0
        %2245 = vmatpush1.bf16.msra.mxu0 %v2223
        %2246 = vmatprep.subr.bf16.mxu0 0
        %2247 = vmatpush1.bf16.msra.mxu0 %v2224
        %2248 = vmatprep.subr.bf16.mxu0 0
        %2249 = vmatpush1.bf16.msra.mxu0 %v2225
        %2250 = vmatprep.subr.bf16.mxu0 0
        %2251 = vmatpush1.bf16.msra.mxu0 0
        %2252 = vmatprep.subr.bf16.mxu0 0
        %2253 = vmatpush1.bf16.msra.mxu0 0
        %2254 = vmatprep.subr.bf16.mxu0 0
        %2255 = vmatpush1.bf16.msra.mxu0 0
        %2256 = vmatprep.subr.bf16.mxu0 0
        %2257 = vmatpush1.bf16.msra.mxu0 0
        %2258 = vmatprep.subr.bf16.mxu0 0
        %2259 = vmatpush1.bf16.msra.mxu0 0
        %2260 = vmatprep.subr.bf16.mxu0 0
        %2261 = vmatpush1.bf16.msra.mxu0 0
        %2262 = vmatprep.subr.bf16.mxu0 0
        %2263 = vmatpush1.bf16.msra.mxu0 0
        %2264 = vmatprep.subr.bf16.mxu0 0
        %2265 = vmatpush1.bf16.msra.mxu0 0
        %2266 = vmatprep.mubr.bf16.mxu0 0
        %2267 = vmatmul.mubr.bf16.gmra.mrb[0].mxu0 %v2180
        %v2268 = vpop.f32.mrb[0].mxu0
        %v2269 = vadd.f32 0.0, %v2268
        %v2270 = vpop.f32.mrb[0].mxu0
        %v2271 = vpop.f32.mrb[0].mxu0
        %v2272 = vadd.f32 0.0, %v2271
        %v2273 = vpop.f32.mrb[0].mxu0
        %2274 = vmatprep.mubr.bf16.mxu0 0
        %2275 = vmatmul.mubr.bf16.gmra.mrb[0].mxu0 %v2183
        %v2276 = vpop.f32.mrb[0].mxu0
        %v2277 = vadd.f32 0.0, %v2276
        %v2278 = vpop.f32.mrb[0].mxu0
        %v2279 = vpop.f32.mrb[0].mxu0
        %v2280 = vpop.f32.mrb[0].mxu0
        %2281 = vdwg.mxu0
        %v2298 = vunpack.c.l.b16 %v2136
        %v2299 = vunpack.c.l.b16 %v2137
        %v2300 = vunpack.c.l.b16 %v2138
        %v2301 = vunpack.c.l.b16 %v2139
        %v2302 = vunpack.c.l.b16 %v2140
        %v2303 = vunpack.c.l.b16 %v2141
        %v2304 = vunpack.c.l.b16 %v2142
        %v2305 = vunpack.c.l.b16 %v2143
        %v2306 = vunpack.c.l.b16 %v2144
        %v2307 = vunpack.c.l.b16 %v2145
        %v2308 = vunpack.c.l.b16 %v2146
        %v2309 = vunpack.c.l.b16 %v2147
        %v2310 = vunpack.c.l.b16 %v2148
        %v2311 = vunpack.c.l.b16 %v2149
        %v2312 = vunpack.c.l.b16 %v2150
        %v2313 = vunpack.c.l.b16 %v2151
        %v2314 = vpack.c.b16 %v2299, %v2298
        %v2315 = vpack.c.b16 %v2301, %v2300
        %v2316 = vpack.c.b16 %v2303, %v2302
        %v2317 = vpack.c.b16 %v2305, %v2304
        %v2318 = vpack.c.b16 %v2307, %v2306
        %v2319 = vpack.c.b16 %v2309, %v2308
        %v2320 = vpack.c.b16 %v2311, %v2310
        %v2321 = vpack.c.b16 %v2313, %v2312
        %2330 = vmatprep.subr.bf16.mxu0 0
        %2331 = vmatpush1.bf16.msra.mxu0 %v2314
        %2332 = vmatprep.subr.bf16.mxu0 0
        %2333 = vmatpush1.bf16.msra.mxu0 %v2315
        %2334 = vmatprep.subr.bf16.mxu0 0
        %2335 = vmatpush1.bf16.msra.mxu0 %v2316
        %2336 = vmatprep.subr.bf16.mxu0 0
        %2337 = vmatpush1.bf16.msra.mxu0 %v2317
        %2338 = vmatprep.subr.bf16.mxu0 0
        %2339 = vmatpush1.bf16.msra.mxu0 %v2318
        %2340 = vmatprep.subr.bf16.mxu0 0
        %2341 = vmatpush1.bf16.msra.mxu0 %v2319
        %2342 = vmatprep.subr.bf16.mxu0 0
        %2343 = vmatpush1.bf16.msra.mxu0 %v2320
        %2344 = vmatprep.subr.bf16.mxu0 0
        %2345 = vmatpush1.bf16.msra.mxu0 %v2321
        %2346 = vmatprep.subr.bf16.mxu0 0
        %2347 = vmatpush1.bf16.msra.mxu0 0
        %2348 = vmatprep.subr.bf16.mxu0 0
        %2349 = vmatpush1.bf16.msra.mxu0 0
        %2350 = vmatprep.subr.bf16.mxu0 0
        %2351 = vmatpush1.bf16.msra.mxu0 0
        %2352 = vmatprep.subr.bf16.mxu0 0
        %2353 = vmatpush1.bf16.msra.mxu0 0
        %2354 = vmatprep.subr.bf16.mxu0 0
        %2355 = vmatpush1.bf16.msra.mxu0 0
        %2356 = vmatprep.subr.bf16.mxu0 0
        %2357 = vmatpush1.bf16.msra.mxu0 0
        %2358 = vmatprep.subr.bf16.mxu0 0
        %2359 = vmatpush1.bf16.msra.mxu0 0
        %2360 = vmatprep.subr.bf16.mxu0 0
        %2361 = vmatpush1.bf16.msra.mxu0 0
        %2362 = vmatprep.mubr.bf16.mxu0 0
        %2363 = vmatmul.mubr.bf16.gmra.mrb[0].mxu0 %v2134
        %v2364 = vpop.f32.mrb[0].mxu0
        %v2365 = vadd.f32 %v2269, %v2364
        %v2366 = vpop.f32.mrb[0].mxu0
        %v2367 = vpop.f32.mrb[0].mxu0
        %v2368 = vadd.f32 %v2272, %v2367
        %v2369 = vpop.f32.mrb[0].mxu0
        %2370 = vmatprep.mubr.bf16.mxu0 0
        %2371 = vmatmul.mubr.bf16.gmra.mrb[0].mxu0 %v2135
        %v2372 = vpop.f32.mrb[0].mxu0
        %v2373 = vadd.f32 %v2277, %v2372
        %v2374 = vpop.f32.mrb[0].mxu0
        %v2375 = vpop.f32.mrb[0].mxu0
        %v2376 = vpop.f32.mrb[0].mxu0
        %2377 = vdwg.mxu0
        %s2378 = scalar_lea.vmem [#allocation12], 128
        %v2379 = vld [vmem:[%s2378] sm:$0xf]
        %v2380 = vld [vmem:[%s2378 + $0x4] sm:$0xf]
        %v2381 = vld [vmem:[%s2378 + $0x8] sm:$0xf]
        %v2382 = vld [vmem:[%s2378 + $0xc] sm:$0xf]
        %v2383 = vld [vmem:[%s2378 + $0x10] sm:$0xf]
        %v2384 = vld [vmem:[%s2378 + $0x14] sm:$0xf]
        %v2385 = vld [vmem:[%s2378 + $0x18] sm:$0xf]
        %v2386 = vld [vmem:[%s2378 + $0x1c] sm:$0xf]
        %v2387 = vld [vmem:[%s2378 + $0x20] sm:$0xf]
        %v2388 = vld [vmem:[%s2378 + $0x24] sm:$0xf]
        %v2389 = vld [vmem:[%s2378 + $0x28] sm:$0xf]
        %v2390 = vld [vmem:[%s2378 + $0x2c] sm:$0xf]
        %v2391 = vld [vmem:[%s2378 + $0x30] sm:$0xf]
        %v2392 = vld [vmem:[%s2378 + $0x34] sm:$0xf]
        %v2393 = vld [vmem:[%s2378 + $0x38] sm:$0xf]
        %v2394 = vld [vmem:[%s2378 + $0x3c] sm:$0xf]
        %v2397 = vrot.slane %v2134, 1
        %v2398 = vrot.slane %v2135, 1
        %v2399 = vsel %vm1182, %v2397, %v2398
        %v2418 = vunpack.c.l.b16 %v2379
        %v2419 = vunpack.c.l.b16 %v2380
        %v2420 = vunpack.c.l.b16 %v2381
        %v2421 = vunpack.c.l.b16 %v2382
        %v2422 = vunpack.c.l.b16 %v2383
        %v2423 = vunpack.c.l.b16 %v2384
        %v2424 = vunpack.c.l.b16 %v2385
        %v2425 = vunpack.c.l.b16 %v2386
        %v2426 = vunpack.c.l.b16 %v2387
        %v2427 = vunpack.c.l.b16 %v2388
        %v2428 = vunpack.c.l.b16 %v2389
        %v2429 = vunpack.c.l.b16 %v2390
        %v2430 = vunpack.c.l.b16 %v2391
        %v2431 = vunpack.c.l.b16 %v2392
        %v2432 = vunpack.c.l.b16 %v2393
        %v2433 = vunpack.c.l.b16 %v2394
        %v2434 = vpack.c.b16 %v2419, %v2418
        %v2435 = vpack.c.b16 %v2421, %v2420
        %v2436 = vpack.c.b16 %v2423, %v2422
        %v2437 = vpack.c.b16 %v2425, %v2424
        %v2438 = vpack.c.b16 %v2427, %v2426
        %v2439 = vpack.c.b16 %v2429, %v2428
        %v2440 = vpack.c.b16 %v2431, %v2430
        %v2441 = vpack.c.b16 %v2433, %v2432
        %2450 = vmatprep.subr.bf16.mxu0 0
        %2451 = vmatpush1.bf16.msra.mxu0 %v2434
        %2452 = vmatprep.subr.bf16.mxu0 0
        %2453 = vmatpush1.bf16.msra.mxu0 %v2435
        %2454 = vmatprep.subr.bf16.mxu0 0
        %2455 = vmatpush1.bf16.msra.mxu0 %v2436
        %2456 = vmatprep.subr.bf16.mxu0 0
        %2457 = vmatpush1.bf16.msra.mxu0 %v2437
        %2458 = vmatprep.subr.bf16.mxu0 0
        %2459 = vmatpush1.bf16.msra.mxu0 %v2438
        %2460 = vmatprep.subr.bf16.mxu0 0
        %2461 = vmatpush1.bf16.msra.mxu0 %v2439
        %2462 = vmatprep.subr.bf16.mxu0 0
        %2463 = vmatpush1.bf16.msra.mxu0 %v2440
        %2464 = vmatprep.subr.bf16.mxu0 0
        %2465 = vmatpush1.bf16.msra.mxu0 %v2441
        %2466 = vmatprep.subr.bf16.mxu0 0
        %2467 = vmatpush1.bf16.msra.mxu0 0
        %2468 = vmatprep.subr.bf16.mxu0 0
        %2469 = vmatpush1.bf16.msra.mxu0 0
        %2470 = vmatprep.subr.bf16.mxu0 0
        %2471 = vmatpush1.bf16.msra.mxu0 0
        %2472 = vmatprep.subr.bf16.mxu0 0
        %2473 = vmatpush1.bf16.msra.mxu0 0
        %2474 = vmatprep.subr.bf16.mxu0 0
        %2475 = vmatpush1.bf16.msra.mxu0 0
        %2476 = vmatprep.subr.bf16.mxu0 0
        %2477 = vmatpush1.bf16.msra.mxu0 0
        %2478 = vmatprep.subr.bf16.mxu0 0
        %2479 = vmatpush1.bf16.msra.mxu0 0
        %2480 = vmatprep.subr.bf16.mxu0 0
        %2481 = vmatpush1.bf16.msra.mxu0 0
        %2482 = vmatprep.mubr.bf16.mxu0 0
        %2483 = vmatmul.mubr.bf16.gmra.mrb[0].mxu0 %v2399
        %v2484 = vpop.f32.mrb[0].mxu0
        %v2485 = vadd.f32 0.0, %v2484
        %v2486 = vpop.f32.mrb[0].mxu0
        %v2487 = vpop.f32.mrb[0].mxu0
        %v2488 = vadd.f32 0.0, %v2487
        %v2489 = vpop.f32.mrb[0].mxu0
        %2490 = vmatprep.mubr.bf16.mxu0 0
        %2491 = vmatmul.mubr.bf16.gmra.mrb[0].mxu0 %v2398
        %v2492 = vpop.f32.mrb[0].mxu0
        %v2493 = vadd.f32 0.0, %v2492
        %v2494 = vpop.f32.mrb[0].mxu0
        %v2495 = vpop.f32.mrb[0].mxu0
        %v2496 = vpop.f32.mrb[0].mxu0
        %2497 = vdwg.mxu0
        %v2498 = vadd.f32 %v2365, %v2485
        %v2499 = vadd.f32 %v2368, %v2488
        %v2500 = vadd.f32 %v2373, %v2493
        %v2501 = vld [vmem:[%s10] sm:$0x3]
        %v2502 = vlaneseq
        %v2503 = vshrl.u32 %v2502, 7
        %v2504 = vsub.s32 0, %v2503
        %v2505 = vrot.slane %v2501, %v2504
        %v2506 = vmul.f32 %v2498, %v2505
        %v2507 = vmul.f32 %v2499, %v2505
        %v2508 = vmul.f32 %v2500, %v2505
        %v2509 = vlaneseq
        %v2510 = vshrl.u32 %v2509, 7
        %v2511 = vsub.s32 1, %v2510
        %v2512 = vrot.slane %v2501, %v2511
        %v2513 = vadd.f32 %v2506, %v2512
        %v2514 = vadd.f32 %v2507, %v2512
        %v2515 = vadd.f32 %v2508, %v2512
        %v2516 = vunpack.c.l.bf16 %v1737
        %v2517 = vunpack.c.h.bf16 %v1737
        %v2518 = vunpack.c.l.bf16 %v1738
        %v2522 = vrot.slane %v2516, 2
        %v2523 = vrot.slane %v2517, 2
        %v2524 = vsel %vm1711, %v2522, %v2523
        %v2525 = vrot.slane %v2518, 2
        %v2526 = vsel %vm1711, %v2523, %v2525
        %v2530 = vadd.f32 %v2513, %v2524
        %v2531 = vadd.f32 %v2514, %v2526
        %v2532 = vadd.f32 %v2515, %v2525
        %v2533 = vmax.f32 %v2530, 0.0
        %v2534 = vmax.f32 %v2531, 0.0
        %v2535 = vmax.f32 %v2532, 0.0
        %v2536 = vpack.c.bf16 %v2534, %v2533
        %v2537 = vpack.c.bf16 %v2535, %v2535
        %v2538 = vld [vmem:[#allocation13] sm:$0xf]
        %v2539 = vld [vmem:[#allocation13 + $0x4] sm:$0xf]
        %v2540 = vld [vmem:[#allocation13 + $0x8] sm:$0xf]
        %v2541 = vld [vmem:[#allocation13 + $0xc] sm:$0xf]
        %v2542 = vld [vmem:[#allocation13 + $0x10] sm:$0xf]
        %v2543 = vld [vmem:[#allocation13 + $0x14] sm:$0xf]
        %v2544 = vld [vmem:[#allocation13 + $0x18] sm:$0xf]
        %v2545 = vld [vmem:[#allocation13 + $0x1c] sm:$0xf]
        %v2546 = vld [vmem:[#allocation13 + $0x20] sm:$0xf]
        %v2547 = vld [vmem:[#allocation13 + $0x24] sm:$0xf]
        %v2548 = vld [vmem:[#allocation13 + $0x28] sm:$0xf]
        %v2549 = vld [vmem:[#allocation13 + $0x2c] sm:$0xf]
        %v2550 = vld [vmem:[#allocation13 + $0x30] sm:$0xf]
        %v2551 = vld [vmem:[#allocation13 + $0x34] sm:$0xf]
        %v2552 = vld [vmem:[#allocation13 + $0x38] sm:$0xf]
        %v2553 = vld [vmem:[#allocation13 + $0x3c] sm:$0xf]
        %v2570 = vunpack.c.l.b16 %v2538
        %v2571 = vunpack.c.l.b16 %v2539
        %v2572 = vunpack.c.l.b16 %v2540
        %v2573 = vunpack.c.l.b16 %v2541
        %v2574 = vunpack.c.l.b16 %v2542
        %v2575 = vunpack.c.l.b16 %v2543
        %v2576 = vunpack.c.l.b16 %v2544
        %v2577 = vunpack.c.l.b16 %v2545
        %v2578 = vunpack.c.l.b16 %v2546
        %v2579 = vunpack.c.l.b16 %v2547
        %v2580 = vunpack.c.l.b16 %v2548
        %v2581 = vunpack.c.l.b16 %v2549
        %v2582 = vunpack.c.l.b16 %v2550
        %v2583 = vunpack.c.l.b16 %v2551
        %v2584 = vunpack.c.l.b16 %v2552
        %v2585 = vunpack.c.l.b16 %v2553
        %v2586 = vpack.c.b16 %v2571, %v2570
        %v2587 = vpack.c.b16 %v2573, %v2572
        %v2588 = vpack.c.b16 %v2575, %v2574
        %v2589 = vpack.c.b16 %v2577, %v2576
        %v2590 = vpack.c.b16 %v2579, %v2578
        %v2591 = vpack.c.b16 %v2581, %v2580
        %v2592 = vpack.c.b16 %v2583, %v2582
        %v2593 = vpack.c.b16 %v2585, %v2584
        %2602 = vmatprep.subr.bf16.mxu0 0
        %2603 = vmatpush1.bf16.msra.mxu0 %v2586
        %2604 = vmatprep.subr.bf16.mxu0 0
        %2605 = vmatpush1.bf16.msra.mxu0 %v2587
        %2606 = vmatprep.subr.bf16.mxu0 0
        %2607 = vmatpush1.bf16.msra.mxu0 %v2588
        %2608 = vmatprep.subr.bf16.mxu0 0
        %2609 = vmatpush1.bf16.msra.mxu0 %v2589
        %2610 = vmatprep.subr.bf16.mxu0 0
        %2611 = vmatpush1.bf16.msra.mxu0 %v2590
        %2612 = vmatprep.subr.bf16.mxu0 0
        %2613 = vmatpush1.bf16.msra.mxu0 %v2591
        %2614 = vmatprep.subr.bf16.mxu0 0
        %2615 = vmatpush1.bf16.msra.mxu0 %v2592
        %2616 = vmatprep.subr.bf16.mxu0 0
        %2617 = vmatpush1.bf16.msra.mxu0 %v2593
        %2618 = vmatprep.subr.bf16.mxu0 0
        %2619 = vmatpush1.bf16.msra.mxu0 0
        %2620 = vmatprep.subr.bf16.mxu0 0
        %2621 = vmatpush1.bf16.msra.mxu0 0
        %2622 = vmatprep.subr.bf16.mxu0 0
        %2623 = vmatpush1.bf16.msra.mxu0 0
        %2624 = vmatprep.subr.bf16.mxu0 0
        %2625 = vmatpush1.bf16.msra.mxu0 0
        %2626 = vmatprep.subr.bf16.mxu0 0
        %2627 = vmatpush1.bf16.msra.mxu0 0
        %2628 = vmatprep.subr.bf16.mxu0 0
        %2629 = vmatpush1.bf16.msra.mxu0 0
        %2630 = vmatprep.subr.bf16.mxu0 0
        %2631 = vmatpush1.bf16.msra.mxu0 0
        %2632 = vmatprep.subr.bf16.mxu0 0
        %2633 = vmatpush1.bf16.msra.mxu0 0
        %2634 = vmatprep.mubr.bf16.mxu0 0
        %2635 = vmatmul.mubr.bf16.gmra.mrb[0].mxu0 %v2536
        %v2636 = vpop.f32.mrb[0].mxu0
        %v2637 = vadd.f32 0.0, %v2636
        %v2638 = vpop.f32.mrb[0].mxu0
        %v2639 = vpop.f32.mrb[0].mxu0
        %v2640 = vadd.f32 0.0, %v2639
        %v2641 = vpop.f32.mrb[0].mxu0
        %2642 = vmatprep.mubr.bf16.mxu0 0
        %2643 = vmatmul.mubr.bf16.gmra.mrb[0].mxu0 %v2537
        %v2644 = vpop.f32.mrb[0].mxu0
        %v2645 = vadd.f32 0.0, %v2644
        %v2646 = vpop.f32.mrb[0].mxu0
        %v2647 = vpop.f32.mrb[0].mxu0
        %v2648 = vpop.f32.mrb[0].mxu0
        %2649 = vdwg.mxu0
        %v2650 = vld [vmem:[%s12] sm:$0x3]
        %v2651 = vlaneseq
        %v2652 = vshrl.u32 %v2651, 7
        %v2653 = vsub.s32 0, %v2652
        %v2654 = vrot.slane %v2650, %v2653
        %v2655 = vmul.f32 %v2637, %v2654
        %v2656 = vmul.f32 %v2640, %v2654
        %v2657 = vmul.f32 %v2645, %v2654
        %v2658 = vlaneseq
        %v2659 = vshrl.u32 %v2658, 7
        %v2660 = vsub.s32 1, %v2659
        %v2661 = vrot.slane %v2650, %v2660
        %v2662 = vadd.f32 %v2655, %v2661
        %v2663 = vadd.f32 %v2656, %v2661
        %v2664 = vadd.f32 %v2657, %v2661
        %v2665 = vmax.f32 %v2662, 0.0
        %v2666 = vmax.f32 %v2663, 0.0
        %v2667 = vmax.f32 %v2664, 0.0
        %vm2668 = vcmask 1043456
        %v2669 = vrot.slane %v688, 4
        %v2670 = vrot.slane %v689, 4
        %v2671 = vsel %vm2668, %v2669, %v2670
        %v2672 = vrot.slane %v690, 4
        %v2673 = vsel %vm2668, %v2670, %v2672
        %v2677 = vmul.f32 %v2665, %v2671
        %v2678 = vmul.f32 %v2666, %v2673
        %v2679 = vmul.f32 %v2667, %v2672
        %v2680 = vpack.c.bf16 %v2678, %v2677
        %v2681 = vpack.c.bf16 %v2679, %v2679
        %v2682 = vld [vmem:[#allocation15] sm:$0xf]
        %v2683 = vld [vmem:[#allocation15 + $0x4] sm:$0xf]
        %v2684 = vld [vmem:[#allocation15 + $0x8] sm:$0xf]
        %v2685 = vld [vmem:[#allocation15 + $0xc] sm:$0xf]
        %v2686 = vld [vmem:[#allocation15 + $0x10] sm:$0xf]
        %v2687 = vld [vmem:[#allocation15 + $0x14] sm:$0xf]
        %v2688 = vld [vmem:[#allocation15 + $0x18] sm:$0xf]
        %v2689 = vld [vmem:[#allocation15 + $0x1c] sm:$0xf]
        %v2690 = vld [vmem:[#allocation15 + $0x20] sm:$0xf]
        %v2691 = vld [vmem:[#allocation15 + $0x24] sm:$0xf]
        %v2692 = vld [vmem:[#allocation15 + $0x28] sm:$0xf]
        %v2693 = vld [vmem:[#allocation15 + $0x2c] sm:$0xf]
        %v2694 = vld [vmem:[#allocation15 + $0x30] sm:$0xf]
        %v2695 = vld [vmem:[#allocation15 + $0x34] sm:$0xf]
        %v2696 = vld [vmem:[#allocation15 + $0x38] sm:$0xf]
        %v2697 = vld [vmem:[#allocation15 + $0x3c] sm:$0xf]
        %v2698 = vld [vmem:[#allocation16] sm:$0xf]
        %v2699 = vld [vmem:[#allocation16 + $0x4] sm:$0xf]
        %v2700 = vld [vmem:[#allocation16 + $0x8] sm:$0xf]
        %v2701 = vld [vmem:[#allocation16 + $0xc] sm:$0xf]
        %v2702 = vld [vmem:[#allocation16 + $0x10] sm:$0xf]
        %v2703 = vld [vmem:[#allocation16 + $0x14] sm:$0xf]
        %v2704 = vld [vmem:[#allocation16 + $0x18] sm:$0xf]
        %v2705 = vld [vmem:[#allocation16 + $0x1c] sm:$0xf]
        %v2706 = vld [vmem:[#allocation16 + $0x20] sm:$0xf]
        %v2707 = vld [vmem:[#allocation16 + $0x24] sm:$0xf]
        %v2708 = vld [vmem:[#allocation16 + $0x28] sm:$0xf]
        %v2709 = vld [vmem:[#allocation16 + $0x2c] sm:$0xf]
        %v2710 = vld [vmem:[#allocation16 + $0x30] sm:$0xf]
        %v2711 = vld [vmem:[#allocation16 + $0x34] sm:$0xf]
        %v2712 = vld [vmem:[#allocation16 + $0x38] sm:$0xf]
        %v2713 = vld [vmem:[#allocation16 + $0x3c] sm:$0xf]
        %v2730 = vunpack.c.l.b16 %v2698
        %v2731 = vunpack.c.l.b16 %v2699
        %v2732 = vunpack.c.l.b16 %v2700
        %v2733 = vunpack.c.l.b16 %v2701
        %v2734 = vunpack.c.l.b16 %v2702
        %v2735 = vunpack.c.l.b16 %v2703
        %v2736 = vunpack.c.l.b16 %v2704
        %v2737 = vunpack.c.l.b16 %v2705
        %v2738 = vunpack.c.l.b16 %v2706
        %v2739 = vunpack.c.l.b16 %v2707
        %v2740 = vunpack.c.l.b16 %v2708
        %v2741 = vunpack.c.l.b16 %v2709
        %v2742 = vunpack.c.l.b16 %v2710
        %v2743 = vunpack.c.l.b16 %v2711
        %v2744 = vunpack.c.l.b16 %v2712
        %v2745 = vunpack.c.l.b16 %v2713
        %v2746 = vpack.c.b16 %v2731, %v2730
        %v2747 = vpack.c.b16 %v2733, %v2732
        %v2748 = vpack.c.b16 %v2735, %v2734
        %v2749 = vpack.c.b16 %v2737, %v2736
        %v2750 = vpack.c.b16 %v2739, %v2738
        %v2751 = vpack.c.b16 %v2741, %v2740
        %v2752 = vpack.c.b16 %v2743, %v2742
        %v2753 = vpack.c.b16 %v2745, %v2744
        %2762 = vmatprep.subr.bf16.mxu0 0
        %2763 = vmatpush1.bf16.msra.mxu0 %v2746
        %2764 = vmatprep.subr.bf16.mxu0 0
        %2765 = vmatpush1.bf16.msra.mxu0 %v2747
        %2766 = vmatprep.subr.bf16.mxu0 0
        %2767 = vmatpush1.bf16.msra.mxu0 %v2748
        %2768 = vmatprep.subr.bf16.mxu0 0
        %2769 = vmatpush1.bf16.msra.mxu0 %v2749
        %2770 = vmatprep.subr.bf16.mxu0 0
        %2771 = vmatpush1.bf16.msra.mxu0 %v2750
        %2772 = vmatprep.subr.bf16.mxu0 0
        %2773 = vmatpush1.bf16.msra.mxu0 %v2751
        %2774 = vmatprep.subr.bf16.mxu0 0
        %2775 = vmatpush1.bf16.msra.mxu0 %v2752
        %2776 = vmatprep.subr.bf16.mxu0 0
        %2777 = vmatpush1.bf16.msra.mxu0 %v2753
        %2778 = vmatprep.subr.bf16.mxu0 0
        %2779 = vmatpush1.bf16.msra.mxu0 0
        %2780 = vmatprep.subr.bf16.mxu0 0
        %2781 = vmatpush1.bf16.msra.mxu0 0
        %2782 = vmatprep.subr.bf16.mxu0 0
        %2783 = vmatpush1.bf16.msra.mxu0 0
        %2784 = vmatprep.subr.bf16.mxu0 0
        %2785 = vmatpush1.bf16.msra.mxu0 0
        %2786 = vmatprep.subr.bf16.mxu0 0
        %2787 = vmatpush1.bf16.msra.mxu0 0
        %2788 = vmatprep.subr.bf16.mxu0 0
        %2789 = vmatpush1.bf16.msra.mxu0 0
        %2790 = vmatprep.subr.bf16.mxu0 0
        %2791 = vmatpush1.bf16.msra.mxu0 0
        %2792 = vmatprep.subr.bf16.mxu0 0
        %2793 = vmatpush1.bf16.msra.mxu0 0
        %2794 = vmatprep.mubr.bf16.mxu0 0
        %2795 = vmatmul.mubr.bf16.gmra.mrb[0].mxu0 %v2680
        %v2796 = vpop.f32.mrb[0].mxu0
        %v2797 = vadd.f32 0.0, %v2796
        %v2798 = vpop.f32.mrb[0].mxu0
        %v2799 = vpop.f32.mrb[0].mxu0
        %v2800 = vadd.f32 0.0, %v2799
        %v2801 = vpop.f32.mrb[0].mxu0
        %2802 = vdwg.mxu0
        %vm2805 = vcmask 1045504
        %v2806 = vrot.slane %v916, 2
        %v2807 = vrot.slane %v917, 2
        %v2808 = vsel %vm2805, %v2806, %v2807
        %v2826 = vunpack.c.l.b16 %v2682
        %v2827 = vunpack.c.l.b16 %v2683
        %v2828 = vunpack.c.l.b16 %v2684
        %v2829 = vunpack.c.l.b16 %v2685
        %v2830 = vunpack.c.l.b16 %v2686
        %v2831 = vunpack.c.l.b16 %v2687
        %v2832 = vunpack.c.l.b16 %v2688
        %v2833 = vunpack.c.l.b16 %v2689
        %v2834 = vunpack.c.l.b16 %v2690
        %v2835 = vunpack.c.l.b16 %v2691
        %v2836 = vunpack.c.l.b16 %v2692
        %v2837 = vunpack.c.l.b16 %v2693
        %v2838 = vunpack.c.l.b16 %v2694
        %v2839 = vunpack.c.l.b16 %v2695
        %v2840 = vunpack.c.l.b16 %v2696
        %v2841 = vunpack.c.l.b16 %v2697
        %v2842 = vpack.c.b16 %v2827, %v2826
        %v2843 = vpack.c.b16 %v2829, %v2828
        %v2844 = vpack.c.b16 %v2831, %v2830
        %v2845 = vpack.c.b16 %v2833, %v2832
        %v2846 = vpack.c.b16 %v2835, %v2834
        %v2847 = vpack.c.b16 %v2837, %v2836
        %v2848 = vpack.c.b16 %v2839, %v2838
        %v2849 = vpack.c.b16 %v2841, %v2840
        %2858 = vmatprep.subr.bf16.mxu0 0
        %2859 = vmatpush1.bf16.msra.mxu0 %v2842
        %2860 = vmatprep.subr.bf16.mxu0 0
        %2861 = vmatpush1.bf16.msra.mxu0 %v2843
        %2862 = vmatprep.subr.bf16.mxu0 0
        %2863 = vmatpush1.bf16.msra.mxu0 %v2844
        %2864 = vmatprep.subr.bf16.mxu0 0
        %2865 = vmatpush1.bf16.msra.mxu0 %v2845
        %2866 = vmatprep.subr.bf16.mxu0 0
        %2867 = vmatpush1.bf16.msra.mxu0 %v2846
        %2868 = vmatprep.subr.bf16.mxu0 0
        %2869 = vmatpush1.bf16.msra.mxu0 %v2847
        %2870 = vmatprep.subr.bf16.mxu0 0
        %2871 = vmatpush1.bf16.msra.mxu0 %v2848
        %2872 = vmatprep.subr.bf16.mxu0 0
        %2873 = vmatpush1.bf16.msra.mxu0 %v2849
        %2874 = vmatprep.subr.bf16.mxu0 0
        %2875 = vmatpush1.bf16.msra.mxu0 0
        %2876 = vmatprep.subr.bf16.mxu0 0
        %2877 = vmatpush1.bf16.msra.mxu0 0
        %2878 = vmatprep.subr.bf16.mxu0 0
        %2879 = vmatpush1.bf16.msra.mxu0 0
        %2880 = vmatprep.subr.bf16.mxu0 0
        %2881 = vmatpush1.bf16.msra.mxu0 0
        %2882 = vmatprep.subr.bf16.mxu0 0
        %2883 = vmatpush1.bf16.msra.mxu0 0
        %2884 = vmatprep.subr.bf16.mxu0 0
        %2885 = vmatpush1.bf16.msra.mxu0 0
        %2886 = vmatprep.subr.bf16.mxu0 0
        %2887 = vmatpush1.bf16.msra.mxu0 0
        %2888 = vmatprep.subr.bf16.mxu0 0
        %2889 = vmatpush1.bf16.msra.mxu0 0
        %2890 = vmatprep.mubr.bf16.mxu0 0
        %2891 = vmatmul.mubr.bf16.gmra.mrb[0].mxu0 %v2808
        %v2892 = vpop.f32.mrb[0].mxu0
        %v2893 = vadd.f32 %v2797, %v2892
        %v2894 = vpop.f32.mrb[0].mxu0
        %v2895 = vpop.f32.mrb[0].mxu0
        %v2896 = vadd.f32 %v2800, %v2895
        %v2897 = vpop.f32.mrb[0].mxu0
        %2898 = vdwg.mxu0
        %s2899 = scalar_lea.vmem [#allocation15], 64
        %v2900 = vld [vmem:[%s2899] sm:$0xf]
        %v2901 = vld [vmem:[%s2899 + $0x4] sm:$0xf]
        %v2902 = vld [vmem:[%s2899 + $0x8] sm:$0xf]
        %v2903 = vld [vmem:[%s2899 + $0xc] sm:$0xf]
        %v2904 = vld [vmem:[%s2899 + $0x10] sm:$0xf]
        %v2905 = vld [vmem:[%s2899 + $0x14] sm:$0xf]
        %v2906 = vld [vmem:[%s2899 + $0x18] sm:$0xf]
        %v2907 = vld [vmem:[%s2899 + $0x1c] sm:$0xf]
        %v2908 = vld [vmem:[%s2899 + $0x20] sm:$0xf]
        %v2909 = vld [vmem:[%s2899 + $0x24] sm:$0xf]
        %v2910 = vld [vmem:[%s2899 + $0x28] sm:$0xf]
        %v2911 = vld [vmem:[%s2899 + $0x2c] sm:$0xf]
        %v2912 = vld [vmem:[%s2899 + $0x30] sm:$0xf]
        %v2913 = vld [vmem:[%s2899 + $0x34] sm:$0xf]
        %v2914 = vld [vmem:[%s2899 + $0x38] sm:$0xf]
        %v2915 = vld [vmem:[%s2899 + $0x3c] sm:$0xf]
        %vm2916 = vsmask.f32 5376
        %v2918 = vshrl.u32 %v916, 16
        %v2920 = vrot.slane %v2918, 2
        %v2921 = vshll.u32 %v916, 16
        %v2923 = vrot.slane %v2921, 3
        %v2924 = vor.u32 %v2920, %v2923
        %v2926 = vshrl.u32 %v917, 16
        %v2928 = vrot.slane %v2926, 2
        %v2929 = vshll.u32 %v917, 16
        %v2931 = vrot.slane %v2929, 3
        %v2932 = vor.u32 %v2928, %v2931
        %v2933 = vsel %vm2916, %v2924, %v2932
        %v2951 = vunpack.c.l.b16 %v2900
        %v2952 = vunpack.c.l.b16 %v2901
        %v2953 = vunpack.c.l.b16 %v2902
        %v2954 = vunpack.c.l.b16 %v2903
        %v2955 = vunpack.c.l.b16 %v2904
        %v2956 = vunpack.c.l.b16 %v2905
        %v2957 = vunpack.c.l.b16 %v2906
        %v2958 = vunpack.c.l.b16 %v2907
        %v2959 = vunpack.c.l.b16 %v2908
        %v2960 = vunpack.c.l.b16 %v2909
        %v2961 = vunpack.c.l.b16 %v2910
        %v2962 = vunpack.c.l.b16 %v2911
        %v2963 = vunpack.c.l.b16 %v2912
        %v2964 = vunpack.c.l.b16 %v2913
        %v2965 = vunpack.c.l.b16 %v2914
        %v2966 = vunpack.c.l.b16 %v2915
        %v2967 = vpack.c.b16 %v2952, %v2951
        %v2968 = vpack.c.b16 %v2954, %v2953
        %v2969 = vpack.c.b16 %v2956, %v2955
        %v2970 = vpack.c.b16 %v2958, %v2957
        %v2971 = vpack.c.b16 %v2960, %v2959
        %v2972 = vpack.c.b16 %v2962, %v2961
        %v2973 = vpack.c.b16 %v2964, %v2963
        %v2974 = vpack.c.b16 %v2966, %v2965
        %2983 = vmatprep.subr.bf16.mxu0 0
        %2984 = vmatpush1.bf16.msra.mxu0 %v2967
        %2985 = vmatprep.subr.bf16.mxu0 0
        %2986 = vmatpush1.bf16.msra.mxu0 %v2968
        %2987 = vmatprep.subr.bf16.mxu0 0
        %2988 = vmatpush1.bf16.msra.mxu0 %v2969
        %2989 = vmatprep.subr.bf16.mxu0 0
        %2990 = vmatpush1.bf16.msra.mxu0 %v2970
        %2991 = vmatprep.subr.bf16.mxu0 0
        %2992 = vmatpush1.bf16.msra.mxu0 %v2971
        %2993 = vmatprep.subr.bf16.mxu0 0
        %2994 = vmatpush1.bf16.msra.mxu0 %v2972
        %2995 = vmatprep.subr.bf16.mxu0 0
        %2996 = vmatpush1.bf16.msra.mxu0 %v2973
        %2997 = vmatprep.subr.bf16.mxu0 0
        %2998 = vmatpush1.bf16.msra.mxu0 %v2974
        %2999 = vmatprep.subr.bf16.mxu0 0
        %3000 = vmatpush1.bf16.msra.mxu0 0
        %3001 = vmatprep.subr.bf16.mxu0 0
        %3002 = vmatpush1.bf16.msra.mxu0 0
        %3003 = vmatprep.subr.bf16.mxu0 0
        %3004 = vmatpush1.bf16.msra.mxu0 0
        %3005 = vmatprep.subr.bf16.mxu0 0
        %3006 = vmatpush1.bf16.msra.mxu0 0
        %3007 = vmatprep.subr.bf16.mxu0 0
        %3008 = vmatpush1.bf16.msra.mxu0 0
        %3009 = vmatprep.subr.bf16.mxu0 0
        %3010 = vmatpush1.bf16.msra.mxu0 0
        %3011 = vmatprep.subr.bf16.mxu0 0
        %3012 = vmatpush1.bf16.msra.mxu0 0
        %3013 = vmatprep.subr.bf16.mxu0 0
        %3014 = vmatpush1.bf16.msra.mxu0 0
        %3015 = vmatprep.mubr.bf16.mxu0 0
        %3016 = vmatmul.mubr.bf16.gmra.mrb[0].mxu0 %v2933
        %v3017 = vpop.f32.mrb[0].mxu0
        %v3018 = vadd.f32 0.0, %v3017
        %v3019 = vpop.f32.mrb[0].mxu0
        %v3020 = vpop.f32.mrb[0].mxu0
        %v3021 = vadd.f32 0.0, %v3020
        %v3022 = vpop.f32.mrb[0].mxu0
        %3023 = vdwg.mxu0
        %v3024 = vadd.f32 %v2893, %v3018
        %v3025 = vadd.f32 %v2896, %v3021
        %s3026 = scalar_lea.vmem [#allocation16], 64
        %v3027 = vld [vmem:[%s3026] sm:$0xf]
        %v3028 = vld [vmem:[%s3026 + $0x4] sm:$0xf]
        %v3029 = vld [vmem:[%s3026 + $0x8] sm:$0xf]
        %v3030 = vld [vmem:[%s3026 + $0xc] sm:$0xf]
        %v3031 = vld [vmem:[%s3026 + $0x10] sm:$0xf]
        %v3032 = vld [vmem:[%s3026 + $0x14] sm:$0xf]
        %v3033 = vld [vmem:[%s3026 + $0x18] sm:$0xf]
        %v3034 = vld [vmem:[%s3026 + $0x1c] sm:$0xf]
        %v3035 = vld [vmem:[%s3026 + $0x20] sm:$0xf]
        %v3036 = vld [vmem:[%s3026 + $0x24] sm:$0xf]
        %v3037 = vld [vmem:[%s3026 + $0x28] sm:$0xf]
        %v3038 = vld [vmem:[%s3026 + $0x2c] sm:$0xf]
        %v3039 = vld [vmem:[%s3026 + $0x30] sm:$0xf]
        %v3040 = vld [vmem:[%s3026 + $0x34] sm:$0xf]
        %v3041 = vld [vmem:[%s3026 + $0x38] sm:$0xf]
        %v3042 = vld [vmem:[%s3026 + $0x3c] sm:$0xf]
        %v3044 = vshrl.u32 %v2680, 16
        %v3046 = vshll.u32 %v2680, 16
        %v3048 = vrot.slane %v3046, 1
        %v3049 = vor.u32 %v3044, %v3048
        %v3051 = vshll.u32 %v2681, 16
        %v3053 = vrot.slane %v3051, 1
        %v3054 = vsel %vm953, %v3049, %v3053
        %v3072 = vunpack.c.l.b16 %v3027
        %v3073 = vunpack.c.l.b16 %v3028
        %v3074 = vunpack.c.l.b16 %v3029
        %v3075 = vunpack.c.l.b16 %v3030
        %v3076 = vunpack.c.l.b16 %v3031
        %v3077 = vunpack.c.l.b16 %v3032
        %v3078 = vunpack.c.l.b16 %v3033
        %v3079 = vunpack.c.l.b16 %v3034
        %v3080 = vunpack.c.l.b16 %v3035
        %v3081 = vunpack.c.l.b16 %v3036
        %v3082 = vunpack.c.l.b16 %v3037
        %v3083 = vunpack.c.l.b16 %v3038
        %v3084 = vunpack.c.l.b16 %v3039
        %v3085 = vunpack.c.l.b16 %v3040
        %v3086 = vunpack.c.l.b16 %v3041
        %v3087 = vunpack.c.l.b16 %v3042
        %v3088 = vpack.c.b16 %v3073, %v3072
        %v3089 = vpack.c.b16 %v3075, %v3074
        %v3090 = vpack.c.b16 %v3077, %v3076
        %v3091 = vpack.c.b16 %v3079, %v3078
        %v3092 = vpack.c.b16 %v3081, %v3080
        %v3093 = vpack.c.b16 %v3083, %v3082
        %v3094 = vpack.c.b16 %v3085, %v3084
        %v3095 = vpack.c.b16 %v3087, %v3086
        %3104 = vmatprep.subr.bf16.mxu0 0
        %3105 = vmatpush1.bf16.msra.mxu0 %v3088
        %3106 = vmatprep.subr.bf16.mxu0 0
        %3107 = vmatpush1.bf16.msra.mxu0 %v3089
        %3108 = vmatprep.subr.bf16.mxu0 0
        %3109 = vmatpush1.bf16.msra.mxu0 %v3090
        %3110 = vmatprep.subr.bf16.mxu0 0
        %3111 = vmatpush1.bf16.msra.mxu0 %v3091
        %3112 = vmatprep.subr.bf16.mxu0 0
        %3113 = vmatpush1.bf16.msra.mxu0 %v3092
        %3114 = vmatprep.subr.bf16.mxu0 0
        %3115 = vmatpush1.bf16.msra.mxu0 %v3093
        %3116 = vmatprep.subr.bf16.mxu0 0
        %3117 = vmatpush1.bf16.msra.mxu0 %v3094
        %3118 = vmatprep.subr.bf16.mxu0 0
        %3119 = vmatpush1.bf16.msra.mxu0 %v3095
        %3120 = vmatprep.subr.bf16.mxu0 0
        %3121 = vmatpush1.bf16.msra.mxu0 0
        %3122 = vmatprep.subr.bf16.mxu0 0
        %3123 = vmatpush1.bf16.msra.mxu0 0
        %3124 = vmatprep.subr.bf16.mxu0 0
        %3125 = vmatpush1.bf16.msra.mxu0 0
        %3126 = vmatprep.subr.bf16.mxu0 0
        %3127 = vmatpush1.bf16.msra.mxu0 0
        %3128 = vmatprep.subr.bf16.mxu0 0
        %3129 = vmatpush1.bf16.msra.mxu0 0
        %3130 = vmatprep.subr.bf16.mxu0 0
        %3131 = vmatpush1.bf16.msra.mxu0 0
        %3132 = vmatprep.subr.bf16.mxu0 0
        %3133 = vmatpush1.bf16.msra.mxu0 0
        %3134 = vmatprep.subr.bf16.mxu0 0
        %3135 = vmatpush1.bf16.msra.mxu0 0
        %3136 = vmatprep.mubr.bf16.mxu0 0
        %3137 = vmatmul.mubr.bf16.gmra.mrb[0].mxu0 %v3054
        %v3138 = vpop.f32.mrb[0].mxu0
        %v3139 = vadd.f32 0.0, %v3138
        %v3140 = vpop.f32.mrb[0].mxu0
        %v3141 = vpop.f32.mrb[0].mxu0
        %v3142 = vadd.f32 0.0, %v3141
        %v3143 = vpop.f32.mrb[0].mxu0
        %3144 = vdwg.mxu0
        %v3145 = vadd.f32 %v3024, %v3139
        %v3146 = vadd.f32 %v3025, %v3142
        %s3147 = scalar_lea.vmem [#allocation15], 128
        %v3148 = vld [vmem:[%s3147] sm:$0xf]
        %v3149 = vld [vmem:[%s3147 + $0x4] sm:$0xf]
        %v3150 = vld [vmem:[%s3147 + $0x8] sm:$0xf]
        %v3151 = vld [vmem:[%s3147 + $0xc] sm:$0xf]
        %v3152 = vld [vmem:[%s3147 + $0x10] sm:$0xf]
        %v3153 = vld [vmem:[%s3147 + $0x14] sm:$0xf]
        %v3154 = vld [vmem:[%s3147 + $0x18] sm:$0xf]
        %v3155 = vld [vmem:[%s3147 + $0x1c] sm:$0xf]
        %v3156 = vld [vmem:[%s3147 + $0x20] sm:$0xf]
        %v3157 = vld [vmem:[%s3147 + $0x24] sm:$0xf]
        %v3158 = vld [vmem:[%s3147 + $0x28] sm:$0xf]
        %v3159 = vld [vmem:[%s3147 + $0x2c] sm:$0xf]
        %v3160 = vld [vmem:[%s3147 + $0x30] sm:$0xf]
        %v3161 = vld [vmem:[%s3147 + $0x34] sm:$0xf]
        %v3162 = vld [vmem:[%s3147 + $0x38] sm:$0xf]
        %v3163 = vld [vmem:[%s3147 + $0x3c] sm:$0xf]
        %vm3164 = vcmask 1044480
        %v3165 = vrot.slane %v916, 3
        %v3166 = vrot.slane %v917, 3
        %v3167 = vsel %vm3164, %v3165, %v3166
        %v3185 = vunpack.c.l.b16 %v3148
        %v3186 = vunpack.c.l.b16 %v3149
        %v3187 = vunpack.c.l.b16 %v3150
        %v3188 = vunpack.c.l.b16 %v3151
        %v3189 = vunpack.c.l.b16 %v3152
        %v3190 = vunpack.c.l.b16 %v3153
        %v3191 = vunpack.c.l.b16 %v3154
        %v3192 = vunpack.c.l.b16 %v3155
        %v3193 = vunpack.c.l.b16 %v3156
        %v3194 = vunpack.c.l.b16 %v3157
        %v3195 = vunpack.c.l.b16 %v3158
        %v3196 = vunpack.c.l.b16 %v3159
        %v3197 = vunpack.c.l.b16 %v3160
        %v3198 = vunpack.c.l.b16 %v3161
        %v3199 = vunpack.c.l.b16 %v3162
        %v3200 = vunpack.c.l.b16 %v3163
        %v3201 = vpack.c.b16 %v3186, %v3185
        %v3202 = vpack.c.b16 %v3188, %v3187
        %v3203 = vpack.c.b16 %v3190, %v3189
        %v3204 = vpack.c.b16 %v3192, %v3191
        %v3205 = vpack.c.b16 %v3194, %v3193
        %v3206 = vpack.c.b16 %v3196, %v3195
        %v3207 = vpack.c.b16 %v3198, %v3197
        %v3208 = vpack.c.b16 %v3200, %v3199
        %3217 = vmatprep.subr.bf16.mxu0 0
        %3218 = vmatpush1.bf16.msra.mxu0 %v3201
        %3219 = vmatprep.subr.bf16.mxu0 0
        %3220 = vmatpush1.bf16.msra.mxu0 %v3202
        %3221 = vmatprep.subr.bf16.mxu0 0
        %3222 = vmatpush1.bf16.msra.mxu0 %v3203
        %3223 = vmatprep.subr.bf16.mxu0 0
        %3224 = vmatpush1.bf16.msra.mxu0 %v3204
        %3225 = vmatprep.subr.bf16.mxu0 0
        %3226 = vmatpush1.bf16.msra.mxu0 %v3205
        %3227 = vmatprep.subr.bf16.mxu0 0
        %3228 = vmatpush1.bf16.msra.mxu0 %v3206
        %3229 = vmatprep.subr.bf16.mxu0 0
        %3230 = vmatpush1.bf16.msra.mxu0 %v3207
        %3231 = vmatprep.subr.bf16.mxu0 0
        %3232 = vmatpush1.bf16.msra.mxu0 %v3208
        %3233 = vmatprep.subr.bf16.mxu0 0
        %3234 = vmatpush1.bf16.msra.mxu0 0
        %3235 = vmatprep.subr.bf16.mxu0 0
        %3236 = vmatpush1.bf16.msra.mxu0 0
        %3237 = vmatprep.subr.bf16.mxu0 0
        %3238 = vmatpush1.bf16.msra.mxu0 0
        %3239 = vmatprep.subr.bf16.mxu0 0
        %3240 = vmatpush1.bf16.msra.mxu0 0
        %3241 = vmatprep.subr.bf16.mxu0 0
        %3242 = vmatpush1.bf16.msra.mxu0 0
        %3243 = vmatprep.subr.bf16.mxu0 0
        %3244 = vmatpush1.bf16.msra.mxu0 0
        %3245 = vmatprep.subr.bf16.mxu0 0
        %3246 = vmatpush1.bf16.msra.mxu0 0
        %3247 = vmatprep.subr.bf16.mxu0 0
        %3248 = vmatpush1.bf16.msra.mxu0 0
        %3249 = vmatprep.mubr.bf16.mxu0 0
        %3250 = vmatmul.mubr.bf16.gmra.mrb[0].mxu0 %v3167
        %v3251 = vpop.f32.mrb[0].mxu0
        %v3252 = vadd.f32 0.0, %v3251
        %v3253 = vpop.f32.mrb[0].mxu0
        %v3254 = vpop.f32.mrb[0].mxu0
        %v3255 = vadd.f32 0.0, %v3254
        %v3256 = vpop.f32.mrb[0].mxu0
        %3257 = vdwg.mxu0
        %v3258 = vadd.f32 %v3145, %v3252
        %v3259 = vadd.f32 %v3146, %v3255
        %s3260 = scalar_lea.vmem [#allocation16], 128
        %v3261 = vld [vmem:[%s3260] sm:$0xf]
        %v3262 = vld [vmem:[%s3260 + $0x4] sm:$0xf]
        %v3263 = vld [vmem:[%s3260 + $0x8] sm:$0xf]
        %v3264 = vld [vmem:[%s3260 + $0xc] sm:$0xf]
        %v3265 = vld [vmem:[%s3260 + $0x10] sm:$0xf]
        %v3266 = vld [vmem:[%s3260 + $0x14] sm:$0xf]
        %v3267 = vld [vmem:[%s3260 + $0x18] sm:$0xf]
        %v3268 = vld [vmem:[%s3260 + $0x1c] sm:$0xf]
        %v3269 = vld [vmem:[%s3260 + $0x20] sm:$0xf]
        %v3270 = vld [vmem:[%s3260 + $0x24] sm:$0xf]
        %v3271 = vld [vmem:[%s3260 + $0x28] sm:$0xf]
        %v3272 = vld [vmem:[%s3260 + $0x2c] sm:$0xf]
        %v3273 = vld [vmem:[%s3260 + $0x30] sm:$0xf]
        %v3274 = vld [vmem:[%s3260 + $0x34] sm:$0xf]
        %v3275 = vld [vmem:[%s3260 + $0x38] sm:$0xf]
        %v3276 = vld [vmem:[%s3260 + $0x3c] sm:$0xf]
        %v3279 = vrot.slane %v2680, 1
        %v3280 = vrot.slane %v2681, 1
        %v3281 = vsel %vm1182, %v3279, %v3280
        %v3299 = vunpack.c.l.b16 %v3261
        %v3300 = vunpack.c.l.b16 %v3262
        %v3301 = vunpack.c.l.b16 %v3263
        %v3302 = vunpack.c.l.b16 %v3264
        %v3303 = vunpack.c.l.b16 %v3265
        %v3304 = vunpack.c.l.b16 %v3266
        %v3305 = vunpack.c.l.b16 %v3267
        %v3306 = vunpack.c.l.b16 %v3268
        %v3307 = vunpack.c.l.b16 %v3269
        %v3308 = vunpack.c.l.b16 %v3270
        %v3309 = vunpack.c.l.b16 %v3271
        %v3310 = vunpack.c.l.b16 %v3272
        %v3311 = vunpack.c.l.b16 %v3273
        %v3312 = vunpack.c.l.b16 %v3274
        %v3313 = vunpack.c.l.b16 %v3275
        %v3314 = vunpack.c.l.b16 %v3276
        %v3315 = vpack.c.b16 %v3300, %v3299
        %v3316 = vpack.c.b16 %v3302, %v3301
        %v3317 = vpack.c.b16 %v3304, %v3303
        %v3318 = vpack.c.b16 %v3306, %v3305
        %v3319 = vpack.c.b16 %v3308, %v3307
        %v3320 = vpack.c.b16 %v3310, %v3309
        %v3321 = vpack.c.b16 %v3312, %v3311
        %v3322 = vpack.c.b16 %v3314, %v3313
        %3331 = vmatprep.subr.bf16.mxu0 0
        %3332 = vmatpush1.bf16.msra.mxu0 %v3315
        %3333 = vmatprep.subr.bf16.mxu0 0
        %3334 = vmatpush1.bf16.msra.mxu0 %v3316
        %3335 = vmatprep.subr.bf16.mxu0 0
        %3336 = vmatpush1.bf16.msra.mxu0 %v3317
        %3337 = vmatprep.subr.bf16.mxu0 0
        %3338 = vmatpush1.bf16.msra.mxu0 %v3318
        %3339 = vmatprep.subr.bf16.mxu0 0
        %3340 = vmatpush1.bf16.msra.mxu0 %v3319
        %3341 = vmatprep.subr.bf16.mxu0 0
        %3342 = vmatpush1.bf16.msra.mxu0 %v3320
        %3343 = vmatprep.subr.bf16.mxu0 0
        %3344 = vmatpush1.bf16.msra.mxu0 %v3321
        %3345 = vmatprep.subr.bf16.mxu0 0
        %3346 = vmatpush1.bf16.msra.mxu0 %v3322
        %3347 = vmatprep.subr.bf16.mxu0 0
        %3348 = vmatpush1.bf16.msra.mxu0 0
        %3349 = vmatprep.subr.bf16.mxu0 0
        %3350 = vmatpush1.bf16.msra.mxu0 0
        %3351 = vmatprep.subr.bf16.mxu0 0
        %3352 = vmatpush1.bf16.msra.mxu0 0
        %3353 = vmatprep.subr.bf16.mxu0 0
        %3354 = vmatpush1.bf16.msra.mxu0 0
        %3355 = vmatprep.subr.bf16.mxu0 0
        %3356 = vmatpush1.bf16.msra.mxu0 0
        %3357 = vmatprep.subr.bf16.mxu0 0
        %3358 = vmatpush1.bf16.msra.mxu0 0
        %3359 = vmatprep.subr.bf16.mxu0 0
        %3360 = vmatpush1.bf16.msra.mxu0 0
        %3361 = vmatprep.subr.bf16.mxu0 0
        %3362 = vmatpush1.bf16.msra.mxu0 0
        %3363 = vmatprep.mubr.bf16.mxu0 0
        %3364 = vmatmul.mubr.bf16.gmra.mrb[0].mxu0 %v3281
        %v3365 = vpop.f32.mrb[0].mxu0
        %v3366 = vadd.f32 0.0, %v3365
        %v3367 = vpop.f32.mrb[0].mxu0
        %v3368 = vpop.f32.mrb[0].mxu0
        %v3369 = vadd.f32 0.0, %v3368
        %v3370 = vpop.f32.mrb[0].mxu0
        %3371 = vdwg.mxu0
        %v3372 = vadd.f32 %v3258, %v3366
        %v3373 = vadd.f32 %v3259, %v3369
        %v3374 = vld [vmem:[%s15] sm:$0x3]
        %v3375 = vlaneseq
        %v3376 = vshrl.u32 %v3375, 7
        %v3377 = vsub.s32 0, %v3376
        %v3378 = vrot.slane %v3374, %v3377
        %v3379 = vmul.f32 %v3372, %v3378
        %v3380 = vmul.f32 %v3373, %v3378
        %v3381 = vlaneseq
        %v3382 = vshrl.u32 %v3381, 7
        %v3383 = vsub.s32 1, %v3382
        %v3384 = vrot.slane %v3374, %v3383
        %v3385 = vadd.f32 %v3379, %v3384
        %v3386 = vadd.f32 %v3380, %v3384
        %v3387 = vmax.f32 %v3385, 0.0
        %v3388 = vmax.f32 %v3386, 0.0
        %3389 = vst [vmem:[%s604] sm:$0xff] %v3387
        %3390 = vst [vmem:[%s604 + $0x8] sm:$0xff] %v3388
        %s3391 = sand.u32 %s372, 1
        %s3392 = scalar_lea.sflag [#allocation6], %s3391
        %s3393 = sand.u32 %s372, 1
        %s3394 = smul.addr %s3393, 16
        %s3395 = scalar_lea.vmem [#allocation18], %s3394
        // Predicated region
        $region129: #{tpu_custom_call.1} parent=79 // pred_check
          %p3396 = pneg %p382
        $region130: #{tpu_custom_call.1} parent=79 // pred_check_branch
          %3398 = sbr.rel (%p3396) target = $region132
        $region131: #{tpu_custom_call.1} parent=79 // pred_region
          %s3399 = smul.u32 2, %s40
          %s3401 = ssub.s32 256, 256
          %3402 = vsyncadd %s3392, %s3401
          %s3403 = smul.addr %s39, 2
          %s3404 = sadd.s32 %s3399, %s3403
          %s3405 = smul.addr %s3404, 128
          %s3406 = scalar_lea.hbm %s16, %s3405
          %s3407 = sshll.u32 %s3395, 4
          %s3408 = int_to_ptr.vmem [resolvable:$true] %s3407
          %3413 = dma.vmem_to_hbm [thread:$0]  %s3408, 256, %s3406, %s3392, 128, 128, 8
        $region132: #{tpu_custom_call.1} parent=79 // pred_fallthru
          _
      $region80: #{tpu_custom_call.1} parent=5 // pred_fallthru
        _
      %p3414 = scmp.le.s32.totalorder 2, %s30
      // Predicated region
      $region133: #{tpu_custom_call.1} parent=5 // pred_check
        %p3415 = pneg %p3414
      $region134: #{tpu_custom_call.1} parent=5 // pred_check_branch
        %3417 = sbr.rel (%p3415) target = $region136
      $region135: #{tpu_custom_call.1} parent=5 // pred_region
        %s3418 = ssub.s32 %s30, 2
        // Predicated region
        $region137: #{tpu_custom_call.1} parent=135 // pred_check
          %p3419 = pneg %p388
        $region138: #{tpu_custom_call.1} parent=135 // pred_check_branch
          %3421 = sbr.rel (%p3419) target = $region140
        $region139: #{tpu_custom_call.1} parent=135 // pred_region
          %s3422 = sand.u32 %s373, 1
          %s3423 = scalar_lea.sflag [#allocation6], %s3422
          %s3424 = sand.u32 %s373, 1
          %s3425 = smul.addr %s3424, 16
          %s3426 = scalar_lea.vmem [#allocation18], %s3425
          %3427 = dma.done %s3423, 256
        $region140: #{tpu_custom_call.1} parent=135 // pred_fallthru
          _
      $region136: #{tpu_custom_call.1} parent=5 // pred_fallthru
        _
    $region6: #{tpu_custom_call.1} parent=1 // loop_footer
      %s34 = sadd.s32 1, %s30
    $region7: #{tpu_custom_call.1} parent=1 // loop_footer_branch
      %29 = sbr.rel target = $region3
    $region8: #{tpu_custom_call.1} parent=1 // loop_exit
      _
    %3428 = vsyncpa [#allocation5], 1
    %s3429 = scalar_lea.sflag [#allocation5], 1
    %3430 = vsyncpa %s3429, 1
    %3431 = vsyncpa [#allocation8], 1
    %3432 = vsyncpa [#allocation11], 1
    %3433 = vsyncpa [#allocation14], 1
    %3434 = vsyncpa [#allocation17], 1
    %3435 = vsyncpa [#allocation6], 1
    %s3436 = scalar_lea.sflag [#allocation6], 1
    %3437 = vsyncpa %s3436, 1
  %3438 = vsyncmov [#allocation3]
  %s3439 = vpop.sfrf %3438
  %p3440 = scmp.eq.s32.totalorder %s3439, 0
  %p3441 = pneg %p3440
  %3443 = shalt.err (%p3441)
  %s3444 = scalar_lea.sflag [#allocation3], 1
  %3445 = vsyncmov %s3444
  %s3446 = vpop.sfrf %3445
  %p3447 = scmp.eq.s32.totalorder %s3446, 0
  %p3448 = pneg %p3447
  %3450 = shalt.err (%p3448)

</llo_original>
